<compile_context>
chip_gen: v7x
topology: tpu7x:2x2x1
jax: 0.10.0
libtpu: 0.0.40
codegen_flags: <defaults>
</compile_context>

<pallas_src>
import functools

import numpy as np

import jax
import jax.numpy as jnp
from jax.experimental import pallas as pl
from jax.experimental.pallas import tpu as pltpu


# ------------------------------------------------------------------ in-kernel helpers

def _silu(x):
    return x * jax.nn.sigmoid(x)


def _conv_band(pad_ref, w_ref, rows):
    """sum_di pad[di:di+rows, :] @ w[di] -- one banded matmul per vertical tap."""
    acc = jnp.dot(pad_ref[0:rows, :], w_ref[0], preferred_element_type=jnp.float32)
    for di in range(1, w_ref.shape[0]):
        acc = acc + jnp.dot(pad_ref[di:di + rows, :], w_ref[di],
                            preferred_element_type=jnp.float32)
    return acc


def _zero_halo(pad, nb, h, w, ch, halo):
    """Zero ONLY the padding halo of a stacked (nb*(h+2*halo), (w+2*halo)*ch) scratch."""
    hp = h + 2 * halo
    wl = (w + 2 * halo) * ch
    band = halo * ch
    rows = nb * hp
    # left / right halo lane bands (all rows at once)
    pad[:, 0:band] = jnp.zeros((rows, band), jnp.float32)
    pad[:, wl - band:wl] = jnp.zeros((rows, band), jnp.float32)
    # top / bottom halo rows of every image in the stack
    for n in range(nb):
        pad[n * hp:n * hp + halo, :] = jnp.zeros((halo, wl), jnp.float32)
        pad[n * hp + halo + h:(n + 1) * hp, :] = jnp.zeros((halo, wl), jnp.float32)


def _write_interior(pad, x, n, h, ch, halo):
    """Write an (h, w*ch) slab into image n's interior of the stacked padded scratch."""
    hp = h + 2 * halo
    pad[n * hp + halo:n * hp + halo + h, halo * ch:halo * ch + x.shape[1]] = x


def _relan_stage(pad_ref, w_ref, s_ref, b_ref, xs, nb, h):
    """silu(x + silu(conv3x3(x)) * (bn_scale*scaling) + bn_bias*scaling), per image.

    The conv runs as one banded matmul per vertical tap over the WHOLE stacked
    (nb-image) padded scratch; the 2 junk rows per image boundary are discarded when
    the valid rows are sliced out.  The residual `xs[n]` is the live value of the
    previous stage's output (never re-read from the padded scratch).
    """
    hp = h + 2
    y = _conv_band(pad_ref, w_ref, nb * hp - 2)
    y = _silu(y) * s_ref[...] + b_ref[...]
    return [_silu(xs[n] + y[n * hp:n * hp + h, :]) for n in range(nb)]


def _maxpool(x, rsel_ref, csel_ref):
    """2x2/2 max pool of an (h, w*ch) slab via 0/1 selection matmuls."""
    r = jnp.maximum(jnp.dot(rsel_ref[0], x, preferred_element_type=jnp.float32),
                    jnp.dot(rsel_ref[1], x, preferred_element_type=jnp.float32))
    return jnp.maximum(jnp.dot(r, csel_ref[0], preferred_element_type=jnp.float32),
                       jnp.dot(r, csel_ref[1], preferred_element_type=jnp.float32))


# ------------------------------------------------------------------ fused kernel

def _backbone_kernel(stem_x, stem_w,
                     s1_w, s1_s, s1_b, p1_r, p1_c,
                     s2_w, s2_s, s2_b, p2_r, p2_c,
                     s3_w, s3_s, s3_b,
                     sep_w, sep_s, sep_b,
                     out_ref,
                     pad1, pad2, pad3, padsep,
                     *, nb, ch, h1, w1, h2, w2, h3, w3):
    # Padding halos must be zero on every grid step (scratch persists / is reused).
    _zero_halo(pad1, nb, h1, w1, ch, 1)
    _zero_halo(pad2, nb, h2, w2, ch, 1)
    _zero_halo(pad3, nb, h3, w3, ch, 1)
    _zero_halo(padsep, nb, h3, w3, ch, 3)

    # ---- stem: 3x3 stride-2 conv as 3 banded matmuls, all nb images batched in M.
    stem = jnp.dot(stem_x[0, 0], stem_w[0], preferred_element_type=jnp.float32)
    for di in range(1, stem_w.shape[0]):
        stem = stem + jnp.dot(stem_x[0, di], stem_w[di],
                              preferred_element_type=jnp.float32)
    xs = [stem[n * h1:(n + 1) * h1, :] for n in range(nb)]     # live residuals
    for n in range(nb):
        _write_interior(pad1, xs[n], n, h1, ch, 1)

    # ---- stage1 (RELAN) + 2x2 max-pool.
    zs = _relan_stage(pad1, s1_w, s1_s, s1_b, xs, nb, h1)
    xs = []
    for n in range(nb):
        p = _maxpool(zs[n], p1_r, p1_c)
        xs.append(p)
        _write_interior(pad2, p, n, h2, ch, 1)

    # ---- stage2 (RELAN) + 2x2 max-pool.
    zs = _relan_stage(pad2, s2_w, s2_s, s2_b, xs, nb, h2)
    xs = []
    for n in range(nb):
        p = _maxpool(zs[n], p2_r, p2_c)
        xs.append(p)
        _write_interior(pad3, p, n, h3, ch, 1)

    # ---- stage3 (RELAN), no pool; write with halo=3 for the 7x7 sepconv.
    zs = _relan_stage(pad3, s3_w, s3_s, s3_b, xs, nb, h3)
    for n in range(nb):
        _write_interior(padsep, zs[n], n, h3, ch, 3)

    # ---- SepConv7x7: depthwise(7x7) (x) pointwise(1x1) fused banded matmuls + BN + SiLU.
    hps = h3 + 6
    y = _conv_band(padsep, sep_w, nb * hps - 6)
    y = _silu(y * sep_s[...] + sep_b[...])
    for n in range(nb):
        out_ref[0, n * h3:(n + 1) * h3, :] = y[n * hps:n * hps + h3, :]


# ------------------------------------------------------------------ wrapper-side prep

def _fold_bn(g, b, m, v, eps=1e-5):
    s = g / jnp.sqrt(v + eps)
    return s, b - m * s


def _band_weights(w_oihw, w_out, *, stride, pad, w_in):
    """Fold horizontal taps + input channels of a conv into banded matrices.

    Returns (kh, Wp*Cin, Wout*Cout); per vertical tap di, B with
    B[(stride*wo + dj)*Cin + cin, wo*Cout + cout] = w[cout, cin, di, dj], so a
    W-padded activation row (Wp*Cin lanes) @ B yields all Wout outputs of that row.
    """
    cout, cin, kh, kw = w_oihw.shape
    wp = w_in + 2 * pad
    sel = np.zeros((kw, wp, w_out), np.float32)
    for dj in range(kw):
        for wo in range(w_out):
            sel[dj, stride * wo + dj, wo] = 1.0
    wt = jnp.transpose(w_oihw, (2, 3, 1, 0))                 # (kh, kw, cin, cout)
    band = jnp.einsum('jpw,hjic->hpiwc', jnp.asarray(sel), wt)
    return band.reshape(kh, wp * cin, w_out * cout)


def _sep_band_weights(dw_w, pw_w, w_out):
    """7x7 depthwise (x) 1x1 pointwise fused into per-vertical-tap banded matrices."""
    c, _, kh, kw = dw_w.shape
    c2 = pw_w.shape[0]
    pad = kh // 2
    wp = w_out + 2 * pad
    sel = np.zeros((kw, wp, w_out), np.float32)
    for dj in range(kw):
        for wo in range(w_out):
            sel[dj, wo + dj, wo] = 1.0
    dwt = jnp.transpose(dw_w[:, 0, :, :], (1, 2, 0))         # (kh, kw, c)
    pwm = pw_w[:, :, 0, 0].T                                 # (c, c2)
    band = jnp.einsum('jpw,hjc,cd->hpcwd', jnp.asarray(sel), dwt, pwm)
    return band.reshape(kh, wp * c, w_out * c2)


def _pool_mats(h, w, ch):
    """0/1 selection matrices implementing a 2x2/2 max-pool on (h, w*ch) slabs."""
    rsel = np.zeros((2, h // 2, h), np.float32)
    csel = np.zeros((2, w * ch, (w // 2) * ch), np.float32)
    for a in range(2):
        for r in range(h // 2):
            rsel[a, r, 2 * r + a] = 1.0
        for wo in range(w // 2):
            for c in range(ch):
                csel[a, (2 * wo + a) * ch + c, wo * ch + c] = 1.0
    return jnp.asarray(rsel), jnp.asarray(csel)


def prepare_backbone(params, *, in_hw, scaling=0.01):
    """Fold weights / BN / pool matrices once per parameter set (cache & reuse)."""
    H, W = in_hw
    ch = int(params['stem_w'].shape[0])
    H1, W1 = H // 2, W // 2
    H2, W2 = H1 // 2, W1 // 2
    H3, W3 = H2 // 2, W2 // 2

    stem_w = _band_weights(params['stem_w'], W1, stride=2, pad=1, w_in=W)

    def stage_prep(p, w_out):
        wband = _band_weights(p['w'], w_out, stride=1, pad=1, w_in=w_out)
        s, b = _fold_bn(**p['bn'])
        srow = jnp.tile(s * scaling, w_out).reshape(1, w_out * ch).astype(jnp.float32)
        brow = jnp.tile(b * scaling, w_out).reshape(1, w_out * ch).astype(jnp.float32)
        return wband, srow, brow

    s1 = stage_prep(params['s1'], W1)
    s2 = stage_prep(params['s2'], W2)
    s3 = stage_prep(params['s3'], W3)
    p1 = _pool_mats(H1, W1, ch)
    p2 = _pool_mats(H2, W2, ch)

    sep_w = _sep_band_weights(params['sep']['dw_w'], params['sep']['pw_w'], W3)
    s, b = _fold_bn(**params['sep']['bn'])
    sep_s = jnp.tile(s, W3).reshape(1, W3 * ch).astype(jnp.float32)
    sep_b = jnp.tile(b, W3).reshape(1, W3 * ch).astype(jnp.float32)

    consts = dict(stem_w=stem_w,
                  s1_w=s1[0], s1_s=s1[1], s1_b=s1[2], p1_r=p1[0], p1_c=p1[1],
                  s2_w=s2[0], s2_s=s2[1], s2_b=s2[2], p2_r=p2[0], p2_c=p2[1],
                  s3_w=s3[0], s3_s=s3[1], s3_b=s3[2],
                  sep_w=sep_w, sep_s=sep_s, sep_b=sep_b)
    dims = dict(ch=ch, H=H, W=W, H1=H1, W1=W1, H2=H2, W2=W2, H3=H3, W3=W3)
    return consts, dims


def _device_has_multiple_tensorcores():
    """Grid-layout gate: batch-'parallel' grid only where a device has >1 TensorCore."""
    try:
        kind = jax.devices()[0].device_kind.lower()
    except Exception:
        return False
    return any(t in kind for t in ("v7", "v4", "v5p"))


# ------------------------------------------------------------------ forward wrapper

def backbone_apply(consts, x_nchw, *, dims, batch_parallel=False):
    ch = dims['ch']
    H1, W1 = dims['H1'], dims['W1']
    H2, W2 = dims['H2'], dims['W2']
    H3, W3 = dims['H3'], dims['W3']

    x = jnp.transpose(x_nchw, (0, 2, 3, 1)).astype(jnp.float32)        # NCHW -> NHWC
    N, H, W, Cin = x.shape
    # Single-TC chips (v5e/v6e): fold the whole batch into the matmul rows, grid=(1,).
    # Multi-TC chips (v7x/v4):  keep the batch as a "parallel" grid axis.
    G = N if (batch_parallel and N > 1) else 1
    NB = N // G

    # ---- stem slabs (one per vertical tap), images of a group stacked along rows.
    xp = jnp.pad(x, ((0, 0), (1, 1), (1, 1), (0, 0)))
    K = (W + 2) * Cin
    slabs = [xp[:, di:di + 2 * H1 - 1:2, :, :].reshape(N, H1, K) for di in range(3)]
    stem_x = jnp.stack(slabs, axis=1)                                   # (N,3,H1,K)
    stem_x = stem_x.reshape(G, NB, 3, H1, K).transpose(0, 2, 1, 3, 4)
    stem_x = stem_x.reshape(G, 3, NB * H1, K)

    kern = functools.partial(_backbone_kernel, nb=NB, ch=ch,
                             h1=H1, w1=W1, h2=H2, w2=W2, h3=H3, w3=W3)

    def full(a):
        nd = a.ndim
        return pl.BlockSpec(a.shape, lambda g, _nd=nd: (0,) * _nd)

    c = consts
    args = (stem_x, c['stem_w'],
            c['s1_w'], c['s1_s'], c['s1_b'], c['p1_r'], c['p1_c'],
            c['s2_w'], c['s2_s'], c['s2_b'], c['p2_r'], c['p2_c'],
            c['s3_w'], c['s3_s'], c['s3_b'],
            c['sep_w'], c['sep_s'], c['sep_b'])
    in_specs = ([pl.BlockSpec((1, 3, NB * H1, K), lambda g: (g, 0, 0, 0))]
                + [full(a) for a in args[1:]])

    out = pl.pallas_call(
        kern,
        out_shape=jax.ShapeDtypeStruct((G, NB * H3, W3 * ch), jnp.float32),
        grid_spec=pltpu.PrefetchScalarGridSpec(
            num_scalar_prefetch=0,
            grid=(G,),
            in_specs=in_specs,
            out_specs=pl.BlockSpec((1, NB * H3, W3 * ch), lambda g: (g, 0, 0)),
            scratch_shapes=[
                pltpu.VMEM((NB * (H1 + 2), (W1 + 2) * ch), jnp.float32),
                pltpu.VMEM((NB * (H2 + 2), (W2 + 2) * ch), jnp.float32),
                pltpu.VMEM((NB * (H3 + 2), (W3 + 2) * ch), jnp.float32),
                pltpu.VMEM((NB * (H3 + 6), (W3 + 6) * ch), jnp.float32),
            ]),
        compiler_params=pltpu.CompilerParams(
            dimension_semantics=("parallel",)),
    )(*args)

    out = out.reshape(N, H3, W3, ch)
    return jnp.transpose(out, (0, 3, 1, 2))                             # back to NCHW


# ------------------------------------------------------------------ params / reference

def init_params(key, ch=8):
    ks = jax.random.split(key, 11)

    def conv_w(k, cout, cin, ksz):
        fan = cin * ksz * ksz
        return jax.random.normal(k, (cout, cin, ksz, ksz), jnp.float32) / jnp.sqrt(fan)

    def bn_p(k, c):
        k1, k2, k3, k4 = jax.random.split(k, 4)
        return dict(g=1.0 + 0.1 * jax.random.normal(k1, (c,), jnp.float32),
                    b=0.1 * jax.random.normal(k2, (c,), jnp.float32),
                    m=0.1 * jax.random.normal(k3, (c,), jnp.float32),
                    v=1.0 + 0.1 * jax.random.uniform(k4, (c,), jnp.float32))

    p = {'stem_w': conv_w(ks[0], ch, 3, 3)}
    for i, name in enumerate(('s1', 's2', 's3')):
        p[name] = dict(w=conv_w(ks[1 + 2 * i], ch, ch, 3), bn=bn_p(ks[2 + 2 * i], ch))
    p['sep'] = dict(dw_w=conv_w(ks[7], ch, 1, 7),      # (ch, 1, 7, 7) depthwise
                    pw_w=conv_w(ks[8], ch, ch, 1),     # (ch, ch, 1, 1) pointwise
                    bn=bn_p(ks[9], ch))
    return p


def backbone_reference(x_nchw, params, scaling=0.01):
    """Pure-JAX reference of the same (shape-consistent) forward, for verification."""
    def conv(x, w, stride, pad, groups=1):
        return jax.lax.conv_general_dilated(
            x, w, (stride, stride), ((pad, pad), (pad, pad)),
            dimension_numbers=('NCHW', 'OIHW', 'NCHW'),
            feature_group_count=groups, precision=jax.lax.Precision.HIGHEST)

    def bn(x, p, eps=1e-5):
        s = p['g'] / jnp.sqrt(p['v'] + eps)
        return x * s[None, :, None, None] + (p['b'] - p['m'] * s)[None, :, None, None]

    silu = jax.nn.silu
    x = conv(x_nchw, params['stem_w'], 2, 1)
    for name in ('s1', 's2', 's3'):
        p = params[name]
        y = silu(conv(x, p['w'], 1, 1))
        y = bn(y, p['bn']) * scaling
        x = silu(x + y)
        if name != 's3':
            N, C, H, W = x.shape
            x = x.reshape(N, C, H // 2, 2, W // 2, 2).max(axis=(3, 5))
    p = params['sep']
    x = conv(x, p['dw_w'], 1, 3, groups=x.shape[1])
    x = conv(x, p['pw_w'], 1, 0)
    return silu(bn(x, p['bn']))


if __name__ == "__main__":
    key = jax.random.PRNGKey(0)
    kp, kx = jax.random.split(key)
    params = init_params(kp, ch=8)
    x = jax.random.normal(kx, (2, 3, 32, 32), jnp.float32)

    # Prep (weight folding / BN folding / pool matrices) runs once per param set.
    consts, dims = prepare_backbone(params, in_hw=(32, 32), scaling=0.01)
    batch_parallel = _device_has_multiple_tensorcores()

    fwd = jax.jit(functools.partial(backbone_apply, dims=dims,
                                    batch_parallel=batch_parallel))
    out = jax.block_until_ready(fwd(consts, x))
    assert out.shape == (2, 8, 4, 4), out.shape

    ref = backbone_reference(x, params)
    if not bool(jnp.allclose(out, ref, atol=2e-3, rtol=2e-3)):
        raise AssertionError(
            f"mismatch vs reference, max abs err = {float(jnp.max(jnp.abs(out - ref)))}")
    print("KERNEL_OK")
</pallas_src>

<mosaic_0001>
module attributes {stable_mosaic.version = 11 : i64} {
  func.func @_backbone_kernel(%arg0: i32, %arg1: memref<1x3x32x102xf32, #tpu.memory_space<vmem>>, %arg2: memref<3x102x128xf32, #tpu.memory_space<vmem>>, %arg3: memref<3x144x128xf32, #tpu.memory_space<vmem>>, %arg4: memref<1x128xf32, #tpu.memory_space<vmem>>, %arg5: memref<1x128xf32, #tpu.memory_space<vmem>>, %arg6: memref<2x8x16xf32, #tpu.memory_space<vmem>>, %arg7: memref<2x128x64xf32, #tpu.memory_space<vmem>>, %arg8: memref<3x80x64xf32, #tpu.memory_space<vmem>>, %arg9: memref<1x64xf32, #tpu.memory_space<vmem>>, %arg10: memref<1x64xf32, #tpu.memory_space<vmem>>, %arg11: memref<2x4x8xf32, #tpu.memory_space<vmem>>, %arg12: memref<2x64x32xf32, #tpu.memory_space<vmem>>, %arg13: memref<3x48x32xf32, #tpu.memory_space<vmem>>, %arg14: memref<1x32xf32, #tpu.memory_space<vmem>>, %arg15: memref<1x32xf32, #tpu.memory_space<vmem>>, %arg16: memref<7x80x32xf32, #tpu.memory_space<vmem>>, %arg17: memref<1x32xf32, #tpu.memory_space<vmem>>, %arg18: memref<1x32xf32, #tpu.memory_space<vmem>>, %arg19: memref<1x8x32xf32, #tpu.memory_space<vmem>>, %arg20: memref<36x144xf32, #tpu.memory_space<vmem>>, %arg21: memref<20x80xf32, #tpu.memory_space<vmem>>, %arg22: memref<12x48xf32, #tpu.memory_space<vmem>>, %arg23: memref<20x80xf32, #tpu.memory_space<vmem>>) attributes {dimension_semantics = [#tpu.dimension_semantics<parallel>], iteration_bounds = array<i64: 1>, scalar_prefetch = 0 : i64, scratch_operands = 4 : i64, tpu.core_type = #tpu.core_type<tc>, window_params = [{transform_indices = @transform_0, window_bounds = array<i64: 1, 3, 32, 102>}, {pipeline_mode = #tpu.pipeline_mode<synchronous>, transform_indices = @transform_1, window_bounds = array<i64: 3, 102, 128>}, {pipeline_mode = #tpu.pipeline_mode<synchronous>, transform_indices = @transform_2, window_bounds = array<i64: 3, 144, 128>}, {pipeline_mode = #tpu.pipeline_mode<synchronous>, transform_indices = @transform_3, window_bounds = array<i64: 1, 128>}, {pipeline_mode = #tpu.pipeline_mode<synchronous>, transform_indices = @transform_4, window_bounds = array<i64: 1, 128>}, {pipeline_mode = #tpu.pipeline_mode<synchronous>, transform_indices = @transform_5, window_bounds = array<i64: 2, 8, 16>}, {pipeline_mode = #tpu.pipeline_mode<synchronous>, transform_indices = @transform_6, window_bounds = array<i64: 2, 128, 64>}, {pipeline_mode = #tpu.pipeline_mode<synchronous>, transform_indices = @transform_7, window_bounds = array<i64: 3, 80, 64>}, {pipeline_mode = #tpu.pipeline_mode<synchronous>, transform_indices = @transform_8, window_bounds = array<i64: 1, 64>}, {pipeline_mode = #tpu.pipeline_mode<synchronous>, transform_indices = @transform_9, window_bounds = array<i64: 1, 64>}, {pipeline_mode = #tpu.pipeline_mode<synchronous>, transform_indices = @transform_10, window_bounds = array<i64: 2, 4, 8>}, {pipeline_mode = #tpu.pipeline_mode<synchronous>, transform_indices = @transform_11, window_bounds = array<i64: 2, 64, 32>}, {pipeline_mode = #tpu.pipeline_mode<synchronous>, transform_indices = @transform_12, window_bounds = array<i64: 3, 48, 32>}, {pipeline_mode = #tpu.pipeline_mode<synchronous>, transform_indices = @transform_13, window_bounds = array<i64: 1, 32>}, {pipeline_mode = #tpu.pipeline_mode<synchronous>, transform_indices = @transform_14, window_bounds = array<i64: 1, 32>}, {pipeline_mode = #tpu.pipeline_mode<synchronous>, transform_indices = @transform_15, window_bounds = array<i64: 7, 80, 32>}, {pipeline_mode = #tpu.pipeline_mode<synchronous>, transform_indices = @transform_16, window_bounds = array<i64: 1, 32>}, {pipeline_mode = #tpu.pipeline_mode<synchronous>, transform_indices = @transform_17, window_bounds = array<i64: 1, 32>}, {transform_indices = @transform_18, window_bounds = array<i64: 1, 8, 32>}]} {
    %cst = arith.constant 0.000000e+00 : f32
    %0 = vector.broadcast %cst : f32 to vector<36x8xf32>
    %c0 = arith.constant 0 : index
    %c0_0 = arith.constant 0 : index
    %1 = vector.load %arg20[%c0, %c0_0] : memref<36x144xf32, #tpu.memory_space<vmem>>, vector<36x8xf32>
    tpu.vector_store %arg20[%c0, %c0_0], %0 {strides = array<i32>} : memref<36x144xf32, #tpu.memory_space<vmem>>, vector<36x8xf32>,
    %cst_1 = arith.constant 0.000000e+00 : f32
    %2 = vector.broadcast %cst_1 : f32 to vector<36x8xf32>
    %c0_2 = arith.constant 0 : index
    %c136 = arith.constant 136 : index
    %3 = vector.load %arg20[%c0_2, %c136] : memref<36x144xf32, #tpu.memory_space<vmem>>, vector<36x8xf32>
    tpu.vector_store %arg20[%c0_2, %c136], %2 {strides = array<i32>} : memref<36x144xf32, #tpu.memory_space<vmem>>, vector<36x8xf32>,
    %cst_3 = arith.constant 0.000000e+00 : f32
    %4 = vector.broadcast %cst_3 : f32 to vector<1x144xf32>
    %c0_4 = arith.constant 0 : index
    %c0_5 = arith.constant 0 : index
    %5 = vector.load %arg20[%c0_4, %c0_5] : memref<36x144xf32, #tpu.memory_space<vmem>>, vector<1x144xf32>
    tpu.vector_store %arg20[%c0_4, %c0_5], %4 {strides = array<i32>} : memref<36x144xf32, #tpu.memory_space<vmem>>, vector<1x144xf32>,
    %cst_6 = arith.constant 0.000000e+00 : f32
    %6 = vector.broadcast %cst_6 : f32 to vector<1x144xf32>
    %c17 = arith.constant 17 : index
    %c0_7 = arith.constant 0 : index
    %7 = vector.load %arg20[%c17, %c0_7] : memref<36x144xf32, #tpu.memory_space<vmem>>, vector<1x144xf32>
    tpu.vector_store %arg20[%c17, %c0_7], %6 {strides = array<i32>} : memref<36x144xf32, #tpu.memory_space<vmem>>, vector<1x144xf32>,
    %cst_8 = arith.constant 0.000000e+00 : f32
    %8 = vector.broadcast %cst_8 : f32 to vector<1x144xf32>
    %c18 = arith.constant 18 : index
    %c0_9 = arith.constant 0 : index
    %9 = vector.load %arg20[%c18, %c0_9] : memref<36x144xf32, #tpu.memory_space<vmem>>, vector<1x144xf32>
    tpu.vector_store %arg20[%c18, %c0_9], %8 {strides = array<i32>} : memref<36x144xf32, #tpu.memory_space<vmem>>, vector<1x144xf32>,
    %cst_10 = arith.constant 0.000000e+00 : f32
    %10 = vector.broadcast %cst_10 : f32 to vector<1x144xf32>
    %c35 = arith.constant 35 : index
    %c0_11 = arith.constant 0 : index
    %11 = vector.load %arg20[%c35, %c0_11] : memref<36x144xf32, #tpu.memory_space<vmem>>, vector<1x144xf32>
    tpu.vector_store %arg20[%c35, %c0_11], %10 {strides = array<i32>} : memref<36x144xf32, #tpu.memory_space<vmem>>, vector<1x144xf32>,
    %cst_12 = arith.constant 0.000000e+00 : f32
    %12 = vector.broadcast %cst_12 : f32 to vector<20x8xf32>
    %c0_13 = arith.constant 0 : index
    %c0_14 = arith.constant 0 : index
    %13 = vector.load %arg21[%c0_13, %c0_14] : memref<20x80xf32, #tpu.memory_space<vmem>>, vector<20x8xf32>
    tpu.vector_store %arg21[%c0_13, %c0_14], %12 {strides = array<i32>} : memref<20x80xf32, #tpu.memory_space<vmem>>, vector<20x8xf32>,
    %cst_15 = arith.constant 0.000000e+00 : f32
    %14 = vector.broadcast %cst_15 : f32 to vector<20x8xf32>
    %c0_16 = arith.constant 0 : index
    %c72 = arith.constant 72 : index
    %15 = vector.load %arg21[%c0_16, %c72] : memref<20x80xf32, #tpu.memory_space<vmem>>, vector<20x8xf32>
    tpu.vector_store %arg21[%c0_16, %c72], %14 {strides = array<i32>} : memref<20x80xf32, #tpu.memory_space<vmem>>, vector<20x8xf32>,
    %cst_17 = arith.constant 0.000000e+00 : f32
    %16 = vector.broadcast %cst_17 : f32 to vector<1x80xf32>
    %c0_18 = arith.constant 0 : index
    %c0_19 = arith.constant 0 : index
    %17 = vector.load %arg21[%c0_18, %c0_19] : memref<20x80xf32, #tpu.memory_space<vmem>>, vector<1x80xf32>
    tpu.vector_store %arg21[%c0_18, %c0_19], %16 {strides = array<i32>} : memref<20x80xf32, #tpu.memory_space<vmem>>, vector<1x80xf32>,
    %cst_20 = arith.constant 0.000000e+00 : f32
    %18 = vector.broadcast %cst_20 : f32 to vector<1x80xf32>
    %c9 = arith.constant 9 : index
    %c0_21 = arith.constant 0 : index
    %19 = vector.load %arg21[%c9, %c0_21] : memref<20x80xf32, #tpu.memory_space<vmem>>, vector<1x80xf32>
    tpu.vector_store %arg21[%c9, %c0_21], %18 {strides = array<i32>} : memref<20x80xf32, #tpu.memory_space<vmem>>, vector<1x80xf32>,
    %cst_22 = arith.constant 0.000000e+00 : f32
    %20 = vector.broadcast %cst_22 : f32 to vector<1x80xf32>
    %c10 = arith.constant 10 : index
    %c0_23 = arith.constant 0 : index
    %21 = vector.load %arg21[%c10, %c0_23] : memref<20x80xf32, #tpu.memory_space<vmem>>, vector<1x80xf32>
    tpu.vector_store %arg21[%c10, %c0_23], %20 {strides = array<i32>} : memref<20x80xf32, #tpu.memory_space<vmem>>, vector<1x80xf32>,
    %cst_24 = arith.constant 0.000000e+00 : f32
    %22 = vector.broadcast %cst_24 : f32 to vector<1x80xf32>
    %c19 = arith.constant 19 : index
    %c0_25 = arith.constant 0 : index
    %23 = vector.load %arg21[%c19, %c0_25] : memref<20x80xf32, #tpu.memory_space<vmem>>, vector<1x80xf32>
    tpu.vector_store %arg21[%c19, %c0_25], %22 {strides = array<i32>} : memref<20x80xf32, #tpu.memory_space<vmem>>, vector<1x80xf32>,
    %cst_26 = arith.constant 0.000000e+00 : f32
    %24 = vector.broadcast %cst_26 : f32 to vector<12x8xf32>
    %c0_27 = arith.constant 0 : index
    %c0_28 = arith.constant 0 : index
    %25 = vector.load %arg22[%c0_27, %c0_28] : memref<12x48xf32, #tpu.memory_space<vmem>>, vector<12x8xf32>
    tpu.vector_store %arg22[%c0_27, %c0_28], %24 {strides = array<i32>} : memref<12x48xf32, #tpu.memory_space<vmem>>, vector<12x8xf32>,
    %cst_29 = arith.constant 0.000000e+00 : f32
    %26 = vector.broadcast %cst_29 : f32 to vector<12x8xf32>
    %c0_30 = arith.constant 0 : index
    %c40 = arith.constant 40 : index
    %27 = vector.load %arg22[%c0_30, %c40] : memref<12x48xf32, #tpu.memory_space<vmem>>, vector<12x8xf32>
    tpu.vector_store %arg22[%c0_30, %c40], %26 {strides = array<i32>} : memref<12x48xf32, #tpu.memory_space<vmem>>, vector<12x8xf32>,
    %cst_31 = arith.constant 0.000000e+00 : f32
    %28 = vector.broadcast %cst_31 : f32 to vector<1x48xf32>
    %c0_32 = arith.constant 0 : index
    %c0_33 = arith.constant 0 : index
    %29 = vector.load %arg22[%c0_32, %c0_33] : memref<12x48xf32, #tpu.memory_space<vmem>>, vector<1x48xf32>
    tpu.vector_store %arg22[%c0_32, %c0_33], %28 {strides = array<i32>} : memref<12x48xf32, #tpu.memory_space<vmem>>, vector<1x48xf32>,
    %cst_34 = arith.constant 0.000000e+00 : f32
    %30 = vector.broadcast %cst_34 : f32 to vector<1x48xf32>
    %c5 = arith.constant 5 : index
    %c0_35 = arith.constant 0 : index
    %31 = vector.load %arg22[%c5, %c0_35] : memref<12x48xf32, #tpu.memory_space<vmem>>, vector<1x48xf32>
    tpu.vector_store %arg22[%c5, %c0_35], %30 {strides = array<i32>} : memref<12x48xf32, #tpu.memory_space<vmem>>, vector<1x48xf32>,
    %cst_36 = arith.constant 0.000000e+00 : f32
    %32 = vector.broadcast %cst_36 : f32 to vector<1x48xf32>
    %c6 = arith.constant 6 : index
    %c0_37 = arith.constant 0 : index
    %33 = vector.load %arg22[%c6, %c0_37] : memref<12x48xf32, #tpu.memory_space<vmem>>, vector<1x48xf32>
    tpu.vector_store %arg22[%c6, %c0_37], %32 {strides = array<i32>} : memref<12x48xf32, #tpu.memory_space<vmem>>, vector<1x48xf32>,
    %cst_38 = arith.constant 0.000000e+00 : f32
    %34 = vector.broadcast %cst_38 : f32 to vector<1x48xf32>
    %c11 = arith.constant 11 : index
    %c0_39 = arith.constant 0 : index
    %35 = vector.load %arg22[%c11, %c0_39] : memref<12x48xf32, #tpu.memory_space<vmem>>, vector<1x48xf32>
    tpu.vector_store %arg22[%c11, %c0_39], %34 {strides = array<i32>} : memref<12x48xf32, #tpu.memory_space<vmem>>, vector<1x48xf32>,
    %cst_40 = arith.constant 0.000000e+00 : f32
    %36 = vector.broadcast %cst_40 : f32 to vector<20x24xf32>
    %c0_41 = arith.constant 0 : index
    %c0_42 = arith.constant 0 : index
    %37 = vector.load %arg23[%c0_41, %c0_42] : memref<20x80xf32, #tpu.memory_space<vmem>>, vector<20x24xf32>
    tpu.vector_store %arg23[%c0_41, %c0_42], %36 {strides = array<i32>} : memref<20x80xf32, #tpu.memory_space<vmem>>, vector<20x24xf32>,
    %cst_43 = arith.constant 0.000000e+00 : f32
    %38 = vector.broadcast %cst_43 : f32 to vector<20x24xf32>
    %c0_44 = arith.constant 0 : index
    %c56 = arith.constant 56 : index
    %39 = vector.load %arg23[%c0_44, %c56] : memref<20x80xf32, #tpu.memory_space<vmem>>, vector<20x24xf32>
    tpu.vector_store %arg23[%c0_44, %c56], %38 {strides = array<i32>} : memref<20x80xf32, #tpu.memory_space<vmem>>, vector<20x24xf32>,
    %cst_45 = arith.constant 0.000000e+00 : f32
    %40 = vector.broadcast %cst_45 : f32 to vector<3x80xf32>
    %c0_46 = arith.constant 0 : index
    %c0_47 = arith.constant 0 : index
    %41 = vector.load %arg23[%c0_46, %c0_47] : memref<20x80xf32, #tpu.memory_space<vmem>>, vector<3x80xf32>
    tpu.vector_store %arg23[%c0_46, %c0_47], %40 {strides = array<i32>} : memref<20x80xf32, #tpu.memory_space<vmem>>, vector<3x80xf32>,
    %cst_48 = arith.constant 0.000000e+00 : f32
    %42 = vector.broadcast %cst_48 : f32 to vector<3x80xf32>
    %c7 = arith.constant 7 : index
    %c0_49 = arith.constant 0 : index
    %43 = vector.load %arg23[%c7, %c0_49] : memref<20x80xf32, #tpu.memory_space<vmem>>, vector<3x80xf32>
    tpu.vector_store %arg23[%c7, %c0_49], %42 {strides = array<i32>} : memref<20x80xf32, #tpu.memory_space<vmem>>, vector<3x80xf32>,
    %cst_50 = arith.constant 0.000000e+00 : f32
    %44 = vector.broadcast %cst_50 : f32 to vector<3x80xf32>
    %c10_51 = arith.constant 10 : index
    %c0_52 = arith.constant 0 : index
    %45 = vector.load %arg23[%c10_51, %c0_52] : memref<20x80xf32, #tpu.memory_space<vmem>>, vector<3x80xf32>
    tpu.vector_store %arg23[%c10_51, %c0_52], %44 {strides = array<i32>} : memref<20x80xf32, #tpu.memory_space<vmem>>, vector<3x80xf32>,
    %cst_53 = arith.constant 0.000000e+00 : f32
    %46 = vector.broadcast %cst_53 : f32 to vector<3x80xf32>
    %c17_54 = arith.constant 17 : index
    %c0_55 = arith.constant 0 : index
    %47 = vector.load %arg23[%c17_54, %c0_55] : memref<20x80xf32, #tpu.memory_space<vmem>>, vector<3x80xf32>
    tpu.vector_store %arg23[%c17_54, %c0_55], %46 {strides = array<i32>} : memref<20x80xf32, #tpu.memory_space<vmem>>, vector<3x80xf32>,
    %c0_56 = arith.constant 0 : index
    %c0_57 = arith.constant 0 : index
    %c0_58 = arith.constant 0 : index
    %c0_59 = arith.constant 0 : index
    %48 = vector.load %arg1[%c0_56, %c0_57, %c0_58, %c0_59] : memref<1x3x32x102xf32, #tpu.memory_space<vmem>>, vector<1x1x32x102xf32>
    %49 = vector.shape_cast %48 : vector<1x1x32x102xf32> to vector<32x102xf32>
    %c0_60 = arith.constant 0 : index
    %c0_61 = arith.constant 0 : index
    %c0_62 = arith.constant 0 : index
    %50 = vector.load %arg2[%c0_60, %c0_61, %c0_62] : memref<3x102x128xf32, #tpu.memory_space<vmem>>, vector<1x102x128xf32>
    %51 = vector.shape_cast %50 : vector<1x102x128xf32> to vector<102x128xf32>
    %cst_63 = arith.constant dense<0.000000e+00> : vector<32x128xf32>
    %52 = tpu.matmul %49, %51, %cst_63 {dimension_numbers = #tpu.dot_dimension_numbers<[1], [0], [0], [1], [0, 0, 1, 1], [], []>} : vector<32x102xf32>, vector<102x128xf32>, vector<32x128xf32> -> vector<32x128xf32>
    %c0_64 = arith.constant 0 : index
    %c1 = arith.constant 1 : index
    %c0_65 = arith.constant 0 : index
    %c0_66 = arith.constant 0 : index
    %53 = vector.load %arg1[%c0_64, %c1, %c0_65, %c0_66] : memref<1x3x32x102xf32, #tpu.memory_space<vmem>>, vector<1x1x32x102xf32>
    %54 = vector.shape_cast %53 : vector<1x1x32x102xf32> to vector<32x102xf32>
    %c1_67 = arith.constant 1 : index
    %c0_68 = arith.constant 0 : index
    %c0_69 = arith.constant 0 : index
    %55 = vector.load %arg2[%c1_67, %c0_68, %c0_69] : memref<3x102x128xf32, #tpu.memory_space<vmem>>, vector<1x102x128xf32>
    %56 = vector.shape_cast %55 : vector<1x102x128xf32> to vector<102x128xf32>
    %cst_70 = arith.constant dense<0.000000e+00> : vector<32x128xf32>
    %57 = tpu.matmul %54, %56, %cst_70 {dimension_numbers = #tpu.dot_dimension_numbers<[1], [0], [0], [1], [0, 0, 1, 1], [], []>} : vector<32x102xf32>, vector<102x128xf32>, vector<32x128xf32> -> vector<32x128xf32>
    %58 = arith.addf %52, %57 : vector<32x128xf32>
    %c0_71 = arith.constant 0 : index
    %c2 = arith.constant 2 : index
    %c0_72 = arith.constant 0 : index
    %c0_73 = arith.constant 0 : index
    %59 = vector.load %arg1[%c0_71, %c2, %c0_72, %c0_73] : memref<1x3x32x102xf32, #tpu.memory_space<vmem>>, vector<1x1x32x102xf32>
    %60 = vector.shape_cast %59 : vector<1x1x32x102xf32> to vector<32x102xf32>
    %c2_74 = arith.constant 2 : index
    %c0_75 = arith.constant 0 : index
    %c0_76 = arith.constant 0 : index
    %61 = vector.load %arg2[%c2_74, %c0_75, %c0_76] : memref<3x102x128xf32, #tpu.memory_space<vmem>>, vector<1x102x128xf32>
    %62 = vector.shape_cast %61 : vector<1x102x128xf32> to vector<102x128xf32>
    %cst_77 = arith.constant dense<0.000000e+00> : vector<32x128xf32>
    %63 = tpu.matmul %60, %62, %cst_77 {dimension_numbers = #tpu.dot_dimension_numbers<[1], [0], [0], [1], [0, 0, 1, 1], [], []>} : vector<32x102xf32>, vector<102x128xf32>, vector<32x128xf32> -> vector<32x128xf32>
    %64 = arith.addf %58, %63 : vector<32x128xf32>
    %65 = vector.extract_strided_slice %64 {offsets = [0, 0], sizes = [16, 128], strides = [1, 1]} : vector<32x128xf32> to vector<16x128xf32>
    %66 = vector.extract_strided_slice %64 {offsets = [16, 0], sizes = [16, 128], strides = [1, 1]} : vector<32x128xf32> to vector<16x128xf32>
    %c1_78 = arith.constant 1 : index
    %c8 = arith.constant 8 : index
    %67 = vector.load %arg20[%c1_78, %c8] : memref<36x144xf32, #tpu.memory_space<vmem>>, vector<16x128xf32>
    tpu.vector_store %arg20[%c1_78, %c8], %65 {strides = array<i32>} : memref<36x144xf32, #tpu.memory_space<vmem>>, vector<16x128xf32>,
    %c19_79 = arith.constant 19 : index
    %c8_80 = arith.constant 8 : index
    %68 = vector.load %arg20[%c19_79, %c8_80] : memref<36x144xf32, #tpu.memory_space<vmem>>, vector<16x128xf32>
    tpu.vector_store %arg20[%c19_79, %c8_80], %66 {strides = array<i32>} : memref<36x144xf32, #tpu.memory_space<vmem>>, vector<16x128xf32>,
    %c0_81 = arith.constant 0 : index
    %c0_82 = arith.constant 0 : index
    %69 = vector.load %arg20[%c0_81, %c0_82] : memref<36x144xf32, #tpu.memory_space<vmem>>, vector<34x144xf32>
    %c0_83 = arith.constant 0 : index
    %c0_84 = arith.constant 0 : index
    %c0_85 = arith.constant 0 : index
    %70 = vector.load %arg3[%c0_83, %c0_84, %c0_85] : memref<3x144x128xf32, #tpu.memory_space<vmem>>, vector<1x144x128xf32>
    %71 = vector.shape_cast %70 : vector<1x144x128xf32> to vector<144x128xf32>
    %cst_86 = arith.constant dense<0.000000e+00> : vector<34x128xf32>
    %72 = tpu.matmul %69, %71, %cst_86 {dimension_numbers = #tpu.dot_dimension_numbers<[1], [0], [0], [1], [0, 0, 1, 1], [], []>} : vector<34x144xf32>, vector<144x128xf32>, vector<34x128xf32> -> vector<34x128xf32>
    %c1_87 = arith.constant 1 : index
    %c0_88 = arith.constant 0 : index
    %73 = vector.load %arg20[%c1_87, %c0_88] : memref<36x144xf32, #tpu.memory_space<vmem>>, vector<34x144xf32>
    %c1_89 = arith.constant 1 : index
    %c0_90 = arith.constant 0 : index
    %c0_91 = arith.constant 0 : index
    %74 = vector.load %arg3[%c1_89, %c0_90, %c0_91] : memref<3x144x128xf32, #tpu.memory_space<vmem>>, vector<1x144x128xf32>
    %75 = vector.shape_cast %74 : vector<1x144x128xf32> to vector<144x128xf32>
    %cst_92 = arith.constant dense<0.000000e+00> : vector<34x128xf32>
    %76 = tpu.matmul %73, %75, %cst_92 {dimension_numbers = #tpu.dot_dimension_numbers<[1], [0], [0], [1], [0, 0, 1, 1], [], []>} : vector<34x144xf32>, vector<144x128xf32>, vector<34x128xf32> -> vector<34x128xf32>
    %77 = arith.addf %72, %76 : vector<34x128xf32>
    %c2_93 = arith.constant 2 : index
    %c0_94 = arith.constant 0 : index
    %78 = vector.load %arg20[%c2_93, %c0_94] : memref<36x144xf32, #tpu.memory_space<vmem>>, vector<34x144xf32>
    %c2_95 = arith.constant 2 : index
    %c0_96 = arith.constant 0 : index
    %c0_97 = arith.constant 0 : index
    %79 = vector.load %arg3[%c2_95, %c0_96, %c0_97] : memref<3x144x128xf32, #tpu.memory_space<vmem>>, vector<1x144x128xf32>
    %80 = vector.shape_cast %79 : vector<1x144x128xf32> to vector<144x128xf32>
    %cst_98 = arith.constant dense<0.000000e+00> : vector<34x128xf32>
    %81 = tpu.matmul %78, %80, %cst_98 {dimension_numbers = #tpu.dot_dimension_numbers<[1], [0], [0], [1], [0, 0, 1, 1], [], []>} : vector<34x144xf32>, vector<144x128xf32>, vector<34x128xf32> -> vector<34x128xf32>
    %82 = arith.addf %77, %81 : vector<34x128xf32>
    %83 = arith.negf %82 : vector<34x128xf32>
    %84 = math.exp %83 : vector<34x128xf32>
    %cst_99 = arith.constant 1.000000e+00 : f32
    %85 = vector.broadcast %cst_99 : f32 to vector<34x128xf32>
    %86 = arith.addf %85, %84 : vector<34x128xf32>
    %87 = arith.divf %85, %86 : vector<34x128xf32>
    %88 = arith.mulf %82, %87 : vector<34x128xf32>
    %c0_100 = arith.constant 0 : index
    %c0_101 = arith.constant 0 : index
    %89 = vector.load %arg4[%c0_100, %c0_101] : memref<1x128xf32, #tpu.memory_space<vmem>>, vector<1x128xf32>
    %90 = vector.broadcast %89 : vector<1x128xf32> to vector<34x128xf32>
    %91 = arith.mulf %88, %90 : vector<34x128xf32>
    %c0_102 = arith.constant 0 : index
    %c0_103 = arith.constant 0 : index
    %92 = vector.load %arg5[%c0_102, %c0_103] : memref<1x128xf32, #tpu.memory_space<vmem>>, vector<1x128xf32>
    %93 = vector.broadcast %92 : vector<1x128xf32> to vector<34x128xf32>
    %94 = arith.addf %91, %93 : vector<34x128xf32>
    %95 = vector.extract_strided_slice %94 {offsets = [0, 0], sizes = [16, 128], strides = [1, 1]} : vector<34x128xf32> to vector<16x128xf32>
    %96 = arith.addf %65, %95 : vector<16x128xf32>
    %97 = arith.negf %96 : vector<16x128xf32>
    %98 = math.exp %97 : vector<16x128xf32>
    %cst_104 = arith.constant 1.000000e+00 : f32
    %99 = vector.broadcast %cst_104 : f32 to vector<16x128xf32>
    %100 = arith.addf %99, %98 : vector<16x128xf32>
    %101 = arith.divf %99, %100 : vector<16x128xf32>
    %102 = arith.mulf %96, %101 : vector<16x128xf32>
    %103 = vector.extract_strided_slice %94 {offsets = [18, 0], sizes = [16, 128], strides = [1, 1]} : vector<34x128xf32> to vector<16x128xf32>
    %104 = arith.addf %66, %103 : vector<16x128xf32>
    %105 = arith.negf %104 : vector<16x128xf32>
    %106 = math.exp %105 : vector<16x128xf32>
    %cst_105 = arith.constant 1.000000e+00 : f32
    %107 = vector.broadcast %cst_105 : f32 to vector<16x128xf32>
    %108 = arith.addf %107, %106 : vector<16x128xf32>
    %109 = arith.divf %107, %108 : vector<16x128xf32>
    %110 = arith.mulf %104, %109 : vector<16x128xf32>
    %c0_106 = arith.constant 0 : index
    %c0_107 = arith.constant 0 : index
    %c0_108 = arith.constant 0 : index
    %111 = vector.load %arg6[%c0_106, %c0_107, %c0_108] : memref<2x8x16xf32, #tpu.memory_space<vmem>>, vector<1x8x16xf32>
    %112 = vector.shape_cast %111 : vector<1x8x16xf32> to vector<8x16xf32>
    %cst_109 = arith.constant dense<0.000000e+00> : vector<8x128xf32>
    %113 = tpu.matmul %112, %102, %cst_109 {dimension_numbers = #tpu.dot_dimension_numbers<[1], [0], [0], [1], [0, 0, 1, 1], [], []>} : vector<8x16xf32>, vector<16x128xf32>, vector<8x128xf32> -> vector<8x128xf32>
    %c1_110 = arith.constant 1 : index
    %c0_111 = arith.constant 0 : index
    %c0_112 = arith.constant 0 : index
    %114 = vector.load %arg6[%c1_110, %c0_111, %c0_112] : memref<2x8x16xf32, #tpu.memory_space<vmem>>, vector<1x8x16xf32>
    %115 = vector.shape_cast %114 : vector<1x8x16xf32> to vector<8x16xf32>
    %cst_113 = arith.constant dense<0.000000e+00> : vector<8x128xf32>
    %116 = tpu.matmul %115, %102, %cst_113 {dimension_numbers = #tpu.dot_dimension_numbers<[1], [0], [0], [1], [0, 0, 1, 1], [], []>} : vector<8x16xf32>, vector<16x128xf32>, vector<8x128xf32> -> vector<8x128xf32>
    %117 = arith.maximumf %113, %116 : vector<8x128xf32>
    %c0_114 = arith.constant 0 : index
    %c0_115 = arith.constant 0 : index
    %c0_116 = arith.constant 0 : index
    %118 = vector.load %arg7[%c0_114, %c0_115, %c0_116] : memref<2x128x64xf32, #tpu.memory_space<vmem>>, vector<1x128x64xf32>
    %119 = vector.shape_cast %118 : vector<1x128x64xf32> to vector<128x64xf32>
    %cst_117 = arith.constant dense<0.000000e+00> : vector<8x64xf32>
    %120 = tpu.matmul %117, %119, %cst_117 {dimension_numbers = #tpu.dot_dimension_numbers<[1], [0], [0], [1], [0, 0, 1, 1], [], []>} : vector<8x128xf32>, vector<128x64xf32>, vector<8x64xf32> -> vector<8x64xf32>
    %c1_118 = arith.constant 1 : index
    %c0_119 = arith.constant 0 : index
    %c0_120 = arith.constant 0 : index
    %121 = vector.load %arg7[%c1_118, %c0_119, %c0_120] : memref<2x128x64xf32, #tpu.memory_space<vmem>>, vector<1x128x64xf32>
    %122 = vector.shape_cast %121 : vector<1x128x64xf32> to vector<128x64xf32>
    %cst_121 = arith.constant dense<0.000000e+00> : vector<8x64xf32>
    %123 = tpu.matmul %117, %122, %cst_121 {dimension_numbers = #tpu.dot_dimension_numbers<[1], [0], [0], [1], [0, 0, 1, 1], [], []>} : vector<8x128xf32>, vector<128x64xf32>, vector<8x64xf32> -> vector<8x64xf32>
    %124 = arith.maximumf %120, %123 : vector<8x64xf32>
    %c1_122 = arith.constant 1 : index
    %c8_123 = arith.constant 8 : index
    %125 = vector.load %arg21[%c1_122, %c8_123] : memref<20x80xf32, #tpu.memory_space<vmem>>, vector<8x64xf32>
    tpu.vector_store %arg21[%c1_122, %c8_123], %124 {strides = array<i32>} : memref<20x80xf32, #tpu.memory_space<vmem>>, vector<8x64xf32>,
    %c0_124 = arith.constant 0 : index
    %c0_125 = arith.constant 0 : index
    %c0_126 = arith.constant 0 : index
    %126 = vector.load %arg6[%c0_124, %c0_125, %c0_126] : memref<2x8x16xf32, #tpu.memory_space<vmem>>, vector<1x8x16xf32>
    %127 = vector.shape_cast %126 : vector<1x8x16xf32> to vector<8x16xf32>
    %cst_127 = arith.constant dense<0.000000e+00> : vector<8x128xf32>
    %128 = tpu.matmul %127, %110, %cst_127 {dimension_numbers = #tpu.dot_dimension_numbers<[1], [0], [0], [1], [0, 0, 1, 1], [], []>} : vector<8x16xf32>, vector<16x128xf32>, vector<8x128xf32> -> vector<8x128xf32>
    %c1_128 = arith.constant 1 : index
    %c0_129 = arith.constant 0 : index
    %c0_130 = arith.constant 0 : index
    %129 = vector.load %arg6[%c1_128, %c0_129, %c0_130] : memref<2x8x16xf32, #tpu.memory_space<vmem>>, vector<1x8x16xf32>
    %130 = vector.shape_cast %129 : vector<1x8x16xf32> to vector<8x16xf32>
    %cst_131 = arith.constant dense<0.000000e+00> : vector<8x128xf32>
    %131 = tpu.matmul %130, %110, %cst_131 {dimension_numbers = #tpu.dot_dimension_numbers<[1], [0], [0], [1], [0, 0, 1, 1], [], []>} : vector<8x16xf32>, vector<16x128xf32>, vector<8x128xf32> -> vector<8x128xf32>
    %132 = arith.maximumf %128, %131 : vector<8x128xf32>
    %c0_132 = arith.constant 0 : index
    %c0_133 = arith.constant 0 : index
    %c0_134 = arith.constant 0 : index
    %133 = vector.load %arg7[%c0_132, %c0_133, %c0_134] : memref<2x128x64xf32, #tpu.memory_space<vmem>>, vector<1x128x64xf32>
    %134 = vector.shape_cast %133 : vector<1x128x64xf32> to vector<128x64xf32>
    %cst_135 = arith.constant dense<0.000000e+00> : vector<8x64xf32>
    %135 = tpu.matmul %132, %134, %cst_135 {dimension_numbers = #tpu.dot_dimension_numbers<[1], [0], [0], [1], [0, 0, 1, 1], [], []>} : vector<8x128xf32>, vector<128x64xf32>, vector<8x64xf32> -> vector<8x64xf32>
    %c1_136 = arith.constant 1 : index
    %c0_137 = arith.constant 0 : index
    %c0_138 = arith.constant 0 : index
    %136 = vector.load %arg7[%c1_136, %c0_137, %c0_138] : memref<2x128x64xf32, #tpu.memory_space<vmem>>, vector<1x128x64xf32>
    %137 = vector.shape_cast %136 : vector<1x128x64xf32> to vector<128x64xf32>
    %cst_139 = arith.constant dense<0.000000e+00> : vector<8x64xf32>
    %138 = tpu.matmul %132, %137, %cst_139 {dimension_numbers = #tpu.dot_dimension_numbers<[1], [0], [0], [1], [0, 0, 1, 1], [], []>} : vector<8x128xf32>, vector<128x64xf32>, vector<8x64xf32> -> vector<8x64xf32>
    %139 = arith.maximumf %135, %138 : vector<8x64xf32>
    %c11_140 = arith.constant 11 : index
    %c8_141 = arith.constant 8 : index
    %140 = vector.load %arg21[%c11_140, %c8_141] : memref<20x80xf32, #tpu.memory_space<vmem>>, vector<8x64xf32>
    tpu.vector_store %arg21[%c11_140, %c8_141], %139 {strides = array<i32>} : memref<20x80xf32, #tpu.memory_space<vmem>>, vector<8x64xf32>,
    %c0_142 = arith.constant 0 : index
    %c0_143 = arith.constant 0 : index
    %141 = vector.load %arg21[%c0_142, %c0_143] : memref<20x80xf32, #tpu.memory_space<vmem>>, vector<18x80xf32>
    %c0_144 = arith.constant 0 : index
    %c0_145 = arith.constant 0 : index
    %c0_146 = arith.constant 0 : index
    %142 = vector.load %arg8[%c0_144, %c0_145, %c0_146] : memref<3x80x64xf32, #tpu.memory_space<vmem>>, vector<1x80x64xf32>
    %143 = vector.shape_cast %142 : vector<1x80x64xf32> to vector<80x64xf32>
    %cst_147 = arith.constant dense<0.000000e+00> : vector<18x64xf32>
    %144 = tpu.matmul %141, %143, %cst_147 {dimension_numbers = #tpu.dot_dimension_numbers<[1], [0], [0], [1], [0, 0, 1, 1], [], []>} : vector<18x80xf32>, vector<80x64xf32>, vector<18x64xf32> -> vector<18x64xf32>
    %c1_148 = arith.constant 1 : index
    %c0_149 = arith.constant 0 : index
    %145 = vector.load %arg21[%c1_148, %c0_149] : memref<20x80xf32, #tpu.memory_space<vmem>>, vector<18x80xf32>
    %c1_150 = arith.constant 1 : index
    %c0_151 = arith.constant 0 : index
    %c0_152 = arith.constant 0 : index
    %146 = vector.load %arg8[%c1_150, %c0_151, %c0_152] : memref<3x80x64xf32, #tpu.memory_space<vmem>>, vector<1x80x64xf32>
    %147 = vector.shape_cast %146 : vector<1x80x64xf32> to vector<80x64xf32>
    %cst_153 = arith.constant dense<0.000000e+00> : vector<18x64xf32>
    %148 = tpu.matmul %145, %147, %cst_153 {dimension_numbers = #tpu.dot_dimension_numbers<[1], [0], [0], [1], [0, 0, 1, 1], [], []>} : vector<18x80xf32>, vector<80x64xf32>, vector<18x64xf32> -> vector<18x64xf32>
    %149 = arith.addf %144, %148 : vector<18x64xf32>
    %c2_154 = arith.constant 2 : index
    %c0_155 = arith.constant 0 : index
    %150 = vector.load %arg21[%c2_154, %c0_155] : memref<20x80xf32, #tpu.memory_space<vmem>>, vector<18x80xf32>
    %c2_156 = arith.constant 2 : index
    %c0_157 = arith.constant 0 : index
    %c0_158 = arith.constant 0 : index
    %151 = vector.load %arg8[%c2_156, %c0_157, %c0_158] : memref<3x80x64xf32, #tpu.memory_space<vmem>>, vector<1x80x64xf32>
    %152 = vector.shape_cast %151 : vector<1x80x64xf32> to vector<80x64xf32>
    %cst_159 = arith.constant dense<0.000000e+00> : vector<18x64xf32>
    %153 = tpu.matmul %150, %152, %cst_159 {dimension_numbers = #tpu.dot_dimension_numbers<[1], [0], [0], [1], [0, 0, 1, 1], [], []>} : vector<18x80xf32>, vector<80x64xf32>, vector<18x64xf32> -> vector<18x64xf32>
    %154 = arith.addf %149, %153 : vector<18x64xf32>
    %155 = arith.negf %154 : vector<18x64xf32>
    %156 = math.exp %155 : vector<18x64xf32>
    %cst_160 = arith.constant 1.000000e+00 : f32
    %157 = vector.broadcast %cst_160 : f32 to vector<18x64xf32>
    %158 = arith.addf %157, %156 : vector<18x64xf32>
    %159 = arith.divf %157, %158 : vector<18x64xf32>
    %160 = arith.mulf %154, %159 : vector<18x64xf32>
    %c0_161 = arith.constant 0 : index
    %c0_162 = arith.constant 0 : index
    %161 = vector.load %arg9[%c0_161, %c0_162] : memref<1x64xf32, #tpu.memory_space<vmem>>, vector<1x64xf32>
    %162 = vector.broadcast %161 : vector<1x64xf32> to vector<18x64xf32>
    %163 = arith.mulf %160, %162 : vector<18x64xf32>
    %c0_163 = arith.constant 0 : index
    %c0_164 = arith.constant 0 : index
    %164 = vector.load %arg10[%c0_163, %c0_164] : memref<1x64xf32, #tpu.memory_space<vmem>>, vector<1x64xf32>
    %165 = vector.broadcast %164 : vector<1x64xf32> to vector<18x64xf32>
    %166 = arith.addf %163, %165 : vector<18x64xf32>
    %167 = vector.extract_strided_slice %166 {offsets = [0, 0], sizes = [8, 64], strides = [1, 1]} : vector<18x64xf32> to vector<8x64xf32>
    %168 = arith.addf %124, %167 : vector<8x64xf32>
    %169 = arith.negf %168 : vector<8x64xf32>
    %170 = math.exp %169 : vector<8x64xf32>
    %cst_165 = arith.constant 1.000000e+00 : f32
    %171 = vector.broadcast %cst_165 : f32 to vector<8x64xf32>
    %172 = arith.addf %171, %170 : vector<8x64xf32>
    %173 = arith.divf %171, %172 : vector<8x64xf32>
    %174 = arith.mulf %168, %173 : vector<8x64xf32>
    %175 = vector.extract_strided_slice %166 {offsets = [10, 0], sizes = [8, 64], strides = [1, 1]} : vector<18x64xf32> to vector<8x64xf32>
    %176 = arith.addf %139, %175 : vector<8x64xf32>
    %177 = arith.negf %176 : vector<8x64xf32>
    %178 = math.exp %177 : vector<8x64xf32>
    %cst_166 = arith.constant 1.000000e+00 : f32
    %179 = vector.broadcast %cst_166 : f32 to vector<8x64xf32>
    %180 = arith.addf %179, %178 : vector<8x64xf32>
    %181 = arith.divf %179, %180 : vector<8x64xf32>
    %182 = arith.mulf %176, %181 : vector<8x64xf32>
    %c0_167 = arith.constant 0 : index
    %c0_168 = arith.constant 0 : index
    %c0_169 = arith.constant 0 : index
    %183 = vector.load %arg11[%c0_167, %c0_168, %c0_169] : memref<2x4x8xf32, #tpu.memory_space<vmem>>, vector<1x4x8xf32>
    %184 = vector.shape_cast %183 : vector<1x4x8xf32> to vector<4x8xf32>
    %cst_170 = arith.constant dense<0.000000e+00> : vector<4x64xf32>
    %185 = tpu.matmul %184, %174, %cst_170 {dimension_numbers = #tpu.dot_dimension_numbers<[1], [0], [0], [1], [0, 0, 1, 1], [], []>} : vector<4x8xf32>, vector<8x64xf32>, vector<4x64xf32> -> vector<4x64xf32>
    %c1_171 = arith.constant 1 : index
    %c0_172 = arith.constant 0 : index
    %c0_173 = arith.constant 0 : index
    %186 = vector.load %arg11[%c1_171, %c0_172, %c0_173] : memref<2x4x8xf32, #tpu.memory_space<vmem>>, vector<1x4x8xf32>
    %187 = vector.shape_cast %186 : vector<1x4x8xf32> to vector<4x8xf32>
    %cst_174 = arith.constant dense<0.000000e+00> : vector<4x64xf32>
    %188 = tpu.matmul %187, %174, %cst_174 {dimension_numbers = #tpu.dot_dimension_numbers<[1], [0], [0], [1], [0, 0, 1, 1], [], []>} : vector<4x8xf32>, vector<8x64xf32>, vector<4x64xf32> -> vector<4x64xf32>
    %189 = arith.maximumf %185, %188 : vector<4x64xf32>
    %c0_175 = arith.constant 0 : index
    %c0_176 = arith.constant 0 : index
    %c0_177 = arith.constant 0 : index
    %190 = vector.load %arg12[%c0_175, %c0_176, %c0_177] : memref<2x64x32xf32, #tpu.memory_space<vmem>>, vector<1x64x32xf32>
    %191 = vector.shape_cast %190 : vector<1x64x32xf32> to vector<64x32xf32>
    %cst_178 = arith.constant dense<0.000000e+00> : vector<4x32xf32>
    %192 = tpu.matmul %189, %191, %cst_178 {dimension_numbers = #tpu.dot_dimension_numbers<[1], [0], [0], [1], [0, 0, 1, 1], [], []>} : vector<4x64xf32>, vector<64x32xf32>, vector<4x32xf32> -> vector<4x32xf32>
    %c1_179 = arith.constant 1 : index
    %c0_180 = arith.constant 0 : index
    %c0_181 = arith.constant 0 : index
    %193 = vector.load %arg12[%c1_179, %c0_180, %c0_181] : memref<2x64x32xf32, #tpu.memory_space<vmem>>, vector<1x64x32xf32>
    %194 = vector.shape_cast %193 : vector<1x64x32xf32> to vector<64x32xf32>
    %cst_182 = arith.constant dense<0.000000e+00> : vector<4x32xf32>
    %195 = tpu.matmul %189, %194, %cst_182 {dimension_numbers = #tpu.dot_dimension_numbers<[1], [0], [0], [1], [0, 0, 1, 1], [], []>} : vector<4x64xf32>, vector<64x32xf32>, vector<4x32xf32> -> vector<4x32xf32>
    %196 = arith.maximumf %192, %195 : vector<4x32xf32>
    %c1_183 = arith.constant 1 : index
    %c8_184 = arith.constant 8 : index
    %197 = vector.load %arg22[%c1_183, %c8_184] : memref<12x48xf32, #tpu.memory_space<vmem>>, vector<4x32xf32>
    tpu.vector_store %arg22[%c1_183, %c8_184], %196 {strides = array<i32>} : memref<12x48xf32, #tpu.memory_space<vmem>>, vector<4x32xf32>,
    %c0_185 = arith.constant 0 : index
    %c0_186 = arith.constant 0 : index
    %c0_187 = arith.constant 0 : index
    %198 = vector.load %arg11[%c0_185, %c0_186, %c0_187] : memref<2x4x8xf32, #tpu.memory_space<vmem>>, vector<1x4x8xf32>
    %199 = vector.shape_cast %198 : vector<1x4x8xf32> to vector<4x8xf32>
    %cst_188 = arith.constant dense<0.000000e+00> : vector<4x64xf32>
    %200 = tpu.matmul %199, %182, %cst_188 {dimension_numbers = #tpu.dot_dimension_numbers<[1], [0], [0], [1], [0, 0, 1, 1], [], []>} : vector<4x8xf32>, vector<8x64xf32>, vector<4x64xf32> -> vector<4x64xf32>
    %c1_189 = arith.constant 1 : index
    %c0_190 = arith.constant 0 : index
    %c0_191 = arith.constant 0 : index
    %201 = vector.load %arg11[%c1_189, %c0_190, %c0_191] : memref<2x4x8xf32, #tpu.memory_space<vmem>>, vector<1x4x8xf32>
    %202 = vector.shape_cast %201 : vector<1x4x8xf32> to vector<4x8xf32>
    %cst_192 = arith.constant dense<0.000000e+00> : vector<4x64xf32>
    %203 = tpu.matmul %202, %182, %cst_192 {dimension_numbers = #tpu.dot_dimension_numbers<[1], [0], [0], [1], [0, 0, 1, 1], [], []>} : vector<4x8xf32>, vector<8x64xf32>, vector<4x64xf32> -> vector<4x64xf32>
    %204 = arith.maximumf %200, %203 : vector<4x64xf32>
    %c0_193 = arith.constant 0 : index
    %c0_194 = arith.constant 0 : index
    %c0_195 = arith.constant 0 : index
    %205 = vector.load %arg12[%c0_193, %c0_194, %c0_195] : memref<2x64x32xf32, #tpu.memory_space<vmem>>, vector<1x64x32xf32>
    %206 = vector.shape_cast %205 : vector<1x64x32xf32> to vector<64x32xf32>
    %cst_196 = arith.constant dense<0.000000e+00> : vector<4x32xf32>
    %207 = tpu.matmul %204, %206, %cst_196 {dimension_numbers = #tpu.dot_dimension_numbers<[1], [0], [0], [1], [0, 0, 1, 1], [], []>} : vector<4x64xf32>, vector<64x32xf32>, vector<4x32xf32> -> vector<4x32xf32>
    %c1_197 = arith.constant 1 : index
    %c0_198 = arith.constant 0 : index
    %c0_199 = arith.constant 0 : index
    %208 = vector.load %arg12[%c1_197, %c0_198, %c0_199] : memref<2x64x32xf32, #tpu.memory_space<vmem>>, vector<1x64x32xf32>
    %209 = vector.shape_cast %208 : vector<1x64x32xf32> to vector<64x32xf32>
    %cst_200 = arith.constant dense<0.000000e+00> : vector<4x32xf32>
    %210 = tpu.matmul %204, %209, %cst_200 {dimension_numbers = #tpu.dot_dimension_numbers<[1], [0], [0], [1], [0, 0, 1, 1], [], []>} : vector<4x64xf32>, vector<64x32xf32>, vector<4x32xf32> -> vector<4x32xf32>
    %211 = arith.maximumf %207, %210 : vector<4x32xf32>
    %c7_201 = arith.constant 7 : index
    %c8_202 = arith.constant 8 : index
    %212 = vector.load %arg22[%c7_201, %c8_202] : memref<12x48xf32, #tpu.memory_space<vmem>>, vector<4x32xf32>
    tpu.vector_store %arg22[%c7_201, %c8_202], %211 {strides = array<i32>} : memref<12x48xf32, #tpu.memory_space<vmem>>, vector<4x32xf32>,
    %c0_203 = arith.constant 0 : index
    %c0_204 = arith.constant 0 : index
    %213 = vector.load %arg22[%c0_203, %c0_204] : memref<12x48xf32, #tpu.memory_space<vmem>>, vector<10x48xf32>
    %c0_205 = arith.constant 0 : index
    %c0_206 = arith.constant 0 : index
    %c0_207 = arith.constant 0 : index
    %214 = vector.load %arg13[%c0_205, %c0_206, %c0_207] : memref<3x48x32xf32, #tpu.memory_space<vmem>>, vector<1x48x32xf32>
    %215 = vector.shape_cast %214 : vector<1x48x32xf32> to vector<48x32xf32>
    %cst_208 = arith.constant dense<0.000000e+00> : vector<10x32xf32>
    %216 = tpu.matmul %213, %215, %cst_208 {dimension_numbers = #tpu.dot_dimension_numbers<[1], [0], [0], [1], [0, 0, 1, 1], [], []>} : vector<10x48xf32>, vector<48x32xf32>, vector<10x32xf32> -> vector<10x32xf32>
    %c1_209 = arith.constant 1 : index
    %c0_210 = arith.constant 0 : index
    %217 = vector.load %arg22[%c1_209, %c0_210] : memref<12x48xf32, #tpu.memory_space<vmem>>, vector<10x48xf32>
    %c1_211 = arith.constant 1 : index
    %c0_212 = arith.constant 0 : index
    %c0_213 = arith.constant 0 : index
    %218 = vector.load %arg13[%c1_211, %c0_212, %c0_213] : memref<3x48x32xf32, #tpu.memory_space<vmem>>, vector<1x48x32xf32>
    %219 = vector.shape_cast %218 : vector<1x48x32xf32> to vector<48x32xf32>
    %cst_214 = arith.constant dense<0.000000e+00> : vector<10x32xf32>
    %220 = tpu.matmul %217, %219, %cst_214 {dimension_numbers = #tpu.dot_dimension_numbers<[1], [0], [0], [1], [0, 0, 1, 1], [], []>} : vector<10x48xf32>, vector<48x32xf32>, vector<10x32xf32> -> vector<10x32xf32>
    %221 = arith.addf %216, %220 : vector<10x32xf32>
    %c2_215 = arith.constant 2 : index
    %c0_216 = arith.constant 0 : index
    %222 = vector.load %arg22[%c2_215, %c0_216] : memref<12x48xf32, #tpu.memory_space<vmem>>, vector<10x48xf32>
    %c2_217 = arith.constant 2 : index
    %c0_218 = arith.constant 0 : index
    %c0_219 = arith.constant 0 : index
    %223 = vector.load %arg13[%c2_217, %c0_218, %c0_219] : memref<3x48x32xf32, #tpu.memory_space<vmem>>, vector<1x48x32xf32>
    %224 = vector.shape_cast %223 : vector<1x48x32xf32> to vector<48x32xf32>
    %cst_220 = arith.constant dense<0.000000e+00> : vector<10x32xf32>
    %225 = tpu.matmul %222, %224, %cst_220 {dimension_numbers = #tpu.dot_dimension_numbers<[1], [0], [0], [1], [0, 0, 1, 1], [], []>} : vector<10x48xf32>, vector<48x32xf32>, vector<10x32xf32> -> vector<10x32xf32>
    %226 = arith.addf %221, %225 : vector<10x32xf32>
    %227 = arith.negf %226 : vector<10x32xf32>
    %228 = math.exp %227 : vector<10x32xf32>
    %cst_221 = arith.constant 1.000000e+00 : f32
    %229 = vector.broadcast %cst_221 : f32 to vector<10x32xf32>
    %230 = arith.addf %229, %228 : vector<10x32xf32>
    %231 = arith.divf %229, %230 : vector<10x32xf32>
    %232 = arith.mulf %226, %231 : vector<10x32xf32>
    %c0_222 = arith.constant 0 : index
    %c0_223 = arith.constant 0 : index
    %233 = vector.load %arg14[%c0_222, %c0_223] : memref<1x32xf32, #tpu.memory_space<vmem>>, vector<1x32xf32>
    %234 = vector.broadcast %233 : vector<1x32xf32> to vector<10x32xf32>
    %235 = arith.mulf %232, %234 : vector<10x32xf32>
    %c0_224 = arith.constant 0 : index
    %c0_225 = arith.constant 0 : index
    %236 = vector.load %arg15[%c0_224, %c0_225] : memref<1x32xf32, #tpu.memory_space<vmem>>, vector<1x32xf32>
    %237 = vector.broadcast %236 : vector<1x32xf32> to vector<10x32xf32>
    %238 = arith.addf %235, %237 : vector<10x32xf32>
    %239 = vector.extract_strided_slice %238 {offsets = [0, 0], sizes = [4, 32], strides = [1, 1]} : vector<10x32xf32> to vector<4x32xf32>
    %240 = arith.addf %196, %239 : vector<4x32xf32>
    %241 = arith.negf %240 : vector<4x32xf32>
    %242 = math.exp %241 : vector<4x32xf32>
    %cst_226 = arith.constant 1.000000e+00 : f32
    %243 = vector.broadcast %cst_226 : f32 to vector<4x32xf32>
    %244 = arith.addf %243, %242 : vector<4x32xf32>
    %245 = arith.divf %243, %244 : vector<4x32xf32>
    %246 = arith.mulf %240, %245 : vector<4x32xf32>
    %247 = vector.extract_strided_slice %238 {offsets = [6, 0], sizes = [4, 32], strides = [1, 1]} : vector<10x32xf32> to vector<4x32xf32>
    %248 = arith.addf %211, %247 : vector<4x32xf32>
    %249 = arith.negf %248 : vector<4x32xf32>
    %250 = math.exp %249 : vector<4x32xf32>
    %cst_227 = arith.constant 1.000000e+00 : f32
    %251 = vector.broadcast %cst_227 : f32 to vector<4x32xf32>
    %252 = arith.addf %251, %250 : vector<4x32xf32>
    %253 = arith.divf %251, %252 : vector<4x32xf32>
    %254 = arith.mulf %248, %253 : vector<4x32xf32>
    %c3 = arith.constant 3 : index
    %c24 = arith.constant 24 : index
    %255 = vector.load %arg23[%c3, %c24] : memref<20x80xf32, #tpu.memory_space<vmem>>, vector<4x32xf32>
    tpu.vector_store %arg23[%c3, %c24], %246 {strides = array<i32>} : memref<20x80xf32, #tpu.memory_space<vmem>>, vector<4x32xf32>,
    %c13 = arith.constant 13 : index
    %c24_228 = arith.constant 24 : index
    %256 = vector.load %arg23[%c13, %c24_228] : memref<20x80xf32, #tpu.memory_space<vmem>>, vector<4x32xf32>
    tpu.vector_store %arg23[%c13, %c24_228], %254 {strides = array<i32>} : memref<20x80xf32, #tpu.memory_space<vmem>>, vector<4x32xf32>,
    %c0_229 = arith.constant 0 : index
    %c0_230 = arith.constant 0 : index
    %257 = vector.load %arg23[%c0_229, %c0_230] : memref<20x80xf32, #tpu.memory_space<vmem>>, vector<14x80xf32>
    %c0_231 = arith.constant 0 : index
    %c0_232 = arith.constant 0 : index
    %c0_233 = arith.constant 0 : index
    %258 = vector.load %arg16[%c0_231, %c0_232, %c0_233] : memref<7x80x32xf32, #tpu.memory_space<vmem>>, vector<1x80x32xf32>
    %259 = vector.shape_cast %258 : vector<1x80x32xf32> to vector<80x32xf32>
    %cst_234 = arith.constant dense<0.000000e+00> : vector<14x32xf32>
    %260 = tpu.matmul %257, %259, %cst_234 {dimension_numbers = #tpu.dot_dimension_numbers<[1], [0], [0], [1], [0, 0, 1, 1], [], []>} : vector<14x80xf32>, vector<80x32xf32>, vector<14x32xf32> -> vector<14x32xf32>
    %c1_235 = arith.constant 1 : index
    %c0_236 = arith.constant 0 : index
    %261 = vector.load %arg23[%c1_235, %c0_236] : memref<20x80xf32, #tpu.memory_space<vmem>>, vector<14x80xf32>
    %c1_237 = arith.constant 1 : index
    %c0_238 = arith.constant 0 : index
    %c0_239 = arith.constant 0 : index
    %262 = vector.load %arg16[%c1_237, %c0_238, %c0_239] : memref<7x80x32xf32, #tpu.memory_space<vmem>>, vector<1x80x32xf32>
    %263 = vector.shape_cast %262 : vector<1x80x32xf32> to vector<80x32xf32>
    %cst_240 = arith.constant dense<0.000000e+00> : vector<14x32xf32>
    %264 = tpu.matmul %261, %263, %cst_240 {dimension_numbers = #tpu.dot_dimension_numbers<[1], [0], [0], [1], [0, 0, 1, 1], [], []>} : vector<14x80xf32>, vector<80x32xf32>, vector<14x32xf32> -> vector<14x32xf32>
    %265 = arith.addf %260, %264 : vector<14x32xf32>
    %c2_241 = arith.constant 2 : index
    %c0_242 = arith.constant 0 : index
    %266 = vector.load %arg23[%c2_241, %c0_242] : memref<20x80xf32, #tpu.memory_space<vmem>>, vector<14x80xf32>
    %c2_243 = arith.constant 2 : index
    %c0_244 = arith.constant 0 : index
    %c0_245 = arith.constant 0 : index
    %267 = vector.load %arg16[%c2_243, %c0_244, %c0_245] : memref<7x80x32xf32, #tpu.memory_space<vmem>>, vector<1x80x32xf32>
    %268 = vector.shape_cast %267 : vector<1x80x32xf32> to vector<80x32xf32>
    %cst_246 = arith.constant dense<0.000000e+00> : vector<14x32xf32>
    %269 = tpu.matmul %266, %268, %cst_246 {dimension_numbers = #tpu.dot_dimension_numbers<[1], [0], [0], [1], [0, 0, 1, 1], [], []>} : vector<14x80xf32>, vector<80x32xf32>, vector<14x32xf32> -> vector<14x32xf32>
    %270 = arith.addf %265, %269 : vector<14x32xf32>
    %c3_247 = arith.constant 3 : index
    %c0_248 = arith.constant 0 : index
    %271 = vector.load %arg23[%c3_247, %c0_248] : memref<20x80xf32, #tpu.memory_space<vmem>>, vector<14x80xf32>
    %c3_249 = arith.constant 3 : index
    %c0_250 = arith.constant 0 : index
    %c0_251 = arith.constant 0 : index
    %272 = vector.load %arg16[%c3_249, %c0_250, %c0_251] : memref<7x80x32xf32, #tpu.memory_space<vmem>>, vector<1x80x32xf32>
    %273 = vector.shape_cast %272 : vector<1x80x32xf32> to vector<80x32xf32>
    %cst_252 = arith.constant dense<0.000000e+00> : vector<14x32xf32>
    %274 = tpu.matmul %271, %273, %cst_252 {dimension_numbers = #tpu.dot_dimension_numbers<[1], [0], [0], [1], [0, 0, 1, 1], [], []>} : vector<14x80xf32>, vector<80x32xf32>, vector<14x32xf32> -> vector<14x32xf32>
    %275 = arith.addf %270, %274 : vector<14x32xf32>
    %c4 = arith.constant 4 : index
    %c0_253 = arith.constant 0 : index
    %276 = vector.load %arg23[%c4, %c0_253] : memref<20x80xf32, #tpu.memory_space<vmem>>, vector<14x80xf32>
    %c4_254 = arith.constant 4 : index
    %c0_255 = arith.constant 0 : index
    %c0_256 = arith.constant 0 : index
    %277 = vector.load %arg16[%c4_254, %c0_255, %c0_256] : memref<7x80x32xf32, #tpu.memory_space<vmem>>, vector<1x80x32xf32>
    %278 = vector.shape_cast %277 : vector<1x80x32xf32> to vector<80x32xf32>
    %cst_257 = arith.constant dense<0.000000e+00> : vector<14x32xf32>
    %279 = tpu.matmul %276, %278, %cst_257 {dimension_numbers = #tpu.dot_dimension_numbers<[1], [0], [0], [1], [0, 0, 1, 1], [], []>} : vector<14x80xf32>, vector<80x32xf32>, vector<14x32xf32> -> vector<14x32xf32>
    %280 = arith.addf %275, %279 : vector<14x32xf32>
    %c5_258 = arith.constant 5 : index
    %c0_259 = arith.constant 0 : index
    %281 = vector.load %arg23[%c5_258, %c0_259] : memref<20x80xf32, #tpu.memory_space<vmem>>, vector<14x80xf32>
    %c5_260 = arith.constant 5 : index
    %c0_261 = arith.constant 0 : index
    %c0_262 = arith.constant 0 : index
    %282 = vector.load %arg16[%c5_260, %c0_261, %c0_262] : memref<7x80x32xf32, #tpu.memory_space<vmem>>, vector<1x80x32xf32>
    %283 = vector.shape_cast %282 : vector<1x80x32xf32> to vector<80x32xf32>
    %cst_263 = arith.constant dense<0.000000e+00> : vector<14x32xf32>
    %284 = tpu.matmul %281, %283, %cst_263 {dimension_numbers = #tpu.dot_dimension_numbers<[1], [0], [0], [1], [0, 0, 1, 1], [], []>} : vector<14x80xf32>, vector<80x32xf32>, vector<14x32xf32> -> vector<14x32xf32>
    %285 = arith.addf %280, %284 : vector<14x32xf32>
    %c6_264 = arith.constant 6 : index
    %c0_265 = arith.constant 0 : index
    %286 = vector.load %arg23[%c6_264, %c0_265] : memref<20x80xf32, #tpu.memory_space<vmem>>, vector<14x80xf32>
    %c6_266 = arith.constant 6 : index
    %c0_267 = arith.constant 0 : index
    %c0_268 = arith.constant 0 : index
    %287 = vector.load %arg16[%c6_266, %c0_267, %c0_268] : memref<7x80x32xf32, #tpu.memory_space<vmem>>, vector<1x80x32xf32>
    %288 = vector.shape_cast %287 : vector<1x80x32xf32> to vector<80x32xf32>
    %cst_269 = arith.constant dense<0.000000e+00> : vector<14x32xf32>
    %289 = tpu.matmul %286, %288, %cst_269 {dimension_numbers = #tpu.dot_dimension_numbers<[1], [0], [0], [1], [0, 0, 1, 1], [], []>} : vector<14x80xf32>, vector<80x32xf32>, vector<14x32xf32> -> vector<14x32xf32>
    %290 = arith.addf %285, %289 : vector<14x32xf32>
    %c0_270 = arith.constant 0 : index
    %c0_271 = arith.constant 0 : index
    %291 = vector.load %arg17[%c0_270, %c0_271] : memref<1x32xf32, #tpu.memory_space<vmem>>, vector<1x32xf32>
    %292 = vector.broadcast %291 : vector<1x32xf32> to vector<14x32xf32>
    %293 = arith.mulf %290, %292 : vector<14x32xf32>
    %c0_272 = arith.constant 0 : index
    %c0_273 = arith.constant 0 : index
    %294 = vector.load %arg18[%c0_272, %c0_273] : memref<1x32xf32, #tpu.memory_space<vmem>>, vector<1x32xf32>
    %295 = vector.broadcast %294 : vector<1x32xf32> to vector<14x32xf32>
    %296 = arith.addf %293, %295 : vector<14x32xf32>
    %297 = arith.negf %296 : vector<14x32xf32>
    %298 = math.exp %297 : vector<14x32xf32>
    %cst_274 = arith.constant 1.000000e+00 : f32
    %299 = vector.broadcast %cst_274 : f32 to vector<14x32xf32>
    %300 = arith.addf %299, %298 : vector<14x32xf32>
    %301 = arith.divf %299, %300 : vector<14x32xf32>
    %302 = arith.mulf %296, %301 : vector<14x32xf32>
    %303 = vector.extract_strided_slice %302 {offsets = [0, 0], sizes = [4, 32], strides = [1, 1]} : vector<14x32xf32> to vector<4x32xf32>
    %c0_275 = arith.constant 0 : index
    %c0_276 = arith.constant 0 : index
    %c0_277 = arith.constant 0 : index
    %304 = vector.load %arg19[%c0_275, %c0_276, %c0_277] : memref<1x8x32xf32, #tpu.memory_space<vmem>>, vector<1x4x32xf32>
    %305 = vector.shape_cast %304 : vector<1x4x32xf32> to vector<4x32xf32>
    %306 = vector.shape_cast %303 : vector<4x32xf32> to vector<1x4x32xf32>
    tpu.vector_store %arg19[%c0_275, %c0_276, %c0_277], %306 {strides = array<i32>} : memref<1x8x32xf32, #tpu.memory_space<vmem>>, vector<1x4x32xf32>,
    %307 = vector.extract_strided_slice %302 {offsets = [10, 0], sizes = [4, 32], strides = [1, 1]} : vector<14x32xf32> to vector<4x32xf32>
    %c0_278 = arith.constant 0 : index
    %c4_279 = arith.constant 4 : index
    %c0_280 = arith.constant 0 : index
    %308 = vector.load %arg19[%c0_278, %c4_279, %c0_280] : memref<1x8x32xf32, #tpu.memory_space<vmem>>, vector<1x4x32xf32>
    %309 = vector.shape_cast %308 : vector<1x4x32xf32> to vector<4x32xf32>
    %310 = vector.shape_cast %307 : vector<4x32xf32> to vector<1x4x32xf32>
    tpu.vector_store %arg19[%c0_278, %c4_279, %c0_280], %310 {strides = array<i32>} : memref<1x8x32xf32, #tpu.memory_space<vmem>>, vector<1x4x32xf32>,
    return
  }
  func.func @transform_0(%arg0: i32) -> (i32, i32, i32, i32) {
    %c0_i32 = arith.constant 0 : i32
    %c0_i32_0 = arith.constant 0 : i32
    %c0_i32_1 = arith.constant 0 : i32
    %c0_i32_2 = arith.constant 0 : i32
    return %arg0, %c0_i32, %c0_i32_0, %c0_i32_1 : i32, i32, i32, i32
  }
  func.func @transform_1(%arg0: i32) -> (i32, i32, i32) {
    %c0_i32 = arith.constant 0 : i32
    %c0_i32_0 = arith.constant 0 : i32
    %c0_i32_1 = arith.constant 0 : i32
    %c0_i32_2 = arith.constant 0 : i32
    return %c0_i32, %c0_i32_0, %c0_i32_1 : i32, i32, i32
  }
  func.func @transform_2(%arg0: i32) -> (i32, i32, i32) {
    %c0_i32 = arith.constant 0 : i32
    %c0_i32_0 = arith.constant 0 : i32
    %c0_i32_1 = arith.constant 0 : i32
    %c0_i32_2 = arith.constant 0 : i32
    return %c0_i32, %c0_i32_0, %c0_i32_1 : i32, i32, i32
  }
  func.func @transform_3(%arg0: i32) -> (i32, i32) {
    %c0_i32 = arith.constant 0 : i32
    %c0_i32_0 = arith.constant 0 : i32
    %c0_i32_1 = arith.constant 0 : i32
    return %c0_i32, %c0_i32_0 : i32, i32
  }
  func.func @transform_4(%arg0: i32) -> (i32, i32) {
    %c0_i32 = arith.constant 0 : i32
    %c0_i32_0 = arith.constant 0 : i32
    %c0_i32_1 = arith.constant 0 : i32
    return %c0_i32, %c0_i32_0 : i32, i32
  }
  func.func @transform_5(%arg0: i32) -> (i32, i32, i32) {
    %c0_i32 = arith.constant 0 : i32
    %c0_i32_0 = arith.constant 0 : i32
    %c0_i32_1 = arith.constant 0 : i32
    %c0_i32_2 = arith.constant 0 : i32
    return %c0_i32, %c0_i32_0, %c0_i32_1 : i32, i32, i32
  }
  func.func @transform_6(%arg0: i32) -> (i32, i32, i32) {
    %c0_i32 = arith.constant 0 : i32
    %c0_i32_0 = arith.constant 0 : i32
    %c0_i32_1 = arith.constant 0 : i32
    %c0_i32_2 = arith.constant 0 : i32
    return %c0_i32, %c0_i32_0, %c0_i32_1 : i32, i32, i32
  }
  func.func @transform_7(%arg0: i32) -> (i32, i32, i32) {
    %c0_i32 = arith.constant 0 : i32
    %c0_i32_0 = arith.constant 0 : i32
    %c0_i32_1 = arith.constant 0 : i32
    %c0_i32_2 = arith.constant 0 : i32
    return %c0_i32, %c0_i32_0, %c0_i32_1 : i32, i32, i32
  }
  func.func @transform_8(%arg0: i32) -> (i32, i32) {
    %c0_i32 = arith.constant 0 : i32
    %c0_i32_0 = arith.constant 0 : i32
    %c0_i32_1 = arith.constant 0 : i32
    return %c0_i32, %c0_i32_0 : i32, i32
  }
  func.func @transform_9(%arg0: i32) -> (i32, i32) {
    %c0_i32 = arith.constant 0 : i32
    %c0_i32_0 = arith.constant 0 : i32
    %c0_i32_1 = arith.constant 0 : i32
    return %c0_i32, %c0_i32_0 : i32, i32
  }
  func.func @transform_10(%arg0: i32) -> (i32, i32, i32) {
    %c0_i32 = arith.constant 0 : i32
    %c0_i32_0 = arith.constant 0 : i32
    %c0_i32_1 = arith.constant 0 : i32
    %c0_i32_2 = arith.constant 0 : i32
    return %c0_i32, %c0_i32_0, %c0_i32_1 : i32, i32, i32
  }
  func.func @transform_11(%arg0: i32) -> (i32, i32, i32) {
    %c0_i32 = arith.constant 0 : i32
    %c0_i32_0 = arith.constant 0 : i32
    %c0_i32_1 = arith.constant 0 : i32
    %c0_i32_2 = arith.constant 0 : i32
    return %c0_i32, %c0_i32_0, %c0_i32_1 : i32, i32, i32
  }
  func.func @transform_12(%arg0: i32) -> (i32, i32, i32) {
    %c0_i32 = arith.constant 0 : i32
    %c0_i32_0 = arith.constant 0 : i32
    %c0_i32_1 = arith.constant 0 : i32
    %c0_i32_2 = arith.constant 0 : i32
    return %c0_i32, %c0_i32_0, %c0_i32_1 : i32, i32, i32
  }
  func.func @transform_13(%arg0: i32) -> (i32, i32) {
    %c0_i32 = arith.constant 0 : i32
    %c0_i32_0 = arith.constant 0 : i32
    %c0_i32_1 = arith.constant 0 : i32
    return %c0_i32, %c0_i32_0 : i32, i32
  }
  func.func @transform_14(%arg0: i32) -> (i32, i32) {
    %c0_i32 = arith.constant 0 : i32
    %c0_i32_0 = arith.constant 0 : i32
    %c0_i32_1 = arith.constant 0 : i32
    return %c0_i32, %c0_i32_0 : i32, i32
  }
  func.func @transform_15(%arg0: i32) -> (i32, i32, i32) {
    %c0_i32 = arith.constant 0 : i32
    %c0_i32_0 = arith.constant 0 : i32
    %c0_i32_1 = arith.constant 0 : i32
    %c0_i32_2 = arith.constant 0 : i32
    return %c0_i32, %c0_i32_0, %c0_i32_1 : i32, i32, i32
  }
  func.func @transform_16(%arg0: i32) -> (i32, i32) {
    %c0_i32 = arith.constant 0 : i32
    %c0_i32_0 = arith.constant 0 : i32
    %c0_i32_1 = arith.constant 0 : i32
    return %c0_i32, %c0_i32_0 : i32, i32
  }
  func.func @transform_17(%arg0: i32) -> (i32, i32) {
    %c0_i32 = arith.constant 0 : i32
    %c0_i32_0 = arith.constant 0 : i32
    %c0_i32_1 = arith.constant 0 : i32
    return %c0_i32, %c0_i32_0 : i32, i32
  }
  func.func @transform_18(%arg0: i32) -> (i32, i32, i32) {
    %c0_i32 = arith.constant 0 : i32
    %c0_i32_0 = arith.constant 0 : i32
    %c0_i32_1 = arith.constant 0 : i32
    return %arg0, %c0_i32, %c0_i32_0 : i32, i32, i32
  }
}

</mosaic_0001>

<llo_original>
// kernel: backbone_apply.1
$region0: #{backbone_apply.1}
  #allocation0 [shape = 'u32[]', space=smem, size = 0x4, offset = 0x4, fixed_abs, tag = 'smem constant byte address 0x4 - core index']
  #allocation1 [shape = 'u32[144,128]{1,0:T(1,128)}', space=vmem, size = 0x12000, scoped, tag = 'internal scratch']
  #allocation2 [shape = 'f32[36,144]{1,0:T(8,128)}', space=vmem, size = 0xa000, scoped, tag = 'scratch operand']
  #allocation3 [shape = 'f32[20,80]{1,0:T(8,128)}', space=vmem, size = 0x3000, scoped, tag = 'scratch operand']
  #allocation4 [shape = 'f32[12,48]{1,0:T(8,128)}', space=vmem, size = 0x2000, scoped, tag = 'scratch operand']
  #allocation5 [shape = 'f32[20,80]{1,0:T(8,128)}', space=vmem, size = 0x3000, scoped, tag = 'scratch operand']
  %s0 = inlined_call_operand.vmem [shape: f32[1,3,32,102], index: 0, kind: input, shape index: {}]
  %s1 = inlined_call_operand.vmem [shape: f32[3,102,128], index: 1, kind: input, shape index: {}]
  %s2 = inlined_call_operand.vmem [shape: f32[3,144,128], index: 2, kind: input, shape index: {}]
  %s3 = inlined_call_operand.vmem [shape: f32[1,128], index: 3, kind: input, shape index: {}]
  %s4 = inlined_call_operand.vmem [shape: f32[1,128], index: 4, kind: input, shape index: {}]
  %s5 = inlined_call_operand.vmem [shape: f32[2,8,16], index: 5, kind: input, shape index: {}]
  %s6 = inlined_call_operand.vmem [shape: f32[2,128,64], index: 6, kind: input, shape index: {}]
  %s7 = inlined_call_operand.vmem [shape: f32[3,80,64], index: 7, kind: input, shape index: {}]
  %s8 = inlined_call_operand.vmem [shape: f32[1,64], index: 8, kind: input, shape index: {}]
  %s9 = inlined_call_operand.vmem [shape: f32[1,64], index: 9, kind: input, shape index: {}]
  %s10 = inlined_call_operand.vmem [shape: f32[2,4,8], index: 10, kind: input, shape index: {}]
  %s11 = inlined_call_operand.vmem [shape: f32[2,64,32], index: 11, kind: input, shape index: {}]
  %s12 = inlined_call_operand.vmem [shape: f32[3,48,32], index: 12, kind: input, shape index: {}]
  %s13 = inlined_call_operand.vmem [shape: f32[1,32], index: 13, kind: input, shape index: {}]
  %s14 = inlined_call_operand.vmem [shape: f32[1,32], index: 14, kind: input, shape index: {}]
  %s15 = inlined_call_operand.vmem [shape: f32[7,80,32], index: 15, kind: input, shape index: {}]
  %s16 = inlined_call_operand.vmem [shape: f32[1,32], index: 16, kind: input, shape index: {}]
  %s17 = inlined_call_operand.vmem [shape: f32[1,32], index: 17, kind: input, shape index: {}]
  %s18 = inlined_call_operand.vmem [shape: f32[1,8,32], index: 18, kind: output, shape index: {}]
  %s19 = sld [smem:[#allocation0]]
  $region82: #{backbone_apply.1} parent=0
    _
  %s21 = ssub.s32 1, %s19
  %s22 = scalar_select 0, %s21, %s19
  // Predicated region
  $region2: #{backbone_apply.1} parent=0 // pred_check
    _
  $region3: #{backbone_apply.1} parent=0 // pred_check_branch
    %24 = sbr.rel (0) target = $region5
  $region4: #{backbone_apply.1} parent=0 // pred_region
    _
  $region5: #{backbone_apply.1} parent=0 // pred_fallthru
    _
  // Predicated region
  $region6: #{backbone_apply.1} parent=0 // pred_check
    _
  $region7: #{backbone_apply.1} parent=0 // pred_check_branch
    %26 = sbr.rel (0) target = $region9
  $region8: #{backbone_apply.1} parent=0 // pred_region
    _
  $region9: #{backbone_apply.1} parent=0 // pred_fallthru
    _
  // Predicated region
  $region10: #{backbone_apply.1} parent=0 // pred_check
    _
  $region11: #{backbone_apply.1} parent=0 // pred_check_branch
    %28 = sbr.rel (0) target = $region13
  $region12: #{backbone_apply.1} parent=0 // pred_region
    _
  $region13: #{backbone_apply.1} parent=0 // pred_fallthru
    _
  // Predicated region
  $region14: #{backbone_apply.1} parent=0 // pred_check
    _
  $region15: #{backbone_apply.1} parent=0 // pred_check_branch
    %30 = sbr.rel (0) target = $region17
  $region16: #{backbone_apply.1} parent=0 // pred_region
    _
  $region17: #{backbone_apply.1} parent=0 // pred_fallthru
    _
  // Predicated region
  $region18: #{backbone_apply.1} parent=0 // pred_check
    _
  $region19: #{backbone_apply.1} parent=0 // pred_check_branch
    %32 = sbr.rel (0) target = $region21
  $region20: #{backbone_apply.1} parent=0 // pred_region
    _
  $region21: #{backbone_apply.1} parent=0 // pred_fallthru
    _
  // Predicated region
  $region22: #{backbone_apply.1} parent=0 // pred_check
    _
  $region23: #{backbone_apply.1} parent=0 // pred_check_branch
    %34 = sbr.rel (0) target = $region25
  $region24: #{backbone_apply.1} parent=0 // pred_region
    _
  $region25: #{backbone_apply.1} parent=0 // pred_fallthru
    _
  // Predicated region
  $region26: #{backbone_apply.1} parent=0 // pred_check
    _
  $region27: #{backbone_apply.1} parent=0 // pred_check_branch
    %36 = sbr.rel (0) target = $region29
  $region28: #{backbone_apply.1} parent=0 // pred_region
    _
  $region29: #{backbone_apply.1} parent=0 // pred_fallthru
    _
  // Predicated region
  $region30: #{backbone_apply.1} parent=0 // pred_check
    _
  $region31: #{backbone_apply.1} parent=0 // pred_check_branch
    %38 = sbr.rel (0) target = $region33
  $region32: #{backbone_apply.1} parent=0 // pred_region
    _
  $region33: #{backbone_apply.1} parent=0 // pred_fallthru
    _
  // Predicated region
  $region34: #{backbone_apply.1} parent=0 // pred_check
    _
  $region35: #{backbone_apply.1} parent=0 // pred_check_branch
    %40 = sbr.rel (0) target = $region37
  $region36: #{backbone_apply.1} parent=0 // pred_region
    _
  $region37: #{backbone_apply.1} parent=0 // pred_fallthru
    _
  // Predicated region
  $region38: #{backbone_apply.1} parent=0 // pred_check
    _
  $region39: #{backbone_apply.1} parent=0 // pred_check_branch
    %42 = sbr.rel (0) target = $region41
  $region40: #{backbone_apply.1} parent=0 // pred_region
    _
  $region41: #{backbone_apply.1} parent=0 // pred_fallthru
    _
  // Predicated region
  $region42: #{backbone_apply.1} parent=0 // pred_check
    _
  $region43: #{backbone_apply.1} parent=0 // pred_check_branch
    %44 = sbr.rel (0) target = $region45
  $region44: #{backbone_apply.1} parent=0 // pred_region
    _
  $region45: #{backbone_apply.1} parent=0 // pred_fallthru
    _
  // Predicated region
  $region46: #{backbone_apply.1} parent=0 // pred_check
    _
  $region47: #{backbone_apply.1} parent=0 // pred_check_branch
    %46 = sbr.rel (0) target = $region49
  $region48: #{backbone_apply.1} parent=0 // pred_region
    _
  $region49: #{backbone_apply.1} parent=0 // pred_fallthru
    _
  // Predicated region
  $region50: #{backbone_apply.1} parent=0 // pred_check
    _
  $region51: #{backbone_apply.1} parent=0 // pred_check_branch
    %48 = sbr.rel (0) target = $region53
  $region52: #{backbone_apply.1} parent=0 // pred_region
    _
  $region53: #{backbone_apply.1} parent=0 // pred_fallthru
    _
  // Predicated region
  $region54: #{backbone_apply.1} parent=0 // pred_check
    _
  $region55: #{backbone_apply.1} parent=0 // pred_check_branch
    %50 = sbr.rel (0) target = $region57
  $region56: #{backbone_apply.1} parent=0 // pred_region
    _
  $region57: #{backbone_apply.1} parent=0 // pred_fallthru
    _
  // Predicated region
  $region58: #{backbone_apply.1} parent=0 // pred_check
    _
  $region59: #{backbone_apply.1} parent=0 // pred_check_branch
    %52 = sbr.rel (0) target = $region61
  $region60: #{backbone_apply.1} parent=0 // pred_region
    _
  $region61: #{backbone_apply.1} parent=0 // pred_fallthru
    _
  // Predicated region
  $region62: #{backbone_apply.1} parent=0 // pred_check
    _
  $region63: #{backbone_apply.1} parent=0 // pred_check_branch
    %54 = sbr.rel (0) target = $region65
  $region64: #{backbone_apply.1} parent=0 // pred_region
    _
  $region65: #{backbone_apply.1} parent=0 // pred_fallthru
    _
  // Predicated region
  $region66: #{backbone_apply.1} parent=0 // pred_check
    _
  $region67: #{backbone_apply.1} parent=0 // pred_check_branch
    %56 = sbr.rel (0) target = $region69
  $region68: #{backbone_apply.1} parent=0 // pred_region
    _
  $region69: #{backbone_apply.1} parent=0 // pred_fallthru
    _
  // Predicated region
  $region70: #{backbone_apply.1} parent=0 // pred_check
    _
  $region71: #{backbone_apply.1} parent=0 // pred_check_branch
    %58 = sbr.rel (0) target = $region73
  $region72: #{backbone_apply.1} parent=0 // pred_region
    _
  $region73: #{backbone_apply.1} parent=0 // pred_fallthru
    _
  %vm59 = vcmask 64512
  %60 = vst.msk [vmem:[#allocation2] sm:$0xff] %vm59, 0.0
  %61 = vst.msk [vmem:[#allocation2 + $0x10] sm:$0xff] %vm59, 0.0
  %62 = vst.msk [vmem:[#allocation2 + $0x20] sm:$0xff] %vm59, 0.0
  %63 = vst.msk [vmem:[#allocation2 + $0x30] sm:$0xff] %vm59, 0.0
  %vm64 = vcmask 60416
  %65 = vst.msk [vmem:[#allocation2 + $0x40] sm:$0xf] %vm64, 0.0
  %vm66 = vcmask 130112
  %67 = vst.msk [vmem:[#allocation2 + $0x8] sm:$0xff] %vm66, 0.0
  %68 = vst.msk [vmem:[#allocation2 + $0x18] sm:$0xff] %vm66, 0.0
  %69 = vst.msk [vmem:[#allocation2 + $0x28] sm:$0xff] %vm66, 0.0
  %70 = vst.msk [vmem:[#allocation2 + $0x38] sm:$0xff] %vm66, 0.0
  %vm71 = vcmask 126016
  %72 = vst.msk [vmem:[#allocation2 + $0x48] sm:$0xf] %vm71, 0.0
  %v73 = vlaneseq
  %vm74 = vcmp.ge.s32.totalorder %v73, 0
  %vm75 = vcmp.lt.s32.totalorder %v73, 144
  %vm76 = vmand %vm74, %vm75
  %77 = vst.msk [vmem:[#allocation2] ss:$8 sm:$0x3] %vm76, 0.0
  %78 = vst.msk [vmem:[#allocation2] ss:$8 sm:$0x0] %vm76, 0.0
  %s79 = scalar_lea.vmem [#allocation2], 33
  %80 = vst.msk [vmem:[%s79] ss:$8 sm:$0x3] %vm76, 0.0
  %81 = vst.msk [vmem:[%s79] ss:$8 sm:$0x0] %vm76, 0.0
  %s82 = scalar_lea.vmem [#allocation2], 34
  %83 = vst.msk [vmem:[%s82] ss:$8 sm:$0x3] %vm76, 0.0
  %84 = vst.msk [vmem:[%s82] ss:$8 sm:$0x0] %vm76, 0.0
  %s85 = scalar_lea.vmem [#allocation2], 67
  %86 = vst.msk [vmem:[%s85] ss:$8 sm:$0x3] %vm76, 0.0
  %87 = vst.msk [vmem:[%s85] ss:$8 sm:$0x0] %vm76, 0.0
  %88 = vst.msk [vmem:[#allocation3] sm:$0xff] %vm59, 0.0
  %89 = vst.msk [vmem:[#allocation3 + $0x8] sm:$0xff] %vm59, 0.0
  %90 = vst.msk [vmem:[#allocation3 + $0x10] sm:$0xf] %vm64, 0.0
  %vm91 = vcmask 654912
  %92 = vst.msk [vmem:[#allocation3] sm:$0xff] %vm91, 0.0
  %93 = vst.msk [vmem:[#allocation3 + $0x8] sm:$0xff] %vm91, 0.0
  %vm94 = vcmask 650816
  %95 = vst.msk [vmem:[#allocation3 + $0x10] sm:$0xf] %vm94, 0.0
  %vm96 = vcmask 647168
  %97 = vst.msk [vmem:[#allocation3] sm:$0x1] %vm96, 0.0
  %98 = vst.msk [vmem:[#allocation3 + $0x9] sm:$0x1] %vm96, 0.0
  %99 = vst.msk [vmem:[#allocation3 + $0xa] sm:$0x1] %vm96, 0.0
  %100 = vst.msk [vmem:[#allocation3 + $0x13] sm:$0x1] %vm96, 0.0
  %101 = vst.msk [vmem:[#allocation4] sm:$0xff] %vm59, 0.0
  %102 = vst.msk [vmem:[#allocation4 + $0x8] sm:$0xf] %vm64, 0.0
  %vm103 = vcmask 392512
  %104 = vst.msk [vmem:[#allocation4] sm:$0xff] %vm103, 0.0
  %vm105 = vcmask 388416
  %106 = vst.msk [vmem:[#allocation4 + $0x8] sm:$0xf] %vm105, 0.0
  %vm107 = vcmask 385024
  %108 = vst.msk [vmem:[#allocation4] sm:$0x1] %vm107, 0.0
  %109 = vst.msk [vmem:[#allocation4 + $0x5] sm:$0x1] %vm107, 0.0
  %110 = vst.msk [vmem:[#allocation4 + $0x6] sm:$0x1] %vm107, 0.0
  %111 = vst.msk [vmem:[#allocation4 + $0xb] sm:$0x1] %vm107, 0.0
  %vm112 = vcmask 195584
  %113 = vst.msk [vmem:[#allocation5] sm:$0xff] %vm112, 0.0
  %114 = vst.msk [vmem:[#allocation5 + $0x8] sm:$0xff] %vm112, 0.0
  %vm115 = vcmask 191488
  %116 = vst.msk [vmem:[#allocation5 + $0x10] sm:$0xf] %vm115, 0.0
  %vm117 = vcmask 654784
  %118 = vst.msk [vmem:[#allocation5] sm:$0xff] %vm117, 0.0
  %119 = vst.msk [vmem:[#allocation5 + $0x8] sm:$0xff] %vm117, 0.0
  %vm120 = vcmask 650688
  %121 = vst.msk [vmem:[#allocation5 + $0x10] sm:$0xf] %vm120, 0.0
  %vm122 = vcmask 649216
  %123 = vst.msk [vmem:[#allocation5] sm:$0x7] %vm122, 0.0
  %124 = vst.msk [vmem:[#allocation5 + $0x7] sm:$0x7] %vm122, 0.0
  %125 = vst.msk [vmem:[#allocation5 + $0xa] sm:$0x7] %vm122, 0.0
  %126 = vst.msk [vmem:[#allocation5 + $0x11] sm:$0x7] %vm122, 0.0
  %v127 = vld [vmem:[%s0] sm:$0xff]
  %v128 = vld [vmem:[%s0 + $0x8] sm:$0xff]
  %v129 = vld [vmem:[%s0 + $0x10] sm:$0xff]
  %v130 = vld [vmem:[%s0 + $0x18] sm:$0xff]
  %v131 = vld [vmem:[%s1] sm:$0xff]
  %v132 = vld [vmem:[%s1 + $0x8] sm:$0xff]
  %v133 = vld [vmem:[%s1 + $0x10] sm:$0xff]
  %v134 = vld [vmem:[%s1 + $0x18] sm:$0xff]
  %v135 = vld [vmem:[%s1 + $0x20] sm:$0xff]
  %v136 = vld [vmem:[%s1 + $0x28] sm:$0xff]
  %v137 = vld [vmem:[%s1 + $0x30] sm:$0xff]
  %v138 = vld [vmem:[%s1 + $0x38] sm:$0xff]
  %v139 = vld [vmem:[%s1 + $0x40] sm:$0xff]
  %v140 = vld [vmem:[%s1 + $0x48] sm:$0xff]
  %v141 = vld [vmem:[%s1 + $0x50] sm:$0xff]
  %v142 = vld [vmem:[%s1 + $0x58] sm:$0xff]
  %v143 = vld [vmem:[%s1 + $0x60] sm:$0x3f]
  %s144 = scalar_lea.vmem %s0, 32
  %v145 = vld [vmem:[%s144] sm:$0xff]
  %v146 = vld [vmem:[%s144 + $0x8] sm:$0xff]
  %v147 = vld [vmem:[%s144 + $0x10] sm:$0xff]
  %v148 = vld [vmem:[%s144 + $0x18] sm:$0xff]
  %s149 = scalar_lea.vmem %s1, 104
  %v150 = vld [vmem:[%s149] sm:$0xff]
  %v151 = vld [vmem:[%s149 + $0x8] sm:$0xff]
  %v152 = vld [vmem:[%s149 + $0x10] sm:$0xff]
  %v153 = vld [vmem:[%s149 + $0x18] sm:$0xff]
  %v154 = vld [vmem:[%s149 + $0x20] sm:$0xff]
  %v155 = vld [vmem:[%s149 + $0x28] sm:$0xff]
  %v156 = vld [vmem:[%s149 + $0x30] sm:$0xff]
  %v157 = vld [vmem:[%s149 + $0x38] sm:$0xff]
  %v158 = vld [vmem:[%s149 + $0x40] sm:$0xff]
  %v159 = vld [vmem:[%s149 + $0x48] sm:$0xff]
  %v160 = vld [vmem:[%s149 + $0x50] sm:$0xff]
  %v161 = vld [vmem:[%s149 + $0x58] sm:$0xff]
  %v162 = vld [vmem:[%s149 + $0x60] sm:$0x3f]
  %vm163 = vcmask 834560
  %v165 = vsel %vm163, %v145, 0
  %v168 = vsel %vm163, %v146, 0
  %v171 = vsel %vm163, %v147, 0
  %v174 = vsel %vm163, %v148, 0
  %vm176 = vcmask 1045504
  %v178 = vsel %vm176, %v162, 0
  %180 = vmatprep.subr.mxu0 0.0
  %181 = vmatpush1.msra.mxu0 %v150
  %182 = vmatprep.subr.mxu0 0.0
  %183 = vmatpush1.msra.mxu0 %v151
  %184 = vmatprep.subr.mxu0 0.0
  %185 = vmatpush1.msra.mxu0 %v152
  %186 = vmatprep.subr.mxu0 0.0
  %187 = vmatpush1.msra.mxu0 %v153
  %188 = vmatprep.subr.mxu0 0.0
  %189 = vmatpush1.msra.mxu0 %v154
  %190 = vmatprep.subr.mxu0 0.0
  %191 = vmatpush1.msra.mxu0 %v155
  %192 = vmatprep.subr.mxu0 0.0
  %193 = vmatpush1.msra.mxu0 %v156
  %194 = vmatprep.subr.mxu0 0.0
  %195 = vmatpush1.msra.mxu0 %v157
  %196 = vmatprep.subr.mxu0 0.0
  %197 = vmatpush1.msra.mxu0 %v158
  %198 = vmatprep.subr.mxu0 0.0
  %199 = vmatpush1.msra.mxu0 %v159
  %200 = vmatprep.subr.mxu0 0.0
  %201 = vmatpush1.msra.mxu0 %v160
  %202 = vmatprep.subr.mxu0 0.0
  %203 = vmatpush1.msra.mxu0 %v161
  %204 = vmatprep.subr.mxu0 0.0
  %205 = vmatpush1.msra.mxu0 %v178
  %206 = vmatprep.subr.mxu0 0.0
  %207 = vmatpush1.msra.mxu0 0.0
  %208 = vmatprep.subr.mxu0 0.0
  %209 = vmatpush1.msra.mxu0 0.0
  %210 = vmatprep.subr.mxu0 0.0
  %211 = vmatpush1.msra.mxu0 0.0
  %212 = vmatprep.subr.mxu0 0.0
  %213 = vmatpush1.msra.mxu0 0.0
  %214 = vmatprep.subr.mxu0 0.0
  %215 = vmatpush1.msra.mxu0 0.0
  %216 = vmatprep.subr.mxu0 0.0
  %217 = vmatpush1.msra.mxu0 0.0
  %218 = vmatprep.subr.mxu0 0.0
  %219 = vmatpush1.msra.mxu0 0.0
  %220 = vmatprep.subr.mxu0 0.0
  %221 = vmatpush1.msra.mxu0 0.0
  %222 = vmatprep.subr.mxu0 0.0
  %223 = vmatpush1.msra.mxu0 0.0
  %224 = vmatprep.subr.mxu0 0.0
  %225 = vmatpush1.msra.mxu0 0.0
  %226 = vmatprep.subr.mxu0 0.0
  %227 = vmatpush1.msra.mxu0 0.0
  %228 = vmatprep.subr.mxu0 0.0
  %229 = vmatpush1.msra.mxu0 0.0
  %230 = vmatprep.subr.mxu0 0.0
  %231 = vmatpush1.msra.mxu0 0.0
  %232 = vmatprep.subr.mxu0 0.0
  %233 = vmatpush1.msra.mxu0 0.0
  %234 = vmatprep.subr.mxu0 0.0
  %235 = vmatpush1.msra.mxu0 0.0
  %236 = vmatprep.subr.mxu0 0.0
  %237 = vmatpush1.msra.mxu0 0.0
  %238 = vmatprep.subr.mxu0 0.0
  %239 = vmatpush1.msra.mxu0 0.0
  %240 = vmatprep.subr.mxu0 0.0
  %241 = vmatpush1.msra.mxu0 0.0
  %242 = vmatprep.subr.mxu0 0.0
  %243 = vmatpush1.msra.mxu0 0.0
  %244 = vmatprep.mubr.f32.mxu0 0.0
  %245 = vmatmul.mubr.f32.gmra.mrb[0].mxu0 %v165
  %v246 = vpop.f32.mrb[0].mxu0
  %v247 = vadd.f32 0.0, %v246
  %v248 = vpop.f32.mrb[0].mxu0
  %249 = vmatprep.mubr.f32.mxu0 0.0
  %250 = vmatmul.mubr.f32.gmra.mrb[0].mxu0 %v168
  %v251 = vpop.f32.mrb[0].mxu0
  %v252 = vadd.f32 0.0, %v251
  %v253 = vpop.f32.mrb[0].mxu0
  %254 = vmatprep.mubr.f32.mxu0 0.0
  %255 = vmatmul.mubr.f32.gmra.mrb[0].mxu0 %v171
  %v256 = vpop.f32.mrb[0].mxu0
  %v257 = vadd.f32 0.0, %v256
  %v258 = vpop.f32.mrb[0].mxu0
  %259 = vmatprep.mubr.f32.mxu0 0.0
  %260 = vmatmul.mubr.f32.gmra.mrb[0].mxu0 %v174
  %v261 = vpop.f32.mrb[0].mxu0
  %v262 = vadd.f32 0.0, %v261
  %v263 = vpop.f32.mrb[0].mxu0
  %264 = vdwg.mxu0
  %v266 = vsel %vm163, %v127, 0
  %v269 = vsel %vm163, %v128, 0
  %v272 = vsel %vm163, %v129, 0
  %v275 = vsel %vm163, %v130, 0
  %v278 = vsel %vm176, %v143, 0
  %280 = vmatprep.subr.mxu0 0.0
  %281 = vmatpush1.msra.mxu0 %v131
  %282 = vmatprep.subr.mxu0 0.0
  %283 = vmatpush1.msra.mxu0 %v132
  %284 = vmatprep.subr.mxu0 0.0
  %285 = vmatpush1.msra.mxu0 %v133
  %286 = vmatprep.subr.mxu0 0.0
  %287 = vmatpush1.msra.mxu0 %v134
  %288 = vmatprep.subr.mxu0 0.0
  %289 = vmatpush1.msra.mxu0 %v135
  %290 = vmatprep.subr.mxu0 0.0
  %291 = vmatpush1.msra.mxu0 %v136
  %292 = vmatprep.subr.mxu0 0.0
  %293 = vmatpush1.msra.mxu0 %v137
  %294 = vmatprep.subr.mxu0 0.0
  %295 = vmatpush1.msra.mxu0 %v138
  %296 = vmatprep.subr.mxu0 0.0
  %297 = vmatpush1.msra.mxu0 %v139
  %298 = vmatprep.subr.mxu0 0.0
  %299 = vmatpush1.msra.mxu0 %v140
  %300 = vmatprep.subr.mxu0 0.0
  %301 = vmatpush1.msra.mxu0 %v141
  %302 = vmatprep.subr.mxu0 0.0
  %303 = vmatpush1.msra.mxu0 %v142
  %304 = vmatprep.subr.mxu0 0.0
  %305 = vmatpush1.msra.mxu0 %v278
  %306 = vmatprep.subr.mxu0 0.0
  %307 = vmatpush1.msra.mxu0 0.0
  %308 = vmatprep.subr.mxu0 0.0
  %309 = vmatpush1.msra.mxu0 0.0
  %310 = vmatprep.subr.mxu0 0.0
  %311 = vmatpush1.msra.mxu0 0.0
  %312 = vmatprep.subr.mxu0 0.0
  %313 = vmatpush1.msra.mxu0 0.0
  %314 = vmatprep.subr.mxu0 0.0
  %315 = vmatpush1.msra.mxu0 0.0
  %316 = vmatprep.subr.mxu0 0.0
  %317 = vmatpush1.msra.mxu0 0.0
  %318 = vmatprep.subr.mxu0 0.0
  %319 = vmatpush1.msra.mxu0 0.0
  %320 = vmatprep.subr.mxu0 0.0
  %321 = vmatpush1.msra.mxu0 0.0
  %322 = vmatprep.subr.mxu0 0.0
  %323 = vmatpush1.msra.mxu0 0.0
  %324 = vmatprep.subr.mxu0 0.0
  %325 = vmatpush1.msra.mxu0 0.0
  %326 = vmatprep.subr.mxu0 0.0
  %327 = vmatpush1.msra.mxu0 0.0
  %328 = vmatprep.subr.mxu0 0.0
  %329 = vmatpush1.msra.mxu0 0.0
  %330 = vmatprep.subr.mxu0 0.0
  %331 = vmatpush1.msra.mxu0 0.0
  %332 = vmatprep.subr.mxu0 0.0
  %333 = vmatpush1.msra.mxu0 0.0
  %334 = vmatprep.subr.mxu0 0.0
  %335 = vmatpush1.msra.mxu0 0.0
  %336 = vmatprep.subr.mxu0 0.0
  %337 = vmatpush1.msra.mxu0 0.0
  %338 = vmatprep.subr.mxu0 0.0
  %339 = vmatpush1.msra.mxu0 0.0
  %340 = vmatprep.subr.mxu0 0.0
  %341 = vmatpush1.msra.mxu0 0.0
  %342 = vmatprep.subr.mxu0 0.0
  %343 = vmatpush1.msra.mxu0 0.0
  %344 = vmatprep.mubr.f32.mxu0 0.0
  %345 = vmatmul.mubr.f32.gmra.mrb[0].mxu0 %v266
  %v346 = vpop.f32.mrb[0].mxu0
  %v347 = vadd.f32 %v247, %v346
  %v348 = vpop.f32.mrb[0].mxu0
  %349 = vmatprep.mubr.f32.mxu0 0.0
  %350 = vmatmul.mubr.f32.gmra.mrb[0].mxu0 %v269
  %v351 = vpop.f32.mrb[0].mxu0
  %v352 = vadd.f32 %v252, %v351
  %v353 = vpop.f32.mrb[0].mxu0
  %354 = vmatprep.mubr.f32.mxu0 0.0
  %355 = vmatmul.mubr.f32.gmra.mrb[0].mxu0 %v272
  %v356 = vpop.f32.mrb[0].mxu0
  %v357 = vadd.f32 %v257, %v356
  %v358 = vpop.f32.mrb[0].mxu0
  %359 = vmatprep.mubr.f32.mxu0 0.0
  %360 = vmatmul.mubr.f32.gmra.mrb[0].mxu0 %v275
  %v361 = vpop.f32.mrb[0].mxu0
  %v362 = vadd.f32 %v262, %v361
  %v363 = vpop.f32.mrb[0].mxu0
  %364 = vdwg.mxu0
  %s365 = scalar_lea.vmem %s0, 64
  %v366 = vld [vmem:[%s365] sm:$0xff]
  %v367 = vld [vmem:[%s365 + $0x8] sm:$0xff]
  %v368 = vld [vmem:[%s365 + $0x10] sm:$0xff]
  %v369 = vld [vmem:[%s365 + $0x18] sm:$0xff]
  %s370 = scalar_lea.vmem %s1, 208
  %v371 = vld [vmem:[%s370] sm:$0xff]
  %v372 = vld [vmem:[%s370 + $0x8] sm:$0xff]
  %v373 = vld [vmem:[%s370 + $0x10] sm:$0xff]
  %v374 = vld [vmem:[%s370 + $0x18] sm:$0xff]
  %v375 = vld [vmem:[%s370 + $0x20] sm:$0xff]
  %v376 = vld [vmem:[%s370 + $0x28] sm:$0xff]
  %v377 = vld [vmem:[%s370 + $0x30] sm:$0xff]
  %v378 = vld [vmem:[%s370 + $0x38] sm:$0xff]
  %v379 = vld [vmem:[%s370 + $0x40] sm:$0xff]
  %v380 = vld [vmem:[%s370 + $0x48] sm:$0xff]
  %v381 = vld [vmem:[%s370 + $0x50] sm:$0xff]
  %v382 = vld [vmem:[%s370 + $0x58] sm:$0xff]
  %v383 = vld [vmem:[%s370 + $0x60] sm:$0x3f]
  %v385 = vsel %vm163, %v366, 0
  %v388 = vsel %vm163, %v367, 0
  %v391 = vsel %vm163, %v368, 0
  %v394 = vsel %vm163, %v369, 0
  %v397 = vsel %vm176, %v383, 0
  %399 = vmatprep.subr.mxu0 0.0
  %400 = vmatpush1.msra.mxu0 %v371
  %401 = vmatprep.subr.mxu0 0.0
  %402 = vmatpush1.msra.mxu0 %v372
  %403 = vmatprep.subr.mxu0 0.0
  %404 = vmatpush1.msra.mxu0 %v373
  %405 = vmatprep.subr.mxu0 0.0
  %406 = vmatpush1.msra.mxu0 %v374
  %407 = vmatprep.subr.mxu0 0.0
  %408 = vmatpush1.msra.mxu0 %v375
  %409 = vmatprep.subr.mxu0 0.0
  %410 = vmatpush1.msra.mxu0 %v376
  %411 = vmatprep.subr.mxu0 0.0
  %412 = vmatpush1.msra.mxu0 %v377
  %413 = vmatprep.subr.mxu0 0.0
  %414 = vmatpush1.msra.mxu0 %v378
  %415 = vmatprep.subr.mxu0 0.0
  %416 = vmatpush1.msra.mxu0 %v379
  %417 = vmatprep.subr.mxu0 0.0
  %418 = vmatpush1.msra.mxu0 %v380
  %419 = vmatprep.subr.mxu0 0.0
  %420 = vmatpush1.msra.mxu0 %v381
  %421 = vmatprep.subr.mxu0 0.0
  %422 = vmatpush1.msra.mxu0 %v382
  %423 = vmatprep.subr.mxu0 0.0
  %424 = vmatpush1.msra.mxu0 %v397
  %425 = vmatprep.subr.mxu0 0.0
  %426 = vmatpush1.msra.mxu0 0.0
  %427 = vmatprep.subr.mxu0 0.0
  %428 = vmatpush1.msra.mxu0 0.0
  %429 = vmatprep.subr.mxu0 0.0
  %430 = vmatpush1.msra.mxu0 0.0
  %431 = vmatprep.subr.mxu0 0.0
  %432 = vmatpush1.msra.mxu0 0.0
  %433 = vmatprep.subr.mxu0 0.0
  %434 = vmatpush1.msra.mxu0 0.0
  %435 = vmatprep.subr.mxu0 0.0
  %436 = vmatpush1.msra.mxu0 0.0
  %437 = vmatprep.subr.mxu0 0.0
  %438 = vmatpush1.msra.mxu0 0.0
  %439 = vmatprep.subr.mxu0 0.0
  %440 = vmatpush1.msra.mxu0 0.0
  %441 = vmatprep.subr.mxu0 0.0
  %442 = vmatpush1.msra.mxu0 0.0
  %443 = vmatprep.subr.mxu0 0.0
  %444 = vmatpush1.msra.mxu0 0.0
  %445 = vmatprep.subr.mxu0 0.0
  %446 = vmatpush1.msra.mxu0 0.0
  %447 = vmatprep.subr.mxu0 0.0
  %448 = vmatpush1.msra.mxu0 0.0
  %449 = vmatprep.subr.mxu0 0.0
  %450 = vmatpush1.msra.mxu0 0.0
  %451 = vmatprep.subr.mxu0 0.0
  %452 = vmatpush1.msra.mxu0 0.0
  %453 = vmatprep.subr.mxu0 0.0
  %454 = vmatpush1.msra.mxu0 0.0
  %455 = vmatprep.subr.mxu0 0.0
  %456 = vmatpush1.msra.mxu0 0.0
  %457 = vmatprep.subr.mxu0 0.0
  %458 = vmatpush1.msra.mxu0 0.0
  %459 = vmatprep.subr.mxu0 0.0
  %460 = vmatpush1.msra.mxu0 0.0
  %461 = vmatprep.subr.mxu0 0.0
  %462 = vmatpush1.msra.mxu0 0.0
  %463 = vmatprep.mubr.f32.mxu0 0.0
  %464 = vmatmul.mubr.f32.gmra.mrb[0].mxu0 %v385
  %v465 = vpop.f32.mrb[0].mxu0
  %v466 = vadd.f32 0.0, %v465
  %v467 = vpop.f32.mrb[0].mxu0
  %468 = vmatprep.mubr.f32.mxu0 0.0
  %469 = vmatmul.mubr.f32.gmra.mrb[0].mxu0 %v388
  %v470 = vpop.f32.mrb[0].mxu0
  %v471 = vadd.f32 0.0, %v470
  %v472 = vpop.f32.mrb[0].mxu0
  %473 = vmatprep.mubr.f32.mxu0 0.0
  %474 = vmatmul.mubr.f32.gmra.mrb[0].mxu0 %v391
  %v475 = vpop.f32.mrb[0].mxu0
  %v476 = vadd.f32 0.0, %v475
  %v477 = vpop.f32.mrb[0].mxu0
  %478 = vmatprep.mubr.f32.mxu0 0.0
  %479 = vmatmul.mubr.f32.gmra.mrb[0].mxu0 %v394
  %v480 = vpop.f32.mrb[0].mxu0
  %v481 = vadd.f32 0.0, %v480
  %v482 = vpop.f32.mrb[0].mxu0
  %483 = vdwg.mxu0
  %v484 = vadd.f32 %v347, %v466
  %v485 = vadd.f32 %v352, %v471
  %v486 = vadd.f32 %v357, %v476
  %v487 = vadd.f32 %v362, %v481
  %vm490 = vcmask 1040384
  %v491 = vrot.slane %v484, 7
  %v492 = vrot.slane %v485, 7
  %v493 = vsel %vm490, %v491, %v492
  %494 = vrot.lane.b32.xlu0 %v491, 8
  %v495 = vpop.permute.xlu0 %494
  %496 = vrot.lane.b32.xlu0 %v493, 8
  %v497 = vpop.permute.xlu0 %496
  %498 = vrot.lane.b32.xlu0 %v492, 8
  %v499 = vpop.permute.xlu0 %498
  %vm503 = vcmask 1047617
  %504 = vst.msk [vmem:[#allocation2] sm:$0xfe] %vm503, %v495
  %vm505 = vcmask 64513
  %506 = vst.msk [vmem:[#allocation2 + $0x8] sm:$0xfe] %vm505, %v495
  %vm507 = vcmask 1047616
  %508 = vst.msk [vmem:[#allocation2 + $0x10] sm:$0xff] %vm507, %v497
  %509 = vst.msk [vmem:[#allocation2 + $0x18] sm:$0xff] %vm59, %v497
  %vm510 = vcmask 1040448
  %511 = vst.msk [vmem:[#allocation2 + $0x20] sm:$0x1] %vm510, %v499
  %vm512 = vcmask 57344
  %513 = vst.msk [vmem:[#allocation2 + $0x28] sm:$0x1] %vm512, %v499
  %vm516 = vcmask 1042432
  %v517 = vrot.slane %v486, 5
  %v518 = vrot.slane %v487, 5
  %v519 = vsel %vm516, %v517, %v518
  %520 = vrot.lane.b32.xlu0 %v517, 8
  %v521 = vpop.permute.xlu0 %520
  %522 = vrot.lane.b32.xlu0 %v519, 8
  %v523 = vpop.permute.xlu0 %522
  %524 = vrot.lane.b32.xlu0 %v518, 8
  %v525 = vpop.permute.xlu0 %524
  %vm529 = vcmask 1047619
  %530 = vst.msk [vmem:[#allocation2 + $0x20] sm:$0xf8] %vm529, %v521
  %vm531 = vcmask 64515
  %532 = vst.msk [vmem:[#allocation2 + $0x28] sm:$0xf8] %vm531, %v521
  %533 = vst.msk [vmem:[#allocation2 + $0x30] sm:$0xff] %vm507, %v523
  %534 = vst.msk [vmem:[#allocation2 + $0x38] sm:$0xff] %vm59, %v523
  %vm535 = vcmask 1042496
  %536 = vst.msk [vmem:[#allocation2 + $0x40] sm:$0x7] %vm535, %v525
  %vm537 = vcmask 59392
  %538 = vst.msk [vmem:[#allocation2 + $0x48] sm:$0x7] %vm537, %v525
  %v539 = vld [vmem:[#allocation2] sm:$0xff]
  %v540 = vld [vmem:[#allocation2 + $0x8] sm:$0xff]
  %v541 = vld [vmem:[#allocation2 + $0x10] sm:$0xff]
  %v542 = vld [vmem:[#allocation2 + $0x18] sm:$0xff]
  %v543 = vld [vmem:[#allocation2 + $0x20] sm:$0xff]
  %v544 = vld [vmem:[#allocation2 + $0x28] sm:$0xff]
  %v545 = vld [vmem:[#allocation2 + $0x30] sm:$0xff]
  %v546 = vld [vmem:[#allocation2 + $0x38] sm:$0xff]
  %v547 = vld [vmem:[#allocation2 + $0x40] sm:$0x3]
  %v548 = vld [vmem:[#allocation2 + $0x48] sm:$0x3]
  %v549 = vld [vmem:[%s2] sm:$0xff]
  %v550 = vld [vmem:[%s2 + $0x8] sm:$0xff]
  %v551 = vld [vmem:[%s2 + $0x10] sm:$0xff]
  %v552 = vld [vmem:[%s2 + $0x18] sm:$0xff]
  %v553 = vld [vmem:[%s2 + $0x20] sm:$0xff]
  %v554 = vld [vmem:[%s2 + $0x28] sm:$0xff]
  %v555 = vld [vmem:[%s2 + $0x30] sm:$0xff]
  %v556 = vld [vmem:[%s2 + $0x38] sm:$0xff]
  %v557 = vld [vmem:[%s2 + $0x40] sm:$0xff]
  %v558 = vld [vmem:[%s2 + $0x48] sm:$0xff]
  %v559 = vld [vmem:[%s2 + $0x50] sm:$0xff]
  %v560 = vld [vmem:[%s2 + $0x58] sm:$0xff]
  %v561 = vld [vmem:[%s2 + $0x60] sm:$0xff]
  %v562 = vld [vmem:[%s2 + $0x68] sm:$0xff]
  %v563 = vld [vmem:[%s2 + $0x70] sm:$0xff]
  %v564 = vld [vmem:[%s2 + $0x78] sm:$0xff]
  %v565 = vld [vmem:[%s2 + $0x80] sm:$0xff]
  %v566 = vld [vmem:[%s2 + $0x88] sm:$0xff]
  %v567 = vld [vmem:[#allocation2] sm:$0xfe]
  %v568 = vld [vmem:[#allocation2 + $0x8] sm:$0xfe]
  %v569 = vld [vmem:[#allocation2 + $0x40] sm:$0x7]
  %v570 = vld [vmem:[#allocation2 + $0x48] sm:$0x7]
  %s571 = scalar_lea.vmem %s2, 144
  %v572 = vld [vmem:[%s571] sm:$0xff]
  %v573 = vld [vmem:[%s571 + $0x8] sm:$0xff]
  %v574 = vld [vmem:[%s571 + $0x10] sm:$0xff]
  %v575 = vld [vmem:[%s571 + $0x18] sm:$0xff]
  %v576 = vld [vmem:[%s571 + $0x20] sm:$0xff]
  %v577 = vld [vmem:[%s571 + $0x28] sm:$0xff]
  %v578 = vld [vmem:[%s571 + $0x30] sm:$0xff]
  %v579 = vld [vmem:[%s571 + $0x38] sm:$0xff]
  %v580 = vld [vmem:[%s571 + $0x40] sm:$0xff]
  %v581 = vld [vmem:[%s571 + $0x48] sm:$0xff]
  %v582 = vld [vmem:[%s571 + $0x50] sm:$0xff]
  %v583 = vld [vmem:[%s571 + $0x58] sm:$0xff]
  %v584 = vld [vmem:[%s571 + $0x60] sm:$0xff]
  %v585 = vld [vmem:[%s571 + $0x68] sm:$0xff]
  %v586 = vld [vmem:[%s571 + $0x70] sm:$0xff]
  %v587 = vld [vmem:[%s571 + $0x78] sm:$0xff]
  %v588 = vld [vmem:[%s571 + $0x80] sm:$0xff]
  %v589 = vld [vmem:[%s571 + $0x88] sm:$0xff]
  %vm600 = vcmask 1046528
  %v601 = vrot.slane %v567, 1
  %v602 = vrot.slane %v541, 1
  %v603 = vsel %vm600, %v601, %v602
  %v604 = vrot.slane %v568, 1
  %v605 = vrot.slane %v542, 1
  %v606 = vsel %vm600, %v604, %v605
  %v607 = vrot.slane %v543, 1
  %v608 = vsel %vm600, %v602, %v607
  %v609 = vrot.slane %v544, 1
  %v610 = vsel %vm600, %v605, %v609
  %v611 = vrot.slane %v545, 1
  %v612 = vsel %vm600, %v607, %v611
  %v613 = vrot.slane %v546, 1
  %v614 = vsel %vm600, %v609, %v613
  %v615 = vrot.slane %v569, 1
  %v616 = vsel %vm600, %v611, %v615
  %v617 = vrot.slane %v570, 1
  %v618 = vsel %vm600, %v613, %v617
  %vm624 = vcmask 130048
  %v625 = vsel %vm624, %v606, 0
  %v627 = vsel %vm624, %v610, 0
  %v629 = vsel %vm624, %v614, 0
  %v631 = vsel %vm624, %v618, 0
  %v633 = vsel %vm624, %v617, 0
  %635 = vmatprep.subr.mxu0 0.0
  %636 = vmatpush1.msra.mxu0 %v572
  %637 = vmatprep.subr.mxu0 0.0
  %638 = vmatpush1.msra.mxu0 %v573
  %639 = vmatprep.subr.mxu0 0.0
  %640 = vmatpush1.msra.mxu0 %v574
  %641 = vmatprep.subr.mxu0 0.0
  %642 = vmatpush1.msra.mxu0 %v575
  %643 = vmatprep.subr.mxu0 0.0
  %644 = vmatpush1.msra.mxu0 %v576
  %645 = vmatprep.subr.mxu0 0.0
  %646 = vmatpush1.msra.mxu0 %v577
  %647 = vmatprep.subr.mxu0 0.0
  %648 = vmatpush1.msra.mxu0 %v578
  %649 = vmatprep.subr.mxu0 0.0
  %650 = vmatpush1.msra.mxu0 %v579
  %651 = vmatprep.subr.mxu0 0.0
  %652 = vmatpush1.msra.mxu0 %v580
  %653 = vmatprep.subr.mxu0 0.0
  %654 = vmatpush1.msra.mxu0 %v581
  %655 = vmatprep.subr.mxu0 0.0
  %656 = vmatpush1.msra.mxu0 %v582
  %657 = vmatprep.subr.mxu0 0.0
  %658 = vmatpush1.msra.mxu0 %v583
  %659 = vmatprep.subr.mxu0 0.0
  %660 = vmatpush1.msra.mxu0 %v584
  %661 = vmatprep.subr.mxu0 0.0
  %662 = vmatpush1.msra.mxu0 %v585
  %663 = vmatprep.subr.mxu0 0.0
  %664 = vmatpush1.msra.mxu0 %v586
  %665 = vmatprep.subr.mxu0 0.0
  %666 = vmatpush1.msra.mxu0 %v587
  %667 = vmatprep.subr.mxu0 0.0
  %668 = vmatpush1.msra.mxu0 %v588
  %669 = vmatprep.subr.mxu0 0.0
  %670 = vmatpush1.msra.mxu0 %v589
  %671 = vmatprep.subr.mxu0 0.0
  %672 = vmatpush1.msra.mxu0 0.0
  %673 = vmatprep.subr.mxu0 0.0
  %674 = vmatpush1.msra.mxu0 0.0
  %675 = vmatprep.subr.mxu0 0.0
  %676 = vmatpush1.msra.mxu0 0.0
  %677 = vmatprep.subr.mxu0 0.0
  %678 = vmatpush1.msra.mxu0 0.0
  %679 = vmatprep.subr.mxu0 0.0
  %680 = vmatpush1.msra.mxu0 0.0
  %681 = vmatprep.subr.mxu0 0.0
  %682 = vmatpush1.msra.mxu0 0.0
  %683 = vmatprep.subr.mxu0 0.0
  %684 = vmatpush1.msra.mxu0 0.0
  %685 = vmatprep.subr.mxu0 0.0
  %686 = vmatpush1.msra.mxu0 0.0
  %687 = vmatprep.subr.mxu0 0.0
  %688 = vmatpush1.msra.mxu0 0.0
  %689 = vmatprep.subr.mxu0 0.0
  %690 = vmatpush1.msra.mxu0 0.0
  %691 = vmatprep.subr.mxu0 0.0
  %692 = vmatpush1.msra.mxu0 0.0
  %693 = vmatprep.subr.mxu0 0.0
  %694 = vmatpush1.msra.mxu0 0.0
  %695 = vmatprep.subr.mxu0 0.0
  %696 = vmatpush1.msra.mxu0 0.0
  %697 = vmatprep.subr.mxu0 0.0
  %698 = vmatpush1.msra.mxu0 0.0
  %699 = vmatprep.mubr.f32.mxu0 %v625
  %700 = vmatmul.mubr.f32.gmra.mrb[0].mxu0 %v603
  %v701 = vpop.f32.mrb[0].mxu0
  %v702 = vadd.f32 0.0, %v701
  %v703 = vpop.f32.mrb[0].mxu0
  %704 = vmatprep.mubr.f32.mxu0 %v627
  %705 = vmatmul.mubr.f32.gmra.mrb[0].mxu0 %v608
  %v706 = vpop.f32.mrb[0].mxu0
  %v707 = vadd.f32 0.0, %v706
  %v708 = vpop.f32.mrb[0].mxu0
  %709 = vmatprep.mubr.f32.mxu0 %v629
  %710 = vmatmul.mubr.f32.gmra.mrb[0].mxu0 %v612
  %v711 = vpop.f32.mrb[0].mxu0
  %v712 = vadd.f32 0.0, %v711
  %v713 = vpop.f32.mrb[0].mxu0
  %714 = vmatprep.mubr.f32.mxu0 %v631
  %715 = vmatmul.mubr.f32.gmra.mrb[0].mxu0 %v616
  %v716 = vpop.f32.mrb[0].mxu0
  %v717 = vadd.f32 0.0, %v716
  %v718 = vpop.f32.mrb[0].mxu0
  %719 = vmatprep.mubr.f32.mxu0 %v633
  %720 = vmatmul.mubr.f32.gmra.mrb[0].mxu0 %v615
  %v721 = vpop.f32.mrb[0].mxu0
  %v722 = vadd.f32 0.0, %v721
  %v723 = vpop.f32.mrb[0].mxu0
  %724 = vdwg.mxu0
  %v726 = vsel %vm624, %v540, 0
  %v728 = vsel %vm624, %v542, 0
  %v730 = vsel %vm624, %v544, 0
  %v732 = vsel %vm624, %v546, 0
  %v735 = vsel %vm624, %v548, 0
  %737 = vmatprep.subr.mxu0 0.0
  %738 = vmatpush1.msra.mxu0 %v549
  %739 = vmatprep.subr.mxu0 0.0
  %740 = vmatpush1.msra.mxu0 %v550
  %741 = vmatprep.subr.mxu0 0.0
  %742 = vmatpush1.msra.mxu0 %v551
  %743 = vmatprep.subr.mxu0 0.0
  %744 = vmatpush1.msra.mxu0 %v552
  %745 = vmatprep.subr.mxu0 0.0
  %746 = vmatpush1.msra.mxu0 %v553
  %747 = vmatprep.subr.mxu0 0.0
  %748 = vmatpush1.msra.mxu0 %v554
  %749 = vmatprep.subr.mxu0 0.0
  %750 = vmatpush1.msra.mxu0 %v555
  %751 = vmatprep.subr.mxu0 0.0
  %752 = vmatpush1.msra.mxu0 %v556
  %753 = vmatprep.subr.mxu0 0.0
  %754 = vmatpush1.msra.mxu0 %v557
  %755 = vmatprep.subr.mxu0 0.0
  %756 = vmatpush1.msra.mxu0 %v558
  %757 = vmatprep.subr.mxu0 0.0
  %758 = vmatpush1.msra.mxu0 %v559
  %759 = vmatprep.subr.mxu0 0.0
  %760 = vmatpush1.msra.mxu0 %v560
  %761 = vmatprep.subr.mxu0 0.0
  %762 = vmatpush1.msra.mxu0 %v561
  %763 = vmatprep.subr.mxu0 0.0
  %764 = vmatpush1.msra.mxu0 %v562
  %765 = vmatprep.subr.mxu0 0.0
  %766 = vmatpush1.msra.mxu0 %v563
  %767 = vmatprep.subr.mxu0 0.0
  %768 = vmatpush1.msra.mxu0 %v564
  %769 = vmatprep.subr.mxu0 0.0
  %770 = vmatpush1.msra.mxu0 %v565
  %771 = vmatprep.subr.mxu0 0.0
  %772 = vmatpush1.msra.mxu0 %v566
  %773 = vmatprep.subr.mxu0 0.0
  %774 = vmatpush1.msra.mxu0 0.0
  %775 = vmatprep.subr.mxu0 0.0
  %776 = vmatpush1.msra.mxu0 0.0
  %777 = vmatprep.subr.mxu0 0.0
  %778 = vmatpush1.msra.mxu0 0.0
  %779 = vmatprep.subr.mxu0 0.0
  %780 = vmatpush1.msra.mxu0 0.0
  %781 = vmatprep.subr.mxu0 0.0
  %782 = vmatpush1.msra.mxu0 0.0
  %783 = vmatprep.subr.mxu0 0.0
  %784 = vmatpush1.msra.mxu0 0.0
  %785 = vmatprep.subr.mxu0 0.0
  %786 = vmatpush1.msra.mxu0 0.0
  %787 = vmatprep.subr.mxu0 0.0
  %788 = vmatpush1.msra.mxu0 0.0
  %789 = vmatprep.subr.mxu0 0.0
  %790 = vmatpush1.msra.mxu0 0.0
  %791 = vmatprep.subr.mxu0 0.0
  %792 = vmatpush1.msra.mxu0 0.0
  %793 = vmatprep.subr.mxu0 0.0
  %794 = vmatpush1.msra.mxu0 0.0
  %795 = vmatprep.subr.mxu0 0.0
  %796 = vmatpush1.msra.mxu0 0.0
  %797 = vmatprep.subr.mxu0 0.0
  %798 = vmatpush1.msra.mxu0 0.0
  %799 = vmatprep.subr.mxu0 0.0
  %800 = vmatpush1.msra.mxu0 0.0
  %801 = vmatprep.mubr.f32.mxu0 %v726
  %802 = vmatmul.mubr.f32.gmra.mrb[0].mxu0 %v539
  %v803 = vpop.f32.mrb[0].mxu0
  %v804 = vadd.f32 %v702, %v803
  %v805 = vpop.f32.mrb[0].mxu0
  %806 = vmatprep.mubr.f32.mxu0 %v728
  %807 = vmatmul.mubr.f32.gmra.mrb[0].mxu0 %v541
  %v808 = vpop.f32.mrb[0].mxu0
  %v809 = vadd.f32 %v707, %v808
  %v810 = vpop.f32.mrb[0].mxu0
  %811 = vmatprep.mubr.f32.mxu0 %v730
  %812 = vmatmul.mubr.f32.gmra.mrb[0].mxu0 %v543
  %v813 = vpop.f32.mrb[0].mxu0
  %v814 = vadd.f32 %v712, %v813
  %v815 = vpop.f32.mrb[0].mxu0
  %816 = vmatprep.mubr.f32.mxu0 %v732
  %817 = vmatmul.mubr.f32.gmra.mrb[0].mxu0 %v545
  %v818 = vpop.f32.mrb[0].mxu0
  %v819 = vadd.f32 %v717, %v818
  %v820 = vpop.f32.mrb[0].mxu0
  %821 = vmatprep.mubr.f32.mxu0 %v735
  %822 = vmatmul.mubr.f32.gmra.mrb[0].mxu0 %v547
  %v823 = vpop.f32.mrb[0].mxu0
  %v824 = vadd.f32 %v722, %v823
  %v825 = vpop.f32.mrb[0].mxu0
  %826 = vdwg.mxu0
  %v827 = vld [vmem:[#allocation2] sm:$0xfc]
  %v828 = vld [vmem:[#allocation2 + $0x8] sm:$0xfc]
  %v829 = vld [vmem:[#allocation2 + $0x40] sm:$0xf]
  %v830 = vld [vmem:[#allocation2 + $0x48] sm:$0xf]
  %s831 = scalar_lea.vmem %s2, 288
  %v832 = vld [vmem:[%s831] sm:$0xff]
  %v833 = vld [vmem:[%s831 + $0x8] sm:$0xff]
  %v834 = vld [vmem:[%s831 + $0x10] sm:$0xff]
  %v835 = vld [vmem:[%s831 + $0x18] sm:$0xff]
  %v836 = vld [vmem:[%s831 + $0x20] sm:$0xff]
  %v837 = vld [vmem:[%s831 + $0x28] sm:$0xff]
  %v838 = vld [vmem:[%s831 + $0x30] sm:$0xff]
  %v839 = vld [vmem:[%s831 + $0x38] sm:$0xff]
  %v840 = vld [vmem:[%s831 + $0x40] sm:$0xff]
  %v841 = vld [vmem:[%s831 + $0x48] sm:$0xff]
  %v842 = vld [vmem:[%s831 + $0x50] sm:$0xff]
  %v843 = vld [vmem:[%s831 + $0x58] sm:$0xff]
  %v844 = vld [vmem:[%s831 + $0x60] sm:$0xff]
  %v845 = vld [vmem:[%s831 + $0x68] sm:$0xff]
  %v846 = vld [vmem:[%s831 + $0x70] sm:$0xff]
  %v847 = vld [vmem:[%s831 + $0x78] sm:$0xff]
  %v848 = vld [vmem:[%s831 + $0x80] sm:$0xff]
  %v849 = vld [vmem:[%s831 + $0x88] sm:$0xff]
  %v854 = vrot.slane %v827, 2
  %v855 = vrot.slane %v541, 2
  %v856 = vsel %vm176, %v854, %v855
  %v857 = vrot.slane %v828, 2
  %v858 = vrot.slane %v542, 2
  %v859 = vsel %vm176, %v857, %v858
  %v860 = vrot.slane %v543, 2
  %v861 = vsel %vm176, %v855, %v860
  %v862 = vrot.slane %v544, 2
  %v863 = vsel %vm176, %v858, %v862
  %v864 = vrot.slane %v545, 2
  %v865 = vsel %vm176, %v860, %v864
  %v866 = vrot.slane %v546, 2
  %v867 = vsel %vm176, %v862, %v866
  %v868 = vrot.slane %v829, 2
  %v869 = vsel %vm176, %v864, %v868
  %v870 = vrot.slane %v830, 2
  %v871 = vsel %vm176, %v866, %v870
  %v877 = vsel %vm624, %v859, 0
  %v879 = vsel %vm624, %v863, 0
  %v881 = vsel %vm624, %v867, 0
  %v883 = vsel %vm624, %v871, 0
  %v885 = vsel %vm624, %v870, 0
  %887 = vmatprep.subr.mxu0 0.0
  %888 = vmatpush1.msra.mxu0 %v832
  %889 = vmatprep.subr.mxu0 0.0
  %890 = vmatpush1.msra.mxu0 %v833
  %891 = vmatprep.subr.mxu0 0.0
  %892 = vmatpush1.msra.mxu0 %v834
  %893 = vmatprep.subr.mxu0 0.0
  %894 = vmatpush1.msra.mxu0 %v835
  %895 = vmatprep.subr.mxu0 0.0
  %896 = vmatpush1.msra.mxu0 %v836
  %897 = vmatprep.subr.mxu0 0.0
  %898 = vmatpush1.msra.mxu0 %v837
  %899 = vmatprep.subr.mxu0 0.0
  %900 = vmatpush1.msra.mxu0 %v838
  %901 = vmatprep.subr.mxu0 0.0
  %902 = vmatpush1.msra.mxu0 %v839
  %903 = vmatprep.subr.mxu0 0.0
  %904 = vmatpush1.msra.mxu0 %v840
  %905 = vmatprep.subr.mxu0 0.0
  %906 = vmatpush1.msra.mxu0 %v841
  %907 = vmatprep.subr.mxu0 0.0
  %908 = vmatpush1.msra.mxu0 %v842
  %909 = vmatprep.subr.mxu0 0.0
  %910 = vmatpush1.msra.mxu0 %v843
  %911 = vmatprep.subr.mxu0 0.0
  %912 = vmatpush1.msra.mxu0 %v844
  %913 = vmatprep.subr.mxu0 0.0
  %914 = vmatpush1.msra.mxu0 %v845
  %915 = vmatprep.subr.mxu0 0.0
  %916 = vmatpush1.msra.mxu0 %v846
  %917 = vmatprep.subr.mxu0 0.0
  %918 = vmatpush1.msra.mxu0 %v847
  %919 = vmatprep.subr.mxu0 0.0
  %920 = vmatpush1.msra.mxu0 %v848
  %921 = vmatprep.subr.mxu0 0.0
  %922 = vmatpush1.msra.mxu0 %v849
  %923 = vmatprep.subr.mxu0 0.0
  %924 = vmatpush1.msra.mxu0 0.0
  %925 = vmatprep.subr.mxu0 0.0
  %926 = vmatpush1.msra.mxu0 0.0
  %927 = vmatprep.subr.mxu0 0.0
  %928 = vmatpush1.msra.mxu0 0.0
  %929 = vmatprep.subr.mxu0 0.0
  %930 = vmatpush1.msra.mxu0 0.0
  %931 = vmatprep.subr.mxu0 0.0
  %932 = vmatpush1.msra.mxu0 0.0
  %933 = vmatprep.subr.mxu0 0.0
  %934 = vmatpush1.msra.mxu0 0.0
  %935 = vmatprep.subr.mxu0 0.0
  %936 = vmatpush1.msra.mxu0 0.0
  %937 = vmatprep.subr.mxu0 0.0
  %938 = vmatpush1.msra.mxu0 0.0
  %939 = vmatprep.subr.mxu0 0.0
  %940 = vmatpush1.msra.mxu0 0.0
  %941 = vmatprep.subr.mxu0 0.0
  %942 = vmatpush1.msra.mxu0 0.0
  %943 = vmatprep.subr.mxu0 0.0
  %944 = vmatpush1.msra.mxu0 0.0
  %945 = vmatprep.subr.mxu0 0.0
  %946 = vmatpush1.msra.mxu0 0.0
  %947 = vmatprep.subr.mxu0 0.0
  %948 = vmatpush1.msra.mxu0 0.0
  %949 = vmatprep.subr.mxu0 0.0
  %950 = vmatpush1.msra.mxu0 0.0
  %951 = vmatprep.mubr.f32.mxu0 %v877
  %952 = vmatmul.mubr.f32.gmra.mrb[0].mxu0 %v856
  %v953 = vpop.f32.mrb[0].mxu0
  %v954 = vadd.f32 0.0, %v953
  %v955 = vpop.f32.mrb[0].mxu0
  %956 = vmatprep.mubr.f32.mxu0 %v879
  %957 = vmatmul.mubr.f32.gmra.mrb[0].mxu0 %v861
  %v958 = vpop.f32.mrb[0].mxu0
  %v959 = vadd.f32 0.0, %v958
  %v960 = vpop.f32.mrb[0].mxu0
  %961 = vmatprep.mubr.f32.mxu0 %v881
  %962 = vmatmul.mubr.f32.gmra.mrb[0].mxu0 %v865
  %v963 = vpop.f32.mrb[0].mxu0
  %v964 = vadd.f32 0.0, %v963
  %v965 = vpop.f32.mrb[0].mxu0
  %966 = vmatprep.mubr.f32.mxu0 %v883
  %967 = vmatmul.mubr.f32.gmra.mrb[0].mxu0 %v869
  %v968 = vpop.f32.mrb[0].mxu0
  %v969 = vadd.f32 0.0, %v968
  %v970 = vpop.f32.mrb[0].mxu0
  %971 = vmatprep.mubr.f32.mxu0 %v885
  %972 = vmatmul.mubr.f32.gmra.mrb[0].mxu0 %v868
  %v973 = vpop.f32.mrb[0].mxu0
  %v974 = vadd.f32 0.0, %v973
  %v975 = vpop.f32.mrb[0].mxu0
  %976 = vdwg.mxu0
  %v977 = vadd.f32 %v804, %v954
  %v978 = vadd.f32 %v809, %v959
  %v979 = vadd.f32 %v814, %v964
  %v980 = vadd.f32 %v819, %v969
  %v981 = vadd.f32 %v824, %v974
  %v982 = vxor.u32 %v977, 2147483648
  %v983 = vxor.u32 %v978, 2147483648
  %v984 = vxor.u32 %v979, 2147483648
  %v985 = vxor.u32 %v980, 2147483648
  %v986 = vxor.u32 %v981, 2147483648
  %v987 = vmul.f32 %v982, 1.442695
  %v988 = vpow.pop %v987
  %v989 = vmul.f32 %v983, 1.442695
  %v990 = vpow.pop %v989
  %v991 = vmul.f32 %v984, 1.442695
  %v992 = vpow.pop %v991
  %v993 = vmul.f32 %v985, 1.442695
  %v994 = vpow.pop %v993
  %v995 = vmul.f32 %v986, 1.442695
  %v996 = vpow.pop %v995
  %v997 = vadd.f32 %v988, 1.0
  %v998 = vadd.f32 %v990, 1.0
  %v999 = vadd.f32 %v992, 1.0
  %v1000 = vadd.f32 %v994, 1.0
  %v1001 = vadd.f32 %v996, 1.0
  %v1002 = vrcp.pop %v997
  %v1003 = vmul.f32 1.0, %v1002
  %v1004 = vrcp.pop %v998
  %v1005 = vmul.f32 1.0, %v1004
  %v1006 = vrcp.pop %v999
  %v1007 = vmul.f32 1.0, %v1006
  %v1008 = vrcp.pop %v1000
  %v1009 = vmul.f32 1.0, %v1008
  %v1010 = vrcp.pop %v1001
  %v1011 = vmul.f32 1.0, %v1010
  %v1012 = vmul.f32 %v977, %v1003
  %v1013 = vmul.f32 %v978, %v1005
  %v1014 = vmul.f32 %v979, %v1007
  %v1015 = vmul.f32 %v980, %v1009
  %v1016 = vmul.f32 %v981, %v1011
  %v1017 = vld [vmem:[%s3] sm:$0x1]
  %v1019 = vlaneseq
  %v1020 = vshrl.u32 %v1019, 7
  %v1021 = vsub.s32 0, %v1020
  %v1022 = vrot.slane %v1017, %v1021
  %v1024 = vmul.f32 %v1012, %v1022
  %v1025 = vmul.f32 %v1013, %v1022
  %v1026 = vmul.f32 %v1014, %v1022
  %v1027 = vmul.f32 %v1015, %v1022
  %v1028 = vmul.f32 %v1016, %v1022
  %v1029 = vld [vmem:[%s4] sm:$0x1]
  %v1031 = vlaneseq
  %v1032 = vshrl.u32 %v1031, 7
  %v1033 = vsub.s32 0, %v1032
  %v1034 = vrot.slane %v1029, %v1033
  %v1036 = vadd.f32 %v1024, %v1034
  %v1037 = vadd.f32 %v1025, %v1034
  %v1038 = vadd.f32 %v1026, %v1034
  %v1039 = vadd.f32 %v1027, %v1034
  %v1040 = vadd.f32 %v1028, %v1034
  %v1041 = vadd.f32 %v484, %v1036
  %v1042 = vadd.f32 %v485, %v1037
  %v1043 = vxor.u32 %v1041, 2147483648
  %v1044 = vxor.u32 %v1042, 2147483648
  %v1045 = vmul.f32 %v1043, 1.442695
  %v1046 = vpow.pop %v1045
  %v1047 = vmul.f32 %v1044, 1.442695
  %v1048 = vpow.pop %v1047
  %v1049 = vadd.f32 %v1046, 1.0
  %v1050 = vadd.f32 %v1048, 1.0
  %v1051 = vrcp.pop %v1049
  %v1052 = vmul.f32 1.0, %v1051
  %v1053 = vrcp.pop %v1050
  %v1054 = vmul.f32 1.0, %v1053
  %v1055 = vmul.f32 %v1041, %v1052
  %v1056 = vmul.f32 %v1042, %v1054
  %v1060 = vrot.slane %v1038, 2
  %v1061 = vrot.slane %v1039, 2
  %v1062 = vsel %vm176, %v1060, %v1061
  %v1063 = vrot.slane %v1040, 2
  %v1064 = vsel %vm176, %v1061, %v1063
  %v1067 = vadd.f32 %v486, %v1062
  %v1068 = vadd.f32 %v487, %v1064
  %v1069 = vxor.u32 %v1067, 2147483648
  %v1070 = vxor.u32 %v1068, 2147483648
  %v1071 = vmul.f32 %v1069, 1.442695
  %v1072 = vpow.pop %v1071
  %v1073 = vmul.f32 %v1070, 1.442695
  %v1074 = vpow.pop %v1073
  %v1075 = vadd.f32 %v1072, 1.0
  %v1076 = vadd.f32 %v1074, 1.0
  %v1077 = vrcp.pop %v1075
  %v1078 = vmul.f32 1.0, %v1077
  %v1079 = vrcp.pop %v1076
  %v1080 = vmul.f32 1.0, %v1079
  %v1081 = vmul.f32 %v1067, %v1078
  %v1082 = vmul.f32 %v1068, %v1080
  %v1083 = vld [vmem:[%s5] sm:$0xff]
  %v1085 = vsel %vm624, %v1083, 0
  %1087 = vmatprep.subr.mxu0 0.0
  %1088 = vmatpush1.msra.mxu0 %v1055
  %1089 = vmatprep.subr.mxu0 0.0
  %1090 = vmatpush1.msra.mxu0 %v1056
  %1091 = vmatprep.subr.mxu0 0.0
  %1092 = vmatpush1.msra.mxu0 0.0
  %1093 = vmatprep.subr.mxu0 0.0
  %1094 = vmatpush1.msra.mxu0 0.0
  %1095 = vmatprep.subr.mxu0 0.0
  %1096 = vmatpush1.msra.mxu0 0.0
  %1097 = vmatprep.subr.mxu0 0.0
  %1098 = vmatpush1.msra.mxu0 0.0
  %1099 = vmatprep.subr.mxu0 0.0
  %1100 = vmatpush1.msra.mxu0 0.0
  %1101 = vmatprep.subr.mxu0 0.0
  %1102 = vmatpush1.msra.mxu0 0.0
  %1103 = vmatprep.subr.mxu0 0.0
  %1104 = vmatpush1.msra.mxu0 0.0
  %1105 = vmatprep.subr.mxu0 0.0
  %1106 = vmatpush1.msra.mxu0 0.0
  %1107 = vmatprep.subr.mxu0 0.0
  %1108 = vmatpush1.msra.mxu0 0.0
  %1109 = vmatprep.subr.mxu0 0.0
  %1110 = vmatpush1.msra.mxu0 0.0
  %1111 = vmatprep.subr.mxu0 0.0
  %1112 = vmatpush1.msra.mxu0 0.0
  %1113 = vmatprep.subr.mxu0 0.0
  %1114 = vmatpush1.msra.mxu0 0.0
  %1115 = vmatprep.subr.mxu0 0.0
  %1116 = vmatpush1.msra.mxu0 0.0
  %1117 = vmatprep.subr.mxu0 0.0
  %1118 = vmatpush1.msra.mxu0 0.0
  %1119 = vmatprep.subr.mxu0 0.0
  %1120 = vmatpush1.msra.mxu0 0.0
  %1121 = vmatprep.subr.mxu0 0.0
  %1122 = vmatpush1.msra.mxu0 0.0
  %1123 = vmatprep.subr.mxu0 0.0
  %1124 = vmatpush1.msra.mxu0 0.0
  %1125 = vmatprep.subr.mxu0 0.0
  %1126 = vmatpush1.msra.mxu0 0.0
  %1127 = vmatprep.subr.mxu0 0.0
  %1128 = vmatpush1.msra.mxu0 0.0
  %1129 = vmatprep.subr.mxu0 0.0
  %1130 = vmatpush1.msra.mxu0 0.0
  %1131 = vmatprep.subr.mxu0 0.0
  %1132 = vmatpush1.msra.mxu0 0.0
  %1133 = vmatprep.subr.mxu0 0.0
  %1134 = vmatpush1.msra.mxu0 0.0
  %1135 = vmatprep.subr.mxu0 0.0
  %1136 = vmatpush1.msra.mxu0 0.0
  %1137 = vmatprep.subr.mxu0 0.0
  %1138 = vmatpush1.msra.mxu0 0.0
  %1139 = vmatprep.subr.mxu0 0.0
  %1140 = vmatpush1.msra.mxu0 0.0
  %1141 = vmatprep.subr.mxu0 0.0
  %1142 = vmatpush1.msra.mxu0 0.0
  %1143 = vmatprep.subr.mxu0 0.0
  %1144 = vmatpush1.msra.mxu0 0.0
  %1145 = vmatprep.subr.mxu0 0.0
  %1146 = vmatpush1.msra.mxu0 0.0
  %1147 = vmatprep.subr.mxu0 0.0
  %1148 = vmatpush1.msra.mxu0 0.0
  %1149 = vmatprep.subr.mxu0 0.0
  %1150 = vmatpush1.msra.mxu0 0.0
  %1151 = vmatprep.mubr.f32.mxu0 0.0
  %1152 = vmatmul.mubr.f32.gmra.mrb[0].mxu0 %v1085
  %v1153 = vpop.f32.mrb[0].mxu0
  %v1154 = vadd.f32 0.0, %v1153
  %v1155 = vpop.f32.mrb[0].mxu0
  %1156 = vdwg.mxu0
  %s1157 = scalar_lea.vmem %s5, 8
  %v1158 = vld [vmem:[%s1157] sm:$0xff]
  %v1160 = vsel %vm624, %v1158, 0
  %1162 = vmatprep.subr.mxu0 0.0
  %1163 = vmatpush1.msra.mxu0 %v1055
  %1164 = vmatprep.subr.mxu0 0.0
  %1165 = vmatpush1.msra.mxu0 %v1056
  %1166 = vmatprep.subr.mxu0 0.0
  %1167 = vmatpush1.msra.mxu0 0.0
  %1168 = vmatprep.subr.mxu0 0.0
  %1169 = vmatpush1.msra.mxu0 0.0
  %1170 = vmatprep.subr.mxu0 0.0
  %1171 = vmatpush1.msra.mxu0 0.0
  %1172 = vmatprep.subr.mxu0 0.0
  %1173 = vmatpush1.msra.mxu0 0.0
  %1174 = vmatprep.subr.mxu0 0.0
  %1175 = vmatpush1.msra.mxu0 0.0
  %1176 = vmatprep.subr.mxu0 0.0
  %1177 = vmatpush1.msra.mxu0 0.0
  %1178 = vmatprep.subr.mxu0 0.0
  %1179 = vmatpush1.msra.mxu0 0.0
  %1180 = vmatprep.subr.mxu0 0.0
  %1181 = vmatpush1.msra.mxu0 0.0
  %1182 = vmatprep.subr.mxu0 0.0
  %1183 = vmatpush1.msra.mxu0 0.0
  %1184 = vmatprep.subr.mxu0 0.0
  %1185 = vmatpush1.msra.mxu0 0.0
  %1186 = vmatprep.subr.mxu0 0.0
  %1187 = vmatpush1.msra.mxu0 0.0
  %1188 = vmatprep.subr.mxu0 0.0
  %1189 = vmatpush1.msra.mxu0 0.0
  %1190 = vmatprep.subr.mxu0 0.0
  %1191 = vmatpush1.msra.mxu0 0.0
  %1192 = vmatprep.subr.mxu0 0.0
  %1193 = vmatpush1.msra.mxu0 0.0
  %1194 = vmatprep.subr.mxu0 0.0
  %1195 = vmatpush1.msra.mxu0 0.0
  %1196 = vmatprep.subr.mxu0 0.0
  %1197 = vmatpush1.msra.mxu0 0.0
  %1198 = vmatprep.subr.mxu0 0.0
  %1199 = vmatpush1.msra.mxu0 0.0
  %1200 = vmatprep.subr.mxu0 0.0
  %1201 = vmatpush1.msra.mxu0 0.0
  %1202 = vmatprep.subr.mxu0 0.0
  %1203 = vmatpush1.msra.mxu0 0.0
  %1204 = vmatprep.subr.mxu0 0.0
  %1205 = vmatpush1.msra.mxu0 0.0
  %1206 = vmatprep.subr.mxu0 0.0
  %1207 = vmatpush1.msra.mxu0 0.0
  %1208 = vmatprep.subr.mxu0 0.0
  %1209 = vmatpush1.msra.mxu0 0.0
  %1210 = vmatprep.subr.mxu0 0.0
  %1211 = vmatpush1.msra.mxu0 0.0
  %1212 = vmatprep.subr.mxu0 0.0
  %1213 = vmatpush1.msra.mxu0 0.0
  %1214 = vmatprep.subr.mxu0 0.0
  %1215 = vmatpush1.msra.mxu0 0.0
  %1216 = vmatprep.subr.mxu0 0.0
  %1217 = vmatpush1.msra.mxu0 0.0
  %1218 = vmatprep.subr.mxu0 0.0
  %1219 = vmatpush1.msra.mxu0 0.0
  %1220 = vmatprep.subr.mxu0 0.0
  %1221 = vmatpush1.msra.mxu0 0.0
  %1222 = vmatprep.subr.mxu0 0.0
  %1223 = vmatpush1.msra.mxu0 0.0
  %1224 = vmatprep.subr.mxu0 0.0
  %1225 = vmatpush1.msra.mxu0 0.0
  %1226 = vmatprep.mubr.f32.mxu0 0.0
  %1227 = vmatmul.mubr.f32.gmra.mrb[0].mxu0 %v1160
  %v1228 = vpop.f32.mrb[0].mxu0
  %v1229 = vadd.f32 0.0, %v1228
  %v1230 = vpop.f32.mrb[0].mxu0
  %1231 = vdwg.mxu0
  %v1232 = vmax.f32 %v1154, %v1229
  %v1233 = vld [vmem:[%s6] sm:$0xff]
  %v1234 = vld [vmem:[%s6 + $0x8] sm:$0xff]
  %v1235 = vld [vmem:[%s6 + $0x10] sm:$0xff]
  %v1236 = vld [vmem:[%s6 + $0x18] sm:$0xff]
  %v1237 = vld [vmem:[%s6 + $0x20] sm:$0xff]
  %v1238 = vld [vmem:[%s6 + $0x28] sm:$0xff]
  %v1239 = vld [vmem:[%s6 + $0x30] sm:$0xff]
  %v1240 = vld [vmem:[%s6 + $0x38] sm:$0xff]
  %v1241 = vld [vmem:[%s6 + $0x40] sm:$0xff]
  %v1242 = vld [vmem:[%s6 + $0x48] sm:$0xff]
  %v1243 = vld [vmem:[%s6 + $0x50] sm:$0xff]
  %v1244 = vld [vmem:[%s6 + $0x58] sm:$0xff]
  %v1245 = vld [vmem:[%s6 + $0x60] sm:$0xff]
  %v1246 = vld [vmem:[%s6 + $0x68] sm:$0xff]
  %v1247 = vld [vmem:[%s6 + $0x70] sm:$0xff]
  %v1248 = vld [vmem:[%s6 + $0x78] sm:$0xff]
  %1249 = vmatprep.subr.mxu0 0.0
  %1250 = vmatpush1.msra.mxu0 %v1233
  %1251 = vmatprep.subr.mxu0 0.0
  %1252 = vmatpush1.msra.mxu0 %v1234
  %1253 = vmatprep.subr.mxu0 0.0
  %1254 = vmatpush1.msra.mxu0 %v1235
  %1255 = vmatprep.subr.mxu0 0.0
  %1256 = vmatpush1.msra.mxu0 %v1236
  %1257 = vmatprep.subr.mxu0 0.0
  %1258 = vmatpush1.msra.mxu0 %v1237
  %1259 = vmatprep.subr.mxu0 0.0
  %1260 = vmatpush1.msra.mxu0 %v1238
  %1261 = vmatprep.subr.mxu0 0.0
  %1262 = vmatpush1.msra.mxu0 %v1239
  %1263 = vmatprep.subr.mxu0 0.0
  %1264 = vmatpush1.msra.mxu0 %v1240
  %1265 = vmatprep.subr.mxu0 0.0
  %1266 = vmatpush1.msra.mxu0 %v1241
  %1267 = vmatprep.subr.mxu0 0.0
  %1268 = vmatpush1.msra.mxu0 %v1242
  %1269 = vmatprep.subr.mxu0 0.0
  %1270 = vmatpush1.msra.mxu0 %v1243
  %1271 = vmatprep.subr.mxu0 0.0
  %1272 = vmatpush1.msra.mxu0 %v1244
  %1273 = vmatprep.subr.mxu0 0.0
  %1274 = vmatpush1.msra.mxu0 %v1245
  %1275 = vmatprep.subr.mxu0 0.0
  %1276 = vmatpush1.msra.mxu0 %v1246
  %1277 = vmatprep.subr.mxu0 0.0
  %1278 = vmatpush1.msra.mxu0 %v1247
  %1279 = vmatprep.subr.mxu0 0.0
  %1280 = vmatpush1.msra.mxu0 %v1248
  %1281 = vmatprep.subr.mxu0 0.0
  %1282 = vmatpush1.msra.mxu0 0.0
  %1283 = vmatprep.subr.mxu0 0.0
  %1284 = vmatpush1.msra.mxu0 0.0
  %1285 = vmatprep.subr.mxu0 0.0
  %1286 = vmatpush1.msra.mxu0 0.0
  %1287 = vmatprep.subr.mxu0 0.0
  %1288 = vmatpush1.msra.mxu0 0.0
  %1289 = vmatprep.subr.mxu0 0.0
  %1290 = vmatpush1.msra.mxu0 0.0
  %1291 = vmatprep.subr.mxu0 0.0
  %1292 = vmatpush1.msra.mxu0 0.0
  %1293 = vmatprep.subr.mxu0 0.0
  %1294 = vmatpush1.msra.mxu0 0.0
  %1295 = vmatprep.subr.mxu0 0.0
  %1296 = vmatpush1.msra.mxu0 0.0
  %1297 = vmatprep.subr.mxu0 0.0
  %1298 = vmatpush1.msra.mxu0 0.0
  %1299 = vmatprep.subr.mxu0 0.0
  %1300 = vmatpush1.msra.mxu0 0.0
  %1301 = vmatprep.subr.mxu0 0.0
  %1302 = vmatpush1.msra.mxu0 0.0
  %1303 = vmatprep.subr.mxu0 0.0
  %1304 = vmatpush1.msra.mxu0 0.0
  %1305 = vmatprep.subr.mxu0 0.0
  %1306 = vmatpush1.msra.mxu0 0.0
  %1307 = vmatprep.subr.mxu0 0.0
  %1308 = vmatpush1.msra.mxu0 0.0
  %1309 = vmatprep.subr.mxu0 0.0
  %1310 = vmatpush1.msra.mxu0 0.0
  %1311 = vmatprep.subr.mxu0 0.0
  %1312 = vmatpush1.msra.mxu0 0.0
  %1313 = vmatprep.mubr.f32.mxu0 0.0
  %1314 = vmatmul.mubr.f32.gmra.mrb[0].mxu0 %v1232
  %v1315 = vpop.f32.mrb[0].mxu0
  %v1316 = vadd.f32 0.0, %v1315
  %v1317 = vpop.f32.mrb[0].mxu0
  %1318 = vdwg.mxu0
  %s1319 = scalar_lea.vmem %s6, 128
  %v1320 = vld [vmem:[%s1319] sm:$0xff]
  %v1321 = vld [vmem:[%s1319 + $0x8] sm:$0xff]
  %v1322 = vld [vmem:[%s1319 + $0x10] sm:$0xff]
  %v1323 = vld [vmem:[%s1319 + $0x18] sm:$0xff]
  %v1324 = vld [vmem:[%s1319 + $0x20] sm:$0xff]
  %v1325 = vld [vmem:[%s1319 + $0x28] sm:$0xff]
  %v1326 = vld [vmem:[%s1319 + $0x30] sm:$0xff]
  %v1327 = vld [vmem:[%s1319 + $0x38] sm:$0xff]
  %v1328 = vld [vmem:[%s1319 + $0x40] sm:$0xff]
  %v1329 = vld [vmem:[%s1319 + $0x48] sm:$0xff]
  %v1330 = vld [vmem:[%s1319 + $0x50] sm:$0xff]
  %v1331 = vld [vmem:[%s1319 + $0x58] sm:$0xff]
  %v1332 = vld [vmem:[%s1319 + $0x60] sm:$0xff]
  %v1333 = vld [vmem:[%s1319 + $0x68] sm:$0xff]
  %v1334 = vld [vmem:[%s1319 + $0x70] sm:$0xff]
  %v1335 = vld [vmem:[%s1319 + $0x78] sm:$0xff]
  %1336 = vmatprep.subr.mxu0 0.0
  %1337 = vmatpush1.msra.mxu0 %v1320
  %1338 = vmatprep.subr.mxu0 0.0
  %1339 = vmatpush1.msra.mxu0 %v1321
  %1340 = vmatprep.subr.mxu0 0.0
  %1341 = vmatpush1.msra.mxu0 %v1322
  %1342 = vmatprep.subr.mxu0 0.0
  %1343 = vmatpush1.msra.mxu0 %v1323
  %1344 = vmatprep.subr.mxu0 0.0
  %1345 = vmatpush1.msra.mxu0 %v1324
  %1346 = vmatprep.subr.mxu0 0.0
  %1347 = vmatpush1.msra.mxu0 %v1325
  %1348 = vmatprep.subr.mxu0 0.0
  %1349 = vmatpush1.msra.mxu0 %v1326
  %1350 = vmatprep.subr.mxu0 0.0
  %1351 = vmatpush1.msra.mxu0 %v1327
  %1352 = vmatprep.subr.mxu0 0.0
  %1353 = vmatpush1.msra.mxu0 %v1328
  %1354 = vmatprep.subr.mxu0 0.0
  %1355 = vmatpush1.msra.mxu0 %v1329
  %1356 = vmatprep.subr.mxu0 0.0
  %1357 = vmatpush1.msra.mxu0 %v1330
  %1358 = vmatprep.subr.mxu0 0.0
  %1359 = vmatpush1.msra.mxu0 %v1331
  %1360 = vmatprep.subr.mxu0 0.0
  %1361 = vmatpush1.msra.mxu0 %v1332
  %1362 = vmatprep.subr.mxu0 0.0
  %1363 = vmatpush1.msra.mxu0 %v1333
  %1364 = vmatprep.subr.mxu0 0.0
  %1365 = vmatpush1.msra.mxu0 %v1334
  %1366 = vmatprep.subr.mxu0 0.0
  %1367 = vmatpush1.msra.mxu0 %v1335
  %1368 = vmatprep.subr.mxu0 0.0
  %1369 = vmatpush1.msra.mxu0 0.0
  %1370 = vmatprep.subr.mxu0 0.0
  %1371 = vmatpush1.msra.mxu0 0.0
  %1372 = vmatprep.subr.mxu0 0.0
  %1373 = vmatpush1.msra.mxu0 0.0
  %1374 = vmatprep.subr.mxu0 0.0
  %1375 = vmatpush1.msra.mxu0 0.0
  %1376 = vmatprep.subr.mxu0 0.0
  %1377 = vmatpush1.msra.mxu0 0.0
  %1378 = vmatprep.subr.mxu0 0.0
  %1379 = vmatpush1.msra.mxu0 0.0
  %1380 = vmatprep.subr.mxu0 0.0
  %1381 = vmatpush1.msra.mxu0 0.0
  %1382 = vmatprep.subr.mxu0 0.0
  %1383 = vmatpush1.msra.mxu0 0.0
  %1384 = vmatprep.subr.mxu0 0.0
  %1385 = vmatpush1.msra.mxu0 0.0
  %1386 = vmatprep.subr.mxu0 0.0
  %1387 = vmatpush1.msra.mxu0 0.0
  %1388 = vmatprep.subr.mxu0 0.0
  %1389 = vmatpush1.msra.mxu0 0.0
  %1390 = vmatprep.subr.mxu0 0.0
  %1391 = vmatpush1.msra.mxu0 0.0
  %1392 = vmatprep.subr.mxu0 0.0
  %1393 = vmatpush1.msra.mxu0 0.0
  %1394 = vmatprep.subr.mxu0 0.0
  %1395 = vmatpush1.msra.mxu0 0.0
  %1396 = vmatprep.subr.mxu0 0.0
  %1397 = vmatpush1.msra.mxu0 0.0
  %1398 = vmatprep.subr.mxu0 0.0
  %1399 = vmatpush1.msra.mxu0 0.0
  %1400 = vmatprep.mubr.f32.mxu0 0.0
  %1401 = vmatmul.mubr.f32.gmra.mrb[0].mxu0 %v1232
  %v1402 = vpop.f32.mrb[0].mxu0
  %v1403 = vadd.f32 0.0, %v1402
  %v1404 = vpop.f32.mrb[0].mxu0
  %1405 = vdwg.mxu0
  %v1406 = vmax.f32 %v1316, %v1403
  %1408 = vrot.lane.b32.xlu0 %v1406, 8
  %v1409 = vpop.permute.xlu0 %1408
  %vm1411 = vcmask 588864
  %1412 = vst.msk [vmem:[#allocation3 + $0x1] sm:$0xff] %vm1411, %v1409
  %v1413 = vld [vmem:[%s5] sm:$0xff]
  %v1415 = vsel %vm624, %v1413, 0
  %1417 = vmatprep.subr.mxu0 0.0
  %1418 = vmatpush1.msra.mxu0 %v1081
  %1419 = vmatprep.subr.mxu0 0.0
  %1420 = vmatpush1.msra.mxu0 %v1082
  %1421 = vmatprep.subr.mxu0 0.0
  %1422 = vmatpush1.msra.mxu0 0.0
  %1423 = vmatprep.subr.mxu0 0.0
  %1424 = vmatpush1.msra.mxu0 0.0
  %1425 = vmatprep.subr.mxu0 0.0
  %1426 = vmatpush1.msra.mxu0 0.0
  %1427 = vmatprep.subr.mxu0 0.0
  %1428 = vmatpush1.msra.mxu0 0.0
  %1429 = vmatprep.subr.mxu0 0.0
  %1430 = vmatpush1.msra.mxu0 0.0
  %1431 = vmatprep.subr.mxu0 0.0
  %1432 = vmatpush1.msra.mxu0 0.0
  %1433 = vmatprep.subr.mxu0 0.0
  %1434 = vmatpush1.msra.mxu0 0.0
  %1435 = vmatprep.subr.mxu0 0.0
  %1436 = vmatpush1.msra.mxu0 0.0
  %1437 = vmatprep.subr.mxu0 0.0
  %1438 = vmatpush1.msra.mxu0 0.0
  %1439 = vmatprep.subr.mxu0 0.0
  %1440 = vmatpush1.msra.mxu0 0.0
  %1441 = vmatprep.subr.mxu0 0.0
  %1442 = vmatpush1.msra.mxu0 0.0
  %1443 = vmatprep.subr.mxu0 0.0
  %1444 = vmatpush1.msra.mxu0 0.0
  %1445 = vmatprep.subr.mxu0 0.0
  %1446 = vmatpush1.msra.mxu0 0.0
  %1447 = vmatprep.subr.mxu0 0.0
  %1448 = vmatpush1.msra.mxu0 0.0
  %1449 = vmatprep.subr.mxu0 0.0
  %1450 = vmatpush1.msra.mxu0 0.0
  %1451 = vmatprep.subr.mxu0 0.0
  %1452 = vmatpush1.msra.mxu0 0.0
  %1453 = vmatprep.subr.mxu0 0.0
  %1454 = vmatpush1.msra.mxu0 0.0
  %1455 = vmatprep.subr.mxu0 0.0
  %1456 = vmatpush1.msra.mxu0 0.0
  %1457 = vmatprep.subr.mxu0 0.0
  %1458 = vmatpush1.msra.mxu0 0.0
  %1459 = vmatprep.subr.mxu0 0.0
  %1460 = vmatpush1.msra.mxu0 0.0
  %1461 = vmatprep.subr.mxu0 0.0
  %1462 = vmatpush1.msra.mxu0 0.0
  %1463 = vmatprep.subr.mxu0 0.0
  %1464 = vmatpush1.msra.mxu0 0.0
  %1465 = vmatprep.subr.mxu0 0.0
  %1466 = vmatpush1.msra.mxu0 0.0
  %1467 = vmatprep.subr.mxu0 0.0
  %1468 = vmatpush1.msra.mxu0 0.0
  %1469 = vmatprep.subr.mxu0 0.0
  %1470 = vmatpush1.msra.mxu0 0.0
  %1471 = vmatprep.subr.mxu0 0.0
  %1472 = vmatpush1.msra.mxu0 0.0
  %1473 = vmatprep.subr.mxu0 0.0
  %1474 = vmatpush1.msra.mxu0 0.0
  %1475 = vmatprep.subr.mxu0 0.0
  %1476 = vmatpush1.msra.mxu0 0.0
  %1477 = vmatprep.subr.mxu0 0.0
  %1478 = vmatpush1.msra.mxu0 0.0
  %1479 = vmatprep.subr.mxu0 0.0
  %1480 = vmatpush1.msra.mxu0 0.0
  %1481 = vmatprep.mubr.f32.mxu0 0.0
  %1482 = vmatmul.mubr.f32.gmra.mrb[0].mxu0 %v1415
  %v1483 = vpop.f32.mrb[0].mxu0
  %v1484 = vadd.f32 0.0, %v1483
  %v1485 = vpop.f32.mrb[0].mxu0
  %1486 = vdwg.mxu0
  %v1487 = vld [vmem:[%s1157] sm:$0xff]
  %v1489 = vsel %vm624, %v1487, 0
  %1491 = vmatprep.subr.mxu0 0.0
  %1492 = vmatpush1.msra.mxu0 %v1081
  %1493 = vmatprep.subr.mxu0 0.0
  %1494 = vmatpush1.msra.mxu0 %v1082
  %1495 = vmatprep.subr.mxu0 0.0
  %1496 = vmatpush1.msra.mxu0 0.0
  %1497 = vmatprep.subr.mxu0 0.0
  %1498 = vmatpush1.msra.mxu0 0.0
  %1499 = vmatprep.subr.mxu0 0.0
  %1500 = vmatpush1.msra.mxu0 0.0
  %1501 = vmatprep.subr.mxu0 0.0
  %1502 = vmatpush1.msra.mxu0 0.0
  %1503 = vmatprep.subr.mxu0 0.0
  %1504 = vmatpush1.msra.mxu0 0.0
  %1505 = vmatprep.subr.mxu0 0.0
  %1506 = vmatpush1.msra.mxu0 0.0
  %1507 = vmatprep.subr.mxu0 0.0
  %1508 = vmatpush1.msra.mxu0 0.0
  %1509 = vmatprep.subr.mxu0 0.0
  %1510 = vmatpush1.msra.mxu0 0.0
  %1511 = vmatprep.subr.mxu0 0.0
  %1512 = vmatpush1.msra.mxu0 0.0
  %1513 = vmatprep.subr.mxu0 0.0
  %1514 = vmatpush1.msra.mxu0 0.0
  %1515 = vmatprep.subr.mxu0 0.0
  %1516 = vmatpush1.msra.mxu0 0.0
  %1517 = vmatprep.subr.mxu0 0.0
  %1518 = vmatpush1.msra.mxu0 0.0
  %1519 = vmatprep.subr.mxu0 0.0
  %1520 = vmatpush1.msra.mxu0 0.0
  %1521 = vmatprep.subr.mxu0 0.0
  %1522 = vmatpush1.msra.mxu0 0.0
  %1523 = vmatprep.subr.mxu0 0.0
  %1524 = vmatpush1.msra.mxu0 0.0
  %1525 = vmatprep.subr.mxu0 0.0
  %1526 = vmatpush1.msra.mxu0 0.0
  %1527 = vmatprep.subr.mxu0 0.0
  %1528 = vmatpush1.msra.mxu0 0.0
  %1529 = vmatprep.subr.mxu0 0.0
  %1530 = vmatpush1.msra.mxu0 0.0
  %1531 = vmatprep.subr.mxu0 0.0
  %1532 = vmatpush1.msra.mxu0 0.0
  %1533 = vmatprep.subr.mxu0 0.0
  %1534 = vmatpush1.msra.mxu0 0.0
  %1535 = vmatprep.subr.mxu0 0.0
  %1536 = vmatpush1.msra.mxu0 0.0
  %1537 = vmatprep.subr.mxu0 0.0
  %1538 = vmatpush1.msra.mxu0 0.0
  %1539 = vmatprep.subr.mxu0 0.0
  %1540 = vmatpush1.msra.mxu0 0.0
  %1541 = vmatprep.subr.mxu0 0.0
  %1542 = vmatpush1.msra.mxu0 0.0
  %1543 = vmatprep.subr.mxu0 0.0
  %1544 = vmatpush1.msra.mxu0 0.0
  %1545 = vmatprep.subr.mxu0 0.0
  %1546 = vmatpush1.msra.mxu0 0.0
  %1547 = vmatprep.subr.mxu0 0.0
  %1548 = vmatpush1.msra.mxu0 0.0
  %1549 = vmatprep.subr.mxu0 0.0
  %1550 = vmatpush1.msra.mxu0 0.0
  %1551 = vmatprep.subr.mxu0 0.0
  %1552 = vmatpush1.msra.mxu0 0.0
  %1553 = vmatprep.subr.mxu0 0.0
  %1554 = vmatpush1.msra.mxu0 0.0
  %1555 = vmatprep.mubr.f32.mxu0 0.0
  %1556 = vmatmul.mubr.f32.gmra.mrb[0].mxu0 %v1489
  %v1557 = vpop.f32.mrb[0].mxu0
  %v1558 = vadd.f32 0.0, %v1557
  %v1559 = vpop.f32.mrb[0].mxu0
  %1560 = vdwg.mxu0
  %v1561 = vmax.f32 %v1484, %v1558
  %v1562 = vld [vmem:[%s6] sm:$0xff]
  %v1563 = vld [vmem:[%s6 + $0x8] sm:$0xff]
  %v1564 = vld [vmem:[%s6 + $0x10] sm:$0xff]
  %v1565 = vld [vmem:[%s6 + $0x18] sm:$0xff]
  %v1566 = vld [vmem:[%s6 + $0x20] sm:$0xff]
  %v1567 = vld [vmem:[%s6 + $0x28] sm:$0xff]
  %v1568 = vld [vmem:[%s6 + $0x30] sm:$0xff]
  %v1569 = vld [vmem:[%s6 + $0x38] sm:$0xff]
  %v1570 = vld [vmem:[%s6 + $0x40] sm:$0xff]
  %v1571 = vld [vmem:[%s6 + $0x48] sm:$0xff]
  %v1572 = vld [vmem:[%s6 + $0x50] sm:$0xff]
  %v1573 = vld [vmem:[%s6 + $0x58] sm:$0xff]
  %v1574 = vld [vmem:[%s6 + $0x60] sm:$0xff]
  %v1575 = vld [vmem:[%s6 + $0x68] sm:$0xff]
  %v1576 = vld [vmem:[%s6 + $0x70] sm:$0xff]
  %v1577 = vld [vmem:[%s6 + $0x78] sm:$0xff]
  %1578 = vmatprep.subr.mxu0 0.0
  %1579 = vmatpush1.msra.mxu0 %v1562
  %1580 = vmatprep.subr.mxu0 0.0
  %1581 = vmatpush1.msra.mxu0 %v1563
  %1582 = vmatprep.subr.mxu0 0.0
  %1583 = vmatpush1.msra.mxu0 %v1564
  %1584 = vmatprep.subr.mxu0 0.0
  %1585 = vmatpush1.msra.mxu0 %v1565
  %1586 = vmatprep.subr.mxu0 0.0
  %1587 = vmatpush1.msra.mxu0 %v1566
  %1588 = vmatprep.subr.mxu0 0.0
  %1589 = vmatpush1.msra.mxu0 %v1567
  %1590 = vmatprep.subr.mxu0 0.0
  %1591 = vmatpush1.msra.mxu0 %v1568
  %1592 = vmatprep.subr.mxu0 0.0
  %1593 = vmatpush1.msra.mxu0 %v1569
  %1594 = vmatprep.subr.mxu0 0.0
  %1595 = vmatpush1.msra.mxu0 %v1570
  %1596 = vmatprep.subr.mxu0 0.0
  %1597 = vmatpush1.msra.mxu0 %v1571
  %1598 = vmatprep.subr.mxu0 0.0
  %1599 = vmatpush1.msra.mxu0 %v1572
  %1600 = vmatprep.subr.mxu0 0.0
  %1601 = vmatpush1.msra.mxu0 %v1573
  %1602 = vmatprep.subr.mxu0 0.0
  %1603 = vmatpush1.msra.mxu0 %v1574
  %1604 = vmatprep.subr.mxu0 0.0
  %1605 = vmatpush1.msra.mxu0 %v1575
  %1606 = vmatprep.subr.mxu0 0.0
  %1607 = vmatpush1.msra.mxu0 %v1576
  %1608 = vmatprep.subr.mxu0 0.0
  %1609 = vmatpush1.msra.mxu0 %v1577
  %1610 = vmatprep.subr.mxu0 0.0
  %1611 = vmatpush1.msra.mxu0 0.0
  %1612 = vmatprep.subr.mxu0 0.0
  %1613 = vmatpush1.msra.mxu0 0.0
  %1614 = vmatprep.subr.mxu0 0.0
  %1615 = vmatpush1.msra.mxu0 0.0
  %1616 = vmatprep.subr.mxu0 0.0
  %1617 = vmatpush1.msra.mxu0 0.0
  %1618 = vmatprep.subr.mxu0 0.0
  %1619 = vmatpush1.msra.mxu0 0.0
  %1620 = vmatprep.subr.mxu0 0.0
  %1621 = vmatpush1.msra.mxu0 0.0
  %1622 = vmatprep.subr.mxu0 0.0
  %1623 = vmatpush1.msra.mxu0 0.0
  %1624 = vmatprep.subr.mxu0 0.0
  %1625 = vmatpush1.msra.mxu0 0.0
  %1626 = vmatprep.subr.mxu0 0.0
  %1627 = vmatpush1.msra.mxu0 0.0
  %1628 = vmatprep.subr.mxu0 0.0
  %1629 = vmatpush1.msra.mxu0 0.0
  %1630 = vmatprep.subr.mxu0 0.0
  %1631 = vmatpush1.msra.mxu0 0.0
  %1632 = vmatprep.subr.mxu0 0.0
  %1633 = vmatpush1.msra.mxu0 0.0
  %1634 = vmatprep.subr.mxu0 0.0
  %1635 = vmatpush1.msra.mxu0 0.0
  %1636 = vmatprep.subr.mxu0 0.0
  %1637 = vmatpush1.msra.mxu0 0.0
  %1638 = vmatprep.subr.mxu0 0.0
  %1639 = vmatpush1.msra.mxu0 0.0
  %1640 = vmatprep.subr.mxu0 0.0
  %1641 = vmatpush1.msra.mxu0 0.0
  %1642 = vmatprep.mubr.f32.mxu0 0.0
  %1643 = vmatmul.mubr.f32.gmra.mrb[0].mxu0 %v1561
  %v1644 = vpop.f32.mrb[0].mxu0
  %v1645 = vadd.f32 0.0, %v1644
  %v1646 = vpop.f32.mrb[0].mxu0
  %1647 = vdwg.mxu0
  %v1648 = vld [vmem:[%s1319] sm:$0xff]
  %v1649 = vld [vmem:[%s1319 + $0x8] sm:$0xff]
  %v1650 = vld [vmem:[%s1319 + $0x10] sm:$0xff]
  %v1651 = vld [vmem:[%s1319 + $0x18] sm:$0xff]
  %v1652 = vld [vmem:[%s1319 + $0x20] sm:$0xff]
  %v1653 = vld [vmem:[%s1319 + $0x28] sm:$0xff]
  %v1654 = vld [vmem:[%s1319 + $0x30] sm:$0xff]
  %v1655 = vld [vmem:[%s1319 + $0x38] sm:$0xff]
  %v1656 = vld [vmem:[%s1319 + $0x40] sm:$0xff]
  %v1657 = vld [vmem:[%s1319 + $0x48] sm:$0xff]
  %v1658 = vld [vmem:[%s1319 + $0x50] sm:$0xff]
  %v1659 = vld [vmem:[%s1319 + $0x58] sm:$0xff]
  %v1660 = vld [vmem:[%s1319 + $0x60] sm:$0xff]
  %v1661 = vld [vmem:[%s1319 + $0x68] sm:$0xff]
  %v1662 = vld [vmem:[%s1319 + $0x70] sm:$0xff]
  %v1663 = vld [vmem:[%s1319 + $0x78] sm:$0xff]
  %1664 = vmatprep.subr.mxu0 0.0
  %1665 = vmatpush1.msra.mxu0 %v1648
  %1666 = vmatprep.subr.mxu0 0.0
  %1667 = vmatpush1.msra.mxu0 %v1649
  %1668 = vmatprep.subr.mxu0 0.0
  %1669 = vmatpush1.msra.mxu0 %v1650
  %1670 = vmatprep.subr.mxu0 0.0
  %1671 = vmatpush1.msra.mxu0 %v1651
  %1672 = vmatprep.subr.mxu0 0.0
  %1673 = vmatpush1.msra.mxu0 %v1652
  %1674 = vmatprep.subr.mxu0 0.0
  %1675 = vmatpush1.msra.mxu0 %v1653
  %1676 = vmatprep.subr.mxu0 0.0
  %1677 = vmatpush1.msra.mxu0 %v1654
  %1678 = vmatprep.subr.mxu0 0.0
  %1679 = vmatpush1.msra.mxu0 %v1655
  %1680 = vmatprep.subr.mxu0 0.0
  %1681 = vmatpush1.msra.mxu0 %v1656
  %1682 = vmatprep.subr.mxu0 0.0
  %1683 = vmatpush1.msra.mxu0 %v1657
  %1684 = vmatprep.subr.mxu0 0.0
  %1685 = vmatpush1.msra.mxu0 %v1658
  %1686 = vmatprep.subr.mxu0 0.0
  %1687 = vmatpush1.msra.mxu0 %v1659
  %1688 = vmatprep.subr.mxu0 0.0
  %1689 = vmatpush1.msra.mxu0 %v1660
  %1690 = vmatprep.subr.mxu0 0.0
  %1691 = vmatpush1.msra.mxu0 %v1661
  %1692 = vmatprep.subr.mxu0 0.0
  %1693 = vmatpush1.msra.mxu0 %v1662
  %1694 = vmatprep.subr.mxu0 0.0
  %1695 = vmatpush1.msra.mxu0 %v1663
  %1696 = vmatprep.subr.mxu0 0.0
  %1697 = vmatpush1.msra.mxu0 0.0
  %1698 = vmatprep.subr.mxu0 0.0
  %1699 = vmatpush1.msra.mxu0 0.0
  %1700 = vmatprep.subr.mxu0 0.0
  %1701 = vmatpush1.msra.mxu0 0.0
  %1702 = vmatprep.subr.mxu0 0.0
  %1703 = vmatpush1.msra.mxu0 0.0
  %1704 = vmatprep.subr.mxu0 0.0
  %1705 = vmatpush1.msra.mxu0 0.0
  %1706 = vmatprep.subr.mxu0 0.0
  %1707 = vmatpush1.msra.mxu0 0.0
  %1708 = vmatprep.subr.mxu0 0.0
  %1709 = vmatpush1.msra.mxu0 0.0
  %1710 = vmatprep.subr.mxu0 0.0
  %1711 = vmatpush1.msra.mxu0 0.0
  %1712 = vmatprep.subr.mxu0 0.0
  %1713 = vmatpush1.msra.mxu0 0.0
  %1714 = vmatprep.subr.mxu0 0.0
  %1715 = vmatpush1.msra.mxu0 0.0
  %1716 = vmatprep.subr.mxu0 0.0
  %1717 = vmatpush1.msra.mxu0 0.0
  %1718 = vmatprep.subr.mxu0 0.0
  %1719 = vmatpush1.msra.mxu0 0.0
  %1720 = vmatprep.subr.mxu0 0.0
  %1721 = vmatpush1.msra.mxu0 0.0
  %1722 = vmatprep.subr.mxu0 0.0
  %1723 = vmatpush1.msra.mxu0 0.0
  %1724 = vmatprep.subr.mxu0 0.0
  %1725 = vmatpush1.msra.mxu0 0.0
  %1726 = vmatprep.subr.mxu0 0.0
  %1727 = vmatpush1.msra.mxu0 0.0
  %1728 = vmatprep.mubr.f32.mxu0 0.0
  %1729 = vmatmul.mubr.f32.gmra.mrb[0].mxu0 %v1561
  %v1730 = vpop.f32.mrb[0].mxu0
  %v1731 = vadd.f32 0.0, %v1730
  %v1732 = vpop.f32.mrb[0].mxu0
  %1733 = vdwg.mxu0
  %v1734 = vmax.f32 %v1645, %v1731
  %1736 = vrot.lane.b32.xlu0 %v1734, 8
  %v1737 = vpop.permute.xlu0 %1736
  %1739 = vst.msk [vmem:[#allocation3 + $0xb] sm:$0xff] %vm1411, %v1737
  %v1740 = vld [vmem:[#allocation3] sm:$0xff]
  %v1741 = vld [vmem:[#allocation3 + $0x8] sm:$0xff]
  %v1742 = vld [vmem:[#allocation3 + $0x10] sm:$0x3]
  %v1743 = vld [vmem:[%s7] sm:$0xff]
  %v1744 = vld [vmem:[%s7 + $0x8] sm:$0xff]
  %v1745 = vld [vmem:[%s7 + $0x10] sm:$0xff]
  %v1746 = vld [vmem:[%s7 + $0x18] sm:$0xff]
  %v1747 = vld [vmem:[%s7 + $0x20] sm:$0xff]
  %v1748 = vld [vmem:[%s7 + $0x28] sm:$0xff]
  %v1749 = vld [vmem:[%s7 + $0x30] sm:$0xff]
  %v1750 = vld [vmem:[%s7 + $0x38] sm:$0xff]
  %v1751 = vld [vmem:[%s7 + $0x40] sm:$0xff]
  %v1752 = vld [vmem:[%s7 + $0x48] sm:$0xff]
  %v1753 = vld [vmem:[#allocation3 + $0x1] sm:$0xff]
  %v1754 = vld [vmem:[#allocation3 + $0x9] sm:$0xff]
  %v1755 = vld [vmem:[#allocation3 + $0x11] sm:$0x3]
  %s1756 = scalar_lea.vmem %s7, 80
  %v1757 = vld [vmem:[%s1756] sm:$0xff]
  %v1758 = vld [vmem:[%s1756 + $0x8] sm:$0xff]
  %v1759 = vld [vmem:[%s1756 + $0x10] sm:$0xff]
  %v1760 = vld [vmem:[%s1756 + $0x18] sm:$0xff]
  %v1761 = vld [vmem:[%s1756 + $0x20] sm:$0xff]
  %v1762 = vld [vmem:[%s1756 + $0x28] sm:$0xff]
  %v1763 = vld [vmem:[%s1756 + $0x30] sm:$0xff]
  %v1764 = vld [vmem:[%s1756 + $0x38] sm:$0xff]
  %v1765 = vld [vmem:[%s1756 + $0x40] sm:$0xff]
  %v1766 = vld [vmem:[%s1756 + $0x48] sm:$0xff]
  %vm1767 = vcmask 654336
  %v1769 = vsel %vm1767, %v1753, 0
  %v1772 = vsel %vm1767, %v1754, 0
  %v1775 = vsel %vm1767, %v1755, 0
  %1777 = vmatprep.subr.mxu0 0.0
  %1778 = vmatpush1.msra.mxu0 %v1757
  %1779 = vmatprep.subr.mxu0 0.0
  %1780 = vmatpush1.msra.mxu0 %v1758
  %1781 = vmatprep.subr.mxu0 0.0
  %1782 = vmatpush1.msra.mxu0 %v1759
  %1783 = vmatprep.subr.mxu0 0.0
  %1784 = vmatpush1.msra.mxu0 %v1760
  %1785 = vmatprep.subr.mxu0 0.0
  %1786 = vmatpush1.msra.mxu0 %v1761
  %1787 = vmatprep.subr.mxu0 0.0
  %1788 = vmatpush1.msra.mxu0 %v1762
  %1789 = vmatprep.subr.mxu0 0.0
  %1790 = vmatpush1.msra.mxu0 %v1763
  %1791 = vmatprep.subr.mxu0 0.0
  %1792 = vmatpush1.msra.mxu0 %v1764
  %1793 = vmatprep.subr.mxu0 0.0
  %1794 = vmatpush1.msra.mxu0 %v1765
  %1795 = vmatprep.subr.mxu0 0.0
  %1796 = vmatpush1.msra.mxu0 %v1766
  %1797 = vmatprep.subr.mxu0 0.0
  %1798 = vmatpush1.msra.mxu0 0.0
  %1799 = vmatprep.subr.mxu0 0.0
  %1800 = vmatpush1.msra.mxu0 0.0
  %1801 = vmatprep.subr.mxu0 0.0
  %1802 = vmatpush1.msra.mxu0 0.0
  %1803 = vmatprep.subr.mxu0 0.0
  %1804 = vmatpush1.msra.mxu0 0.0
  %1805 = vmatprep.subr.mxu0 0.0
  %1806 = vmatpush1.msra.mxu0 0.0
  %1807 = vmatprep.subr.mxu0 0.0
  %1808 = vmatpush1.msra.mxu0 0.0
  %1809 = vmatprep.subr.mxu0 0.0
  %1810 = vmatpush1.msra.mxu0 0.0
  %1811 = vmatprep.subr.mxu0 0.0
  %1812 = vmatpush1.msra.mxu0 0.0
  %1813 = vmatprep.subr.mxu0 0.0
  %1814 = vmatpush1.msra.mxu0 0.0
  %1815 = vmatprep.subr.mxu0 0.0
  %1816 = vmatpush1.msra.mxu0 0.0
  %1817 = vmatprep.subr.mxu0 0.0
  %1818 = vmatpush1.msra.mxu0 0.0
  %1819 = vmatprep.subr.mxu0 0.0
  %1820 = vmatpush1.msra.mxu0 0.0
  %1821 = vmatprep.subr.mxu0 0.0
  %1822 = vmatpush1.msra.mxu0 0.0
  %1823 = vmatprep.subr.mxu0 0.0
  %1824 = vmatpush1.msra.mxu0 0.0
  %1825 = vmatprep.subr.mxu0 0.0
  %1826 = vmatpush1.msra.mxu0 0.0
  %1827 = vmatprep.subr.mxu0 0.0
  %1828 = vmatpush1.msra.mxu0 0.0
  %1829 = vmatprep.subr.mxu0 0.0
  %1830 = vmatpush1.msra.mxu0 0.0
  %1831 = vmatprep.subr.mxu0 0.0
  %1832 = vmatpush1.msra.mxu0 0.0
  %1833 = vmatprep.subr.mxu0 0.0
  %1834 = vmatpush1.msra.mxu0 0.0
  %1835 = vmatprep.subr.mxu0 0.0
  %1836 = vmatpush1.msra.mxu0 0.0
  %1837 = vmatprep.subr.mxu0 0.0
  %1838 = vmatpush1.msra.mxu0 0.0
  %1839 = vmatprep.subr.mxu0 0.0
  %1840 = vmatpush1.msra.mxu0 0.0
  %1841 = vmatprep.mubr.f32.mxu0 0.0
  %1842 = vmatmul.mubr.f32.gmra.mrb[0].mxu0 %v1769
  %v1843 = vpop.f32.mrb[0].mxu0
  %v1844 = vadd.f32 0.0, %v1843
  %v1845 = vpop.f32.mrb[0].mxu0
  %1846 = vmatprep.mubr.f32.mxu0 0.0
  %1847 = vmatmul.mubr.f32.gmra.mrb[0].mxu0 %v1772
  %v1848 = vpop.f32.mrb[0].mxu0
  %v1849 = vadd.f32 0.0, %v1848
  %v1850 = vpop.f32.mrb[0].mxu0
  %1851 = vmatprep.mubr.f32.mxu0 0.0
  %1852 = vmatmul.mubr.f32.gmra.mrb[0].mxu0 %v1775
  %v1853 = vpop.f32.mrb[0].mxu0
  %v1854 = vadd.f32 0.0, %v1853
  %v1855 = vpop.f32.mrb[0].mxu0
  %1856 = vdwg.mxu0
  %v1858 = vsel %vm1767, %v1740, 0
  %v1861 = vsel %vm1767, %v1741, 0
  %v1864 = vsel %vm1767, %v1742, 0
  %1866 = vmatprep.subr.mxu0 0.0
  %1867 = vmatpush1.msra.mxu0 %v1743
  %1868 = vmatprep.subr.mxu0 0.0
  %1869 = vmatpush1.msra.mxu0 %v1744
  %1870 = vmatprep.subr.mxu0 0.0
  %1871 = vmatpush1.msra.mxu0 %v1745
  %1872 = vmatprep.subr.mxu0 0.0
  %1873 = vmatpush1.msra.mxu0 %v1746
  %1874 = vmatprep.subr.mxu0 0.0
  %1875 = vmatpush1.msra.mxu0 %v1747
  %1876 = vmatprep.subr.mxu0 0.0
  %1877 = vmatpush1.msra.mxu0 %v1748
  %1878 = vmatprep.subr.mxu0 0.0
  %1879 = vmatpush1.msra.mxu0 %v1749
  %1880 = vmatprep.subr.mxu0 0.0
  %1881 = vmatpush1.msra.mxu0 %v1750
  %1882 = vmatprep.subr.mxu0 0.0
  %1883 = vmatpush1.msra.mxu0 %v1751
  %1884 = vmatprep.subr.mxu0 0.0
  %1885 = vmatpush1.msra.mxu0 %v1752
  %1886 = vmatprep.subr.mxu0 0.0
  %1887 = vmatpush1.msra.mxu0 0.0
  %1888 = vmatprep.subr.mxu0 0.0
  %1889 = vmatpush1.msra.mxu0 0.0
  %1890 = vmatprep.subr.mxu0 0.0
  %1891 = vmatpush1.msra.mxu0 0.0
  %1892 = vmatprep.subr.mxu0 0.0
  %1893 = vmatpush1.msra.mxu0 0.0
  %1894 = vmatprep.subr.mxu0 0.0
  %1895 = vmatpush1.msra.mxu0 0.0
  %1896 = vmatprep.subr.mxu0 0.0
  %1897 = vmatpush1.msra.mxu0 0.0
  %1898 = vmatprep.subr.mxu0 0.0
  %1899 = vmatpush1.msra.mxu0 0.0
  %1900 = vmatprep.subr.mxu0 0.0
  %1901 = vmatpush1.msra.mxu0 0.0
  %1902 = vmatprep.subr.mxu0 0.0
  %1903 = vmatpush1.msra.mxu0 0.0
  %1904 = vmatprep.subr.mxu0 0.0
  %1905 = vmatpush1.msra.mxu0 0.0
  %1906 = vmatprep.subr.mxu0 0.0
  %1907 = vmatpush1.msra.mxu0 0.0
  %1908 = vmatprep.subr.mxu0 0.0
  %1909 = vmatpush1.msra.mxu0 0.0
  %1910 = vmatprep.subr.mxu0 0.0
  %1911 = vmatpush1.msra.mxu0 0.0
  %1912 = vmatprep.subr.mxu0 0.0
  %1913 = vmatpush1.msra.mxu0 0.0
  %1914 = vmatprep.subr.mxu0 0.0
  %1915 = vmatpush1.msra.mxu0 0.0
  %1916 = vmatprep.subr.mxu0 0.0
  %1917 = vmatpush1.msra.mxu0 0.0
  %1918 = vmatprep.subr.mxu0 0.0
  %1919 = vmatpush1.msra.mxu0 0.0
  %1920 = vmatprep.subr.mxu0 0.0
  %1921 = vmatpush1.msra.mxu0 0.0
  %1922 = vmatprep.subr.mxu0 0.0
  %1923 = vmatpush1.msra.mxu0 0.0
  %1924 = vmatprep.subr.mxu0 0.0
  %1925 = vmatpush1.msra.mxu0 0.0
  %1926 = vmatprep.subr.mxu0 0.0
  %1927 = vmatpush1.msra.mxu0 0.0
  %1928 = vmatprep.subr.mxu0 0.0
  %1929 = vmatpush1.msra.mxu0 0.0
  %1930 = vmatprep.mubr.f32.mxu0 0.0
  %1931 = vmatmul.mubr.f32.gmra.mrb[0].mxu0 %v1858
  %v1932 = vpop.f32.mrb[0].mxu0
  %v1933 = vadd.f32 %v1844, %v1932
  %v1934 = vpop.f32.mrb[0].mxu0
  %1935 = vmatprep.mubr.f32.mxu0 0.0
  %1936 = vmatmul.mubr.f32.gmra.mrb[0].mxu0 %v1861
  %v1937 = vpop.f32.mrb[0].mxu0
  %v1938 = vadd.f32 %v1849, %v1937
  %v1939 = vpop.f32.mrb[0].mxu0
  %1940 = vmatprep.mubr.f32.mxu0 0.0
  %1941 = vmatmul.mubr.f32.gmra.mrb[0].mxu0 %v1864
  %v1942 = vpop.f32.mrb[0].mxu0
  %v1943 = vadd.f32 %v1854, %v1942
  %v1944 = vpop.f32.mrb[0].mxu0
  %1945 = vdwg.mxu0
  %v1946 = vld [vmem:[#allocation3 + $0x2] sm:$0xff]
  %v1947 = vld [vmem:[#allocation3 + $0xa] sm:$0xff]
  %v1948 = vld [vmem:[#allocation3 + $0x12] sm:$0x3]
  %s1949 = scalar_lea.vmem %s7, 160
  %v1950 = vld [vmem:[%s1949] sm:$0xff]
  %v1951 = vld [vmem:[%s1949 + $0x8] sm:$0xff]
  %v1952 = vld [vmem:[%s1949 + $0x10] sm:$0xff]
  %v1953 = vld [vmem:[%s1949 + $0x18] sm:$0xff]
  %v1954 = vld [vmem:[%s1949 + $0x20] sm:$0xff]
  %v1955 = vld [vmem:[%s1949 + $0x28] sm:$0xff]
  %v1956 = vld [vmem:[%s1949 + $0x30] sm:$0xff]
  %v1957 = vld [vmem:[%s1949 + $0x38] sm:$0xff]
  %v1958 = vld [vmem:[%s1949 + $0x40] sm:$0xff]
  %v1959 = vld [vmem:[%s1949 + $0x48] sm:$0xff]
  %v1961 = vsel %vm1767, %v1946, 0
  %v1964 = vsel %vm1767, %v1947, 0
  %v1967 = vsel %vm1767, %v1948, 0
  %1969 = vmatprep.subr.mxu0 0.0
  %1970 = vmatpush1.msra.mxu0 %v1950
  %1971 = vmatprep.subr.mxu0 0.0
  %1972 = vmatpush1.msra.mxu0 %v1951
  %1973 = vmatprep.subr.mxu0 0.0
  %1974 = vmatpush1.msra.mxu0 %v1952
  %1975 = vmatprep.subr.mxu0 0.0
  %1976 = vmatpush1.msra.mxu0 %v1953
  %1977 = vmatprep.subr.mxu0 0.0
  %1978 = vmatpush1.msra.mxu0 %v1954
  %1979 = vmatprep.subr.mxu0 0.0
  %1980 = vmatpush1.msra.mxu0 %v1955
  %1981 = vmatprep.subr.mxu0 0.0
  %1982 = vmatpush1.msra.mxu0 %v1956
  %1983 = vmatprep.subr.mxu0 0.0
  %1984 = vmatpush1.msra.mxu0 %v1957
  %1985 = vmatprep.subr.mxu0 0.0
  %1986 = vmatpush1.msra.mxu0 %v1958
  %1987 = vmatprep.subr.mxu0 0.0
  %1988 = vmatpush1.msra.mxu0 %v1959
  %1989 = vmatprep.subr.mxu0 0.0
  %1990 = vmatpush1.msra.mxu0 0.0
  %1991 = vmatprep.subr.mxu0 0.0
  %1992 = vmatpush1.msra.mxu0 0.0
  %1993 = vmatprep.subr.mxu0 0.0
  %1994 = vmatpush1.msra.mxu0 0.0
  %1995 = vmatprep.subr.mxu0 0.0
  %1996 = vmatpush1.msra.mxu0 0.0
  %1997 = vmatprep.subr.mxu0 0.0
  %1998 = vmatpush1.msra.mxu0 0.0
  %1999 = vmatprep.subr.mxu0 0.0
  %2000 = vmatpush1.msra.mxu0 0.0
  %2001 = vmatprep.subr.mxu0 0.0
  %2002 = vmatpush1.msra.mxu0 0.0
  %2003 = vmatprep.subr.mxu0 0.0
  %2004 = vmatpush1.msra.mxu0 0.0
  %2005 = vmatprep.subr.mxu0 0.0
  %2006 = vmatpush1.msra.mxu0 0.0
  %2007 = vmatprep.subr.mxu0 0.0
  %2008 = vmatpush1.msra.mxu0 0.0
  %2009 = vmatprep.subr.mxu0 0.0
  %2010 = vmatpush1.msra.mxu0 0.0
  %2011 = vmatprep.subr.mxu0 0.0
  %2012 = vmatpush1.msra.mxu0 0.0
  %2013 = vmatprep.subr.mxu0 0.0
  %2014 = vmatpush1.msra.mxu0 0.0
  %2015 = vmatprep.subr.mxu0 0.0
  %2016 = vmatpush1.msra.mxu0 0.0
  %2017 = vmatprep.subr.mxu0 0.0
  %2018 = vmatpush1.msra.mxu0 0.0
  %2019 = vmatprep.subr.mxu0 0.0
  %2020 = vmatpush1.msra.mxu0 0.0
  %2021 = vmatprep.subr.mxu0 0.0
  %2022 = vmatpush1.msra.mxu0 0.0
  %2023 = vmatprep.subr.mxu0 0.0
  %2024 = vmatpush1.msra.mxu0 0.0
  %2025 = vmatprep.subr.mxu0 0.0
  %2026 = vmatpush1.msra.mxu0 0.0
  %2027 = vmatprep.subr.mxu0 0.0
  %2028 = vmatpush1.msra.mxu0 0.0
  %2029 = vmatprep.subr.mxu0 0.0
  %2030 = vmatpush1.msra.mxu0 0.0
  %2031 = vmatprep.subr.mxu0 0.0
  %2032 = vmatpush1.msra.mxu0 0.0
  %2033 = vmatprep.mubr.f32.mxu0 0.0
  %2034 = vmatmul.mubr.f32.gmra.mrb[0].mxu0 %v1961
  %v2035 = vpop.f32.mrb[0].mxu0
  %v2036 = vadd.f32 0.0, %v2035
  %v2037 = vpop.f32.mrb[0].mxu0
  %2038 = vmatprep.mubr.f32.mxu0 0.0
  %2039 = vmatmul.mubr.f32.gmra.mrb[0].mxu0 %v1964
  %v2040 = vpop.f32.mrb[0].mxu0
  %v2041 = vadd.f32 0.0, %v2040
  %v2042 = vpop.f32.mrb[0].mxu0
  %2043 = vmatprep.mubr.f32.mxu0 0.0
  %2044 = vmatmul.mubr.f32.gmra.mrb[0].mxu0 %v1967
  %v2045 = vpop.f32.mrb[0].mxu0
  %v2046 = vadd.f32 0.0, %v2045
  %v2047 = vpop.f32.mrb[0].mxu0
  %2048 = vdwg.mxu0
  %v2049 = vadd.f32 %v1933, %v2036
  %v2050 = vadd.f32 %v1938, %v2041
  %v2051 = vadd.f32 %v1943, %v2046
  %v2052 = vxor.u32 %v2049, 2147483648
  %v2053 = vxor.u32 %v2050, 2147483648
  %v2054 = vxor.u32 %v2051, 2147483648
  %v2055 = vmul.f32 %v2052, 1.442695
  %v2056 = vpow.pop %v2055
  %v2057 = vmul.f32 %v2053, 1.442695
  %v2058 = vpow.pop %v2057
  %v2059 = vmul.f32 %v2054, 1.442695
  %v2060 = vpow.pop %v2059
  %v2061 = vadd.f32 %v2056, 1.0
  %v2062 = vadd.f32 %v2058, 1.0
  %v2063 = vadd.f32 %v2060, 1.0
  %v2064 = vrcp.pop %v2061
  %v2065 = vmul.f32 1.0, %v2064
  %v2066 = vrcp.pop %v2062
  %v2067 = vmul.f32 1.0, %v2066
  %v2068 = vrcp.pop %v2063
  %v2069 = vmul.f32 1.0, %v2068
  %v2070 = vmul.f32 %v2049, %v2065
  %v2071 = vmul.f32 %v2050, %v2067
  %v2072 = vmul.f32 %v2051, %v2069
  %v2073 = vld [vmem:[%s8] sm:$0x1]
  %v2075 = vlaneseq
  %v2076 = vshrl.u32 %v2075, 7
  %v2077 = vsub.s32 0, %v2076
  %v2078 = vrot.slane %v2073, %v2077
  %v2080 = vmul.f32 %v2070, %v2078
  %v2081 = vmul.f32 %v2071, %v2078
  %v2082 = vmul.f32 %v2072, %v2078
  %v2083 = vld [vmem:[%s9] sm:$0x1]
  %v2085 = vlaneseq
  %v2086 = vshrl.u32 %v2085, 7
  %v2087 = vsub.s32 0, %v2086
  %v2088 = vrot.slane %v2083, %v2087
  %v2090 = vadd.f32 %v2080, %v2088
  %v2091 = vadd.f32 %v2081, %v2088
  %v2092 = vadd.f32 %v2082, %v2088
  %v2093 = vadd.f32 %v1406, %v2090
  %v2094 = vxor.u32 %v2093, 2147483648
  %v2095 = vmul.f32 %v2094, 1.442695
  %v2096 = vpow.pop %v2095
  %v2097 = vadd.f32 %v2096, 1.0
  %v2098 = vrcp.pop %v2097
  %v2099 = vmul.f32 1.0, %v2098
  %v2100 = vmul.f32 %v2093, %v2099
  %v2103 = vrot.slane %v2091, 2
  %v2104 = vrot.slane %v2092, 2
  %v2105 = vsel %vm176, %v2103, %v2104
  %v2107 = vadd.f32 %v1734, %v2105
  %v2108 = vxor.u32 %v2107, 2147483648
  %v2109 = vmul.f32 %v2108, 1.442695
  %v2110 = vpow.pop %v2109
  %v2111 = vadd.f32 %v2110, 1.0
  %v2112 = vrcp.pop %v2111
  %v2113 = vmul.f32 1.0, %v2112
  %v2114 = vmul.f32 %v2107, %v2113
  %v2115 = vld [vmem:[%s10] sm:$0xf]
  %v2117 = vsel %vm59, %v2115, 0
  %2119 = vmatprep.subr.mxu0 0.0
  %2120 = vmatpush1.msra.mxu0 %v2100
  %2121 = vmatprep.subr.mxu0 0.0
  %2122 = vmatpush1.msra.mxu0 0.0
  %2123 = vmatprep.subr.mxu0 0.0
  %2124 = vmatpush1.msra.mxu0 0.0
  %2125 = vmatprep.subr.mxu0 0.0
  %2126 = vmatpush1.msra.mxu0 0.0
  %2127 = vmatprep.subr.mxu0 0.0
  %2128 = vmatpush1.msra.mxu0 0.0
  %2129 = vmatprep.subr.mxu0 0.0
  %2130 = vmatpush1.msra.mxu0 0.0
  %2131 = vmatprep.subr.mxu0 0.0
  %2132 = vmatpush1.msra.mxu0 0.0
  %2133 = vmatprep.subr.mxu0 0.0
  %2134 = vmatpush1.msra.mxu0 0.0
  %2135 = vmatprep.subr.mxu0 0.0
  %2136 = vmatpush1.msra.mxu0 0.0
  %2137 = vmatprep.subr.mxu0 0.0
  %2138 = vmatpush1.msra.mxu0 0.0
  %2139 = vmatprep.subr.mxu0 0.0
  %2140 = vmatpush1.msra.mxu0 0.0
  %2141 = vmatprep.subr.mxu0 0.0
  %2142 = vmatpush1.msra.mxu0 0.0
  %2143 = vmatprep.subr.mxu0 0.0
  %2144 = vmatpush1.msra.mxu0 0.0
  %2145 = vmatprep.subr.mxu0 0.0
  %2146 = vmatpush1.msra.mxu0 0.0
  %2147 = vmatprep.subr.mxu0 0.0
  %2148 = vmatpush1.msra.mxu0 0.0
  %2149 = vmatprep.subr.mxu0 0.0
  %2150 = vmatpush1.msra.mxu0 0.0
  %2151 = vmatprep.subr.mxu0 0.0
  %2152 = vmatpush1.msra.mxu0 0.0
  %2153 = vmatprep.subr.mxu0 0.0
  %2154 = vmatpush1.msra.mxu0 0.0
  %2155 = vmatprep.subr.mxu0 0.0
  %2156 = vmatpush1.msra.mxu0 0.0
  %2157 = vmatprep.subr.mxu0 0.0
  %2158 = vmatpush1.msra.mxu0 0.0
  %2159 = vmatprep.subr.mxu0 0.0
  %2160 = vmatpush1.msra.mxu0 0.0
  %2161 = vmatprep.subr.mxu0 0.0
  %2162 = vmatpush1.msra.mxu0 0.0
  %2163 = vmatprep.subr.mxu0 0.0
  %2164 = vmatpush1.msra.mxu0 0.0
  %2165 = vmatprep.subr.mxu0 0.0
  %2166 = vmatpush1.msra.mxu0 0.0
  %2167 = vmatprep.subr.mxu0 0.0
  %2168 = vmatpush1.msra.mxu0 0.0
  %2169 = vmatprep.subr.mxu0 0.0
  %2170 = vmatpush1.msra.mxu0 0.0
  %2171 = vmatprep.subr.mxu0 0.0
  %2172 = vmatpush1.msra.mxu0 0.0
  %2173 = vmatprep.subr.mxu0 0.0
  %2174 = vmatpush1.msra.mxu0 0.0
  %2175 = vmatprep.subr.mxu0 0.0
  %2176 = vmatpush1.msra.mxu0 0.0
  %2177 = vmatprep.subr.mxu0 0.0
  %2178 = vmatpush1.msra.mxu0 0.0
  %2179 = vmatprep.subr.mxu0 0.0
  %2180 = vmatpush1.msra.mxu0 0.0
  %2181 = vmatprep.subr.mxu0 0.0
  %2182 = vmatpush1.msra.mxu0 0.0
  %2183 = vmatprep.mubr.f32.mxu0 0.0
  %2184 = vmatmul.mubr.f32.gmra.mrb[0].mxu0 %v2117
  %v2185 = vpop.f32.mrb[0].mxu0
  %v2186 = vadd.f32 0.0, %v2185
  %v2187 = vpop.f32.mrb[0].mxu0
  %2188 = vdwg.mxu0
  %s2189 = scalar_lea.vmem %s10, 4
  %v2190 = vld [vmem:[%s2189] sm:$0xf]
  %v2192 = vsel %vm59, %v2190, 0
  %2194 = vmatprep.subr.mxu0 0.0
  %2195 = vmatpush1.msra.mxu0 %v2100
  %2196 = vmatprep.subr.mxu0 0.0
  %2197 = vmatpush1.msra.mxu0 0.0
  %2198 = vmatprep.subr.mxu0 0.0
  %2199 = vmatpush1.msra.mxu0 0.0
  %2200 = vmatprep.subr.mxu0 0.0
  %2201 = vmatpush1.msra.mxu0 0.0
  %2202 = vmatprep.subr.mxu0 0.0
  %2203 = vmatpush1.msra.mxu0 0.0
  %2204 = vmatprep.subr.mxu0 0.0
  %2205 = vmatpush1.msra.mxu0 0.0
  %2206 = vmatprep.subr.mxu0 0.0
  %2207 = vmatpush1.msra.mxu0 0.0
  %2208 = vmatprep.subr.mxu0 0.0
  %2209 = vmatpush1.msra.mxu0 0.0
  %2210 = vmatprep.subr.mxu0 0.0
  %2211 = vmatpush1.msra.mxu0 0.0
  %2212 = vmatprep.subr.mxu0 0.0
  %2213 = vmatpush1.msra.mxu0 0.0
  %2214 = vmatprep.subr.mxu0 0.0
  %2215 = vmatpush1.msra.mxu0 0.0
  %2216 = vmatprep.subr.mxu0 0.0
  %2217 = vmatpush1.msra.mxu0 0.0
  %2218 = vmatprep.subr.mxu0 0.0
  %2219 = vmatpush1.msra.mxu0 0.0
  %2220 = vmatprep.subr.mxu0 0.0
  %2221 = vmatpush1.msra.mxu0 0.0
  %2222 = vmatprep.subr.mxu0 0.0
  %2223 = vmatpush1.msra.mxu0 0.0
  %2224 = vmatprep.subr.mxu0 0.0
  %2225 = vmatpush1.msra.mxu0 0.0
  %2226 = vmatprep.subr.mxu0 0.0
  %2227 = vmatpush1.msra.mxu0 0.0
  %2228 = vmatprep.subr.mxu0 0.0
  %2229 = vmatpush1.msra.mxu0 0.0
  %2230 = vmatprep.subr.mxu0 0.0
  %2231 = vmatpush1.msra.mxu0 0.0
  %2232 = vmatprep.subr.mxu0 0.0
  %2233 = vmatpush1.msra.mxu0 0.0
  %2234 = vmatprep.subr.mxu0 0.0
  %2235 = vmatpush1.msra.mxu0 0.0
  %2236 = vmatprep.subr.mxu0 0.0
  %2237 = vmatpush1.msra.mxu0 0.0
  %2238 = vmatprep.subr.mxu0 0.0
  %2239 = vmatpush1.msra.mxu0 0.0
  %2240 = vmatprep.subr.mxu0 0.0
  %2241 = vmatpush1.msra.mxu0 0.0
  %2242 = vmatprep.subr.mxu0 0.0
  %2243 = vmatpush1.msra.mxu0 0.0
  %2244 = vmatprep.subr.mxu0 0.0
  %2245 = vmatpush1.msra.mxu0 0.0
  %2246 = vmatprep.subr.mxu0 0.0
  %2247 = vmatpush1.msra.mxu0 0.0
  %2248 = vmatprep.subr.mxu0 0.0
  %2249 = vmatpush1.msra.mxu0 0.0
  %2250 = vmatprep.subr.mxu0 0.0
  %2251 = vmatpush1.msra.mxu0 0.0
  %2252 = vmatprep.subr.mxu0 0.0
  %2253 = vmatpush1.msra.mxu0 0.0
  %2254 = vmatprep.subr.mxu0 0.0
  %2255 = vmatpush1.msra.mxu0 0.0
  %2256 = vmatprep.subr.mxu0 0.0
  %2257 = vmatpush1.msra.mxu0 0.0
  %2258 = vmatprep.mubr.f32.mxu0 0.0
  %2259 = vmatmul.mubr.f32.gmra.mrb[0].mxu0 %v2192
  %v2260 = vpop.f32.mrb[0].mxu0
  %v2261 = vadd.f32 0.0, %v2260
  %v2262 = vpop.f32.mrb[0].mxu0
  %2263 = vdwg.mxu0
  %v2264 = vmax.f32 %v2186, %v2261
  %v2265 = vld [vmem:[%s11] sm:$0xff]
  %v2266 = vld [vmem:[%s11 + $0x8] sm:$0xff]
  %v2267 = vld [vmem:[%s11 + $0x10] sm:$0xff]
  %v2268 = vld [vmem:[%s11 + $0x18] sm:$0xff]
  %v2269 = vld [vmem:[%s11 + $0x20] sm:$0xff]
  %v2270 = vld [vmem:[%s11 + $0x28] sm:$0xff]
  %v2271 = vld [vmem:[%s11 + $0x30] sm:$0xff]
  %v2272 = vld [vmem:[%s11 + $0x38] sm:$0xff]
  %vm2273 = vcmask 523264
  %v2275 = vsel %vm2273, %v2264, 0
  %2277 = vmatprep.subr.mxu0 0.0
  %2278 = vmatpush1.msra.mxu0 %v2265
  %2279 = vmatprep.subr.mxu0 0.0
  %2280 = vmatpush1.msra.mxu0 %v2266
  %2281 = vmatprep.subr.mxu0 0.0
  %2282 = vmatpush1.msra.mxu0 %v2267
  %2283 = vmatprep.subr.mxu0 0.0
  %2284 = vmatpush1.msra.mxu0 %v2268
  %2285 = vmatprep.subr.mxu0 0.0
  %2286 = vmatpush1.msra.mxu0 %v2269
  %2287 = vmatprep.subr.mxu0 0.0
  %2288 = vmatpush1.msra.mxu0 %v2270
  %2289 = vmatprep.subr.mxu0 0.0
  %2290 = vmatpush1.msra.mxu0 %v2271
  %2291 = vmatprep.subr.mxu0 0.0
  %2292 = vmatpush1.msra.mxu0 %v2272
  %2293 = vmatprep.subr.mxu0 0.0
  %2294 = vmatpush1.msra.mxu0 0.0
  %2295 = vmatprep.subr.mxu0 0.0
  %2296 = vmatpush1.msra.mxu0 0.0
  %2297 = vmatprep.subr.mxu0 0.0
  %2298 = vmatpush1.msra.mxu0 0.0
  %2299 = vmatprep.subr.mxu0 0.0
  %2300 = vmatpush1.msra.mxu0 0.0
  %2301 = vmatprep.subr.mxu0 0.0
  %2302 = vmatpush1.msra.mxu0 0.0
  %2303 = vmatprep.subr.mxu0 0.0
  %2304 = vmatpush1.msra.mxu0 0.0
  %2305 = vmatprep.subr.mxu0 0.0
  %2306 = vmatpush1.msra.mxu0 0.0
  %2307 = vmatprep.subr.mxu0 0.0
  %2308 = vmatpush1.msra.mxu0 0.0
  %2309 = vmatprep.subr.mxu0 0.0
  %2310 = vmatpush1.msra.mxu0 0.0
  %2311 = vmatprep.subr.mxu0 0.0
  %2312 = vmatpush1.msra.mxu0 0.0
  %2313 = vmatprep.subr.mxu0 0.0
  %2314 = vmatpush1.msra.mxu0 0.0
  %2315 = vmatprep.subr.mxu0 0.0
  %2316 = vmatpush1.msra.mxu0 0.0
  %2317 = vmatprep.subr.mxu0 0.0
  %2318 = vmatpush1.msra.mxu0 0.0
  %2319 = vmatprep.subr.mxu0 0.0
  %2320 = vmatpush1.msra.mxu0 0.0
  %2321 = vmatprep.subr.mxu0 0.0
  %2322 = vmatpush1.msra.mxu0 0.0
  %2323 = vmatprep.subr.mxu0 0.0
  %2324 = vmatpush1.msra.mxu0 0.0
  %2325 = vmatprep.subr.mxu0 0.0
  %2326 = vmatpush1.msra.mxu0 0.0
  %2327 = vmatprep.subr.mxu0 0.0
  %2328 = vmatpush1.msra.mxu0 0.0
  %2329 = vmatprep.subr.mxu0 0.0
  %2330 = vmatpush1.msra.mxu0 0.0
  %2331 = vmatprep.subr.mxu0 0.0
  %2332 = vmatpush1.msra.mxu0 0.0
  %2333 = vmatprep.subr.mxu0 0.0
  %2334 = vmatpush1.msra.mxu0 0.0
  %2335 = vmatprep.subr.mxu0 0.0
  %2336 = vmatpush1.msra.mxu0 0.0
  %2337 = vmatprep.subr.mxu0 0.0
  %2338 = vmatpush1.msra.mxu0 0.0
  %2339 = vmatprep.subr.mxu0 0.0
  %2340 = vmatpush1.msra.mxu0 0.0
  %2341 = vmatprep.mubr.f32.mxu0 0.0
  %2342 = vmatmul.mubr.f32.gmra.mrb[0].mxu0 %v2275
  %v2343 = vpop.f32.mrb[0].mxu0
  %v2344 = vadd.f32 0.0, %v2343
  %v2345 = vpop.f32.mrb[0].mxu0
  %2346 = vdwg.mxu0
  %s2347 = scalar_lea.vmem %s11, 64
  %v2348 = vld [vmem:[%s2347] sm:$0xff]
  %v2349 = vld [vmem:[%s2347 + $0x8] sm:$0xff]
  %v2350 = vld [vmem:[%s2347 + $0x10] sm:$0xff]
  %v2351 = vld [vmem:[%s2347 + $0x18] sm:$0xff]
  %v2352 = vld [vmem:[%s2347 + $0x20] sm:$0xff]
  %v2353 = vld [vmem:[%s2347 + $0x28] sm:$0xff]
  %v2354 = vld [vmem:[%s2347 + $0x30] sm:$0xff]
  %v2355 = vld [vmem:[%s2347 + $0x38] sm:$0xff]
  %2356 = vmatprep.subr.mxu0 0.0
  %2357 = vmatpush1.msra.mxu0 %v2348
  %2358 = vmatprep.subr.mxu0 0.0
  %2359 = vmatpush1.msra.mxu0 %v2349
  %2360 = vmatprep.subr.mxu0 0.0
  %2361 = vmatpush1.msra.mxu0 %v2350
  %2362 = vmatprep.subr.mxu0 0.0
  %2363 = vmatpush1.msra.mxu0 %v2351
  %2364 = vmatprep.subr.mxu0 0.0
  %2365 = vmatpush1.msra.mxu0 %v2352
  %2366 = vmatprep.subr.mxu0 0.0
  %2367 = vmatpush1.msra.mxu0 %v2353
  %2368 = vmatprep.subr.mxu0 0.0
  %2369 = vmatpush1.msra.mxu0 %v2354
  %2370 = vmatprep.subr.mxu0 0.0
  %2371 = vmatpush1.msra.mxu0 %v2355
  %2372 = vmatprep.subr.mxu0 0.0
  %2373 = vmatpush1.msra.mxu0 0.0
  %2374 = vmatprep.subr.mxu0 0.0
  %2375 = vmatpush1.msra.mxu0 0.0
  %2376 = vmatprep.subr.mxu0 0.0
  %2377 = vmatpush1.msra.mxu0 0.0
  %2378 = vmatprep.subr.mxu0 0.0
  %2379 = vmatpush1.msra.mxu0 0.0
  %2380 = vmatprep.subr.mxu0 0.0
  %2381 = vmatpush1.msra.mxu0 0.0
  %2382 = vmatprep.subr.mxu0 0.0
  %2383 = vmatpush1.msra.mxu0 0.0
  %2384 = vmatprep.subr.mxu0 0.0
  %2385 = vmatpush1.msra.mxu0 0.0
  %2386 = vmatprep.subr.mxu0 0.0
  %2387 = vmatpush1.msra.mxu0 0.0
  %2388 = vmatprep.subr.mxu0 0.0
  %2389 = vmatpush1.msra.mxu0 0.0
  %2390 = vmatprep.subr.mxu0 0.0
  %2391 = vmatpush1.msra.mxu0 0.0
  %2392 = vmatprep.subr.mxu0 0.0
  %2393 = vmatpush1.msra.mxu0 0.0
  %2394 = vmatprep.subr.mxu0 0.0
  %2395 = vmatpush1.msra.mxu0 0.0
  %2396 = vmatprep.subr.mxu0 0.0
  %2397 = vmatpush1.msra.mxu0 0.0
  %2398 = vmatprep.subr.mxu0 0.0
  %2399 = vmatpush1.msra.mxu0 0.0
  %2400 = vmatprep.subr.mxu0 0.0
  %2401 = vmatpush1.msra.mxu0 0.0
  %2402 = vmatprep.subr.mxu0 0.0
  %2403 = vmatpush1.msra.mxu0 0.0
  %2404 = vmatprep.subr.mxu0 0.0
  %2405 = vmatpush1.msra.mxu0 0.0
  %2406 = vmatprep.subr.mxu0 0.0
  %2407 = vmatpush1.msra.mxu0 0.0
  %2408 = vmatprep.subr.mxu0 0.0
  %2409 = vmatpush1.msra.mxu0 0.0
  %2410 = vmatprep.subr.mxu0 0.0
  %2411 = vmatpush1.msra.mxu0 0.0
  %2412 = vmatprep.subr.mxu0 0.0
  %2413 = vmatpush1.msra.mxu0 0.0
  %2414 = vmatprep.subr.mxu0 0.0
  %2415 = vmatpush1.msra.mxu0 0.0
  %2416 = vmatprep.subr.mxu0 0.0
  %2417 = vmatpush1.msra.mxu0 0.0
  %2418 = vmatprep.subr.mxu0 0.0
  %2419 = vmatpush1.msra.mxu0 0.0
  %2420 = vmatprep.mubr.f32.mxu0 0.0
  %2421 = vmatmul.mubr.f32.gmra.mrb[0].mxu0 %v2275
  %v2422 = vpop.f32.mrb[0].mxu0
  %v2423 = vadd.f32 0.0, %v2422
  %v2424 = vpop.f32.mrb[0].mxu0
  %2425 = vdwg.mxu0
  %v2426 = vmax.f32 %v2344, %v2423
  %2428 = vrot.lane.b32.xlu0 %v2426, 8
  %v2429 = vpop.permute.xlu0 %2428
  %vm2431 = vcmask 322624
  %2432 = vst.msk [vmem:[#allocation4 + $0x1] sm:$0xf] %vm2431, %v2429
  %v2433 = vld [vmem:[%s10] sm:$0xf]
  %v2435 = vsel %vm59, %v2433, 0
  %2437 = vmatprep.subr.mxu0 0.0
  %2438 = vmatpush1.msra.mxu0 %v2114
  %2439 = vmatprep.subr.mxu0 0.0
  %2440 = vmatpush1.msra.mxu0 0.0
  %2441 = vmatprep.subr.mxu0 0.0
  %2442 = vmatpush1.msra.mxu0 0.0
  %2443 = vmatprep.subr.mxu0 0.0
  %2444 = vmatpush1.msra.mxu0 0.0
  %2445 = vmatprep.subr.mxu0 0.0
  %2446 = vmatpush1.msra.mxu0 0.0
  %2447 = vmatprep.subr.mxu0 0.0
  %2448 = vmatpush1.msra.mxu0 0.0
  %2449 = vmatprep.subr.mxu0 0.0
  %2450 = vmatpush1.msra.mxu0 0.0
  %2451 = vmatprep.subr.mxu0 0.0
  %2452 = vmatpush1.msra.mxu0 0.0
  %2453 = vmatprep.subr.mxu0 0.0
  %2454 = vmatpush1.msra.mxu0 0.0
  %2455 = vmatprep.subr.mxu0 0.0
  %2456 = vmatpush1.msra.mxu0 0.0
  %2457 = vmatprep.subr.mxu0 0.0
  %2458 = vmatpush1.msra.mxu0 0.0
  %2459 = vmatprep.subr.mxu0 0.0
  %2460 = vmatpush1.msra.mxu0 0.0
  %2461 = vmatprep.subr.mxu0 0.0
  %2462 = vmatpush1.msra.mxu0 0.0
  %2463 = vmatprep.subr.mxu0 0.0
  %2464 = vmatpush1.msra.mxu0 0.0
  %2465 = vmatprep.subr.mxu0 0.0
  %2466 = vmatpush1.msra.mxu0 0.0
  %2467 = vmatprep.subr.mxu0 0.0
  %2468 = vmatpush1.msra.mxu0 0.0
  %2469 = vmatprep.subr.mxu0 0.0
  %2470 = vmatpush1.msra.mxu0 0.0
  %2471 = vmatprep.subr.mxu0 0.0
  %2472 = vmatpush1.msra.mxu0 0.0
  %2473 = vmatprep.subr.mxu0 0.0
  %2474 = vmatpush1.msra.mxu0 0.0
  %2475 = vmatprep.subr.mxu0 0.0
  %2476 = vmatpush1.msra.mxu0 0.0
  %2477 = vmatprep.subr.mxu0 0.0
  %2478 = vmatpush1.msra.mxu0 0.0
  %2479 = vmatprep.subr.mxu0 0.0
  %2480 = vmatpush1.msra.mxu0 0.0
  %2481 = vmatprep.subr.mxu0 0.0
  %2482 = vmatpush1.msra.mxu0 0.0
  %2483 = vmatprep.subr.mxu0 0.0
  %2484 = vmatpush1.msra.mxu0 0.0
  %2485 = vmatprep.subr.mxu0 0.0
  %2486 = vmatpush1.msra.mxu0 0.0
  %2487 = vmatprep.subr.mxu0 0.0
  %2488 = vmatpush1.msra.mxu0 0.0
  %2489 = vmatprep.subr.mxu0 0.0
  %2490 = vmatpush1.msra.mxu0 0.0
  %2491 = vmatprep.subr.mxu0 0.0
  %2492 = vmatpush1.msra.mxu0 0.0
  %2493 = vmatprep.subr.mxu0 0.0
  %2494 = vmatpush1.msra.mxu0 0.0
  %2495 = vmatprep.subr.mxu0 0.0
  %2496 = vmatpush1.msra.mxu0 0.0
  %2497 = vmatprep.subr.mxu0 0.0
  %2498 = vmatpush1.msra.mxu0 0.0
  %2499 = vmatprep.subr.mxu0 0.0
  %2500 = vmatpush1.msra.mxu0 0.0
  %2501 = vmatprep.mubr.f32.mxu0 0.0
  %2502 = vmatmul.mubr.f32.gmra.mrb[0].mxu0 %v2435
  %v2503 = vpop.f32.mrb[0].mxu0
  %v2504 = vadd.f32 0.0, %v2503
  %v2505 = vpop.f32.mrb[0].mxu0
  %2506 = vdwg.mxu0
  %v2507 = vld [vmem:[%s2189] sm:$0xf]
  %v2509 = vsel %vm59, %v2507, 0
  %2511 = vmatprep.subr.mxu0 0.0
  %2512 = vmatpush1.msra.mxu0 %v2114
  %2513 = vmatprep.subr.mxu0 0.0
  %2514 = vmatpush1.msra.mxu0 0.0
  %2515 = vmatprep.subr.mxu0 0.0
  %2516 = vmatpush1.msra.mxu0 0.0
  %2517 = vmatprep.subr.mxu0 0.0
  %2518 = vmatpush1.msra.mxu0 0.0
  %2519 = vmatprep.subr.mxu0 0.0
  %2520 = vmatpush1.msra.mxu0 0.0
  %2521 = vmatprep.subr.mxu0 0.0
  %2522 = vmatpush1.msra.mxu0 0.0
  %2523 = vmatprep.subr.mxu0 0.0
  %2524 = vmatpush1.msra.mxu0 0.0
  %2525 = vmatprep.subr.mxu0 0.0
  %2526 = vmatpush1.msra.mxu0 0.0
  %2527 = vmatprep.subr.mxu0 0.0
  %2528 = vmatpush1.msra.mxu0 0.0
  %2529 = vmatprep.subr.mxu0 0.0
  %2530 = vmatpush1.msra.mxu0 0.0
  %2531 = vmatprep.subr.mxu0 0.0
  %2532 = vmatpush1.msra.mxu0 0.0
  %2533 = vmatprep.subr.mxu0 0.0
  %2534 = vmatpush1.msra.mxu0 0.0
  %2535 = vmatprep.subr.mxu0 0.0
  %2536 = vmatpush1.msra.mxu0 0.0
  %2537 = vmatprep.subr.mxu0 0.0
  %2538 = vmatpush1.msra.mxu0 0.0
  %2539 = vmatprep.subr.mxu0 0.0
  %2540 = vmatpush1.msra.mxu0 0.0
  %2541 = vmatprep.subr.mxu0 0.0
  %2542 = vmatpush1.msra.mxu0 0.0
  %2543 = vmatprep.subr.mxu0 0.0
  %2544 = vmatpush1.msra.mxu0 0.0
  %2545 = vmatprep.subr.mxu0 0.0
  %2546 = vmatpush1.msra.mxu0 0.0
  %2547 = vmatprep.subr.mxu0 0.0
  %2548 = vmatpush1.msra.mxu0 0.0
  %2549 = vmatprep.subr.mxu0 0.0
  %2550 = vmatpush1.msra.mxu0 0.0
  %2551 = vmatprep.subr.mxu0 0.0
  %2552 = vmatpush1.msra.mxu0 0.0
  %2553 = vmatprep.subr.mxu0 0.0
  %2554 = vmatpush1.msra.mxu0 0.0
  %2555 = vmatprep.subr.mxu0 0.0
  %2556 = vmatpush1.msra.mxu0 0.0
  %2557 = vmatprep.subr.mxu0 0.0
  %2558 = vmatpush1.msra.mxu0 0.0
  %2559 = vmatprep.subr.mxu0 0.0
  %2560 = vmatpush1.msra.mxu0 0.0
  %2561 = vmatprep.subr.mxu0 0.0
  %2562 = vmatpush1.msra.mxu0 0.0
  %2563 = vmatprep.subr.mxu0 0.0
  %2564 = vmatpush1.msra.mxu0 0.0
  %2565 = vmatprep.subr.mxu0 0.0
  %2566 = vmatpush1.msra.mxu0 0.0
  %2567 = vmatprep.subr.mxu0 0.0
  %2568 = vmatpush1.msra.mxu0 0.0
  %2569 = vmatprep.subr.mxu0 0.0
  %2570 = vmatpush1.msra.mxu0 0.0
  %2571 = vmatprep.subr.mxu0 0.0
  %2572 = vmatpush1.msra.mxu0 0.0
  %2573 = vmatprep.subr.mxu0 0.0
  %2574 = vmatpush1.msra.mxu0 0.0
  %2575 = vmatprep.mubr.f32.mxu0 0.0
  %2576 = vmatmul.mubr.f32.gmra.mrb[0].mxu0 %v2509
  %v2577 = vpop.f32.mrb[0].mxu0
  %v2578 = vadd.f32 0.0, %v2577
  %v2579 = vpop.f32.mrb[0].mxu0
  %2580 = vdwg.mxu0
  %v2581 = vmax.f32 %v2504, %v2578
  %v2582 = vld [vmem:[%s11] sm:$0xff]
  %v2583 = vld [vmem:[%s11 + $0x8] sm:$0xff]
  %v2584 = vld [vmem:[%s11 + $0x10] sm:$0xff]
  %v2585 = vld [vmem:[%s11 + $0x18] sm:$0xff]
  %v2586 = vld [vmem:[%s11 + $0x20] sm:$0xff]
  %v2587 = vld [vmem:[%s11 + $0x28] sm:$0xff]
  %v2588 = vld [vmem:[%s11 + $0x30] sm:$0xff]
  %v2589 = vld [vmem:[%s11 + $0x38] sm:$0xff]
  %v2591 = vsel %vm2273, %v2581, 0
  %2593 = vmatprep.subr.mxu0 0.0
  %2594 = vmatpush1.msra.mxu0 %v2582
  %2595 = vmatprep.subr.mxu0 0.0
  %2596 = vmatpush1.msra.mxu0 %v2583
  %2597 = vmatprep.subr.mxu0 0.0
  %2598 = vmatpush1.msra.mxu0 %v2584
  %2599 = vmatprep.subr.mxu0 0.0
  %2600 = vmatpush1.msra.mxu0 %v2585
  %2601 = vmatprep.subr.mxu0 0.0
  %2602 = vmatpush1.msra.mxu0 %v2586
  %2603 = vmatprep.subr.mxu0 0.0
  %2604 = vmatpush1.msra.mxu0 %v2587
  %2605 = vmatprep.subr.mxu0 0.0
  %2606 = vmatpush1.msra.mxu0 %v2588
  %2607 = vmatprep.subr.mxu0 0.0
  %2608 = vmatpush1.msra.mxu0 %v2589
  %2609 = vmatprep.subr.mxu0 0.0
  %2610 = vmatpush1.msra.mxu0 0.0
  %2611 = vmatprep.subr.mxu0 0.0
  %2612 = vmatpush1.msra.mxu0 0.0
  %2613 = vmatprep.subr.mxu0 0.0
  %2614 = vmatpush1.msra.mxu0 0.0
  %2615 = vmatprep.subr.mxu0 0.0
  %2616 = vmatpush1.msra.mxu0 0.0
  %2617 = vmatprep.subr.mxu0 0.0
  %2618 = vmatpush1.msra.mxu0 0.0
  %2619 = vmatprep.subr.mxu0 0.0
  %2620 = vmatpush1.msra.mxu0 0.0
  %2621 = vmatprep.subr.mxu0 0.0
  %2622 = vmatpush1.msra.mxu0 0.0
  %2623 = vmatprep.subr.mxu0 0.0
  %2624 = vmatpush1.msra.mxu0 0.0
  %2625 = vmatprep.subr.mxu0 0.0
  %2626 = vmatpush1.msra.mxu0 0.0
  %2627 = vmatprep.subr.mxu0 0.0
  %2628 = vmatpush1.msra.mxu0 0.0
  %2629 = vmatprep.subr.mxu0 0.0
  %2630 = vmatpush1.msra.mxu0 0.0
  %2631 = vmatprep.subr.mxu0 0.0
  %2632 = vmatpush1.msra.mxu0 0.0
  %2633 = vmatprep.subr.mxu0 0.0
  %2634 = vmatpush1.msra.mxu0 0.0
  %2635 = vmatprep.subr.mxu0 0.0
  %2636 = vmatpush1.msra.mxu0 0.0
  %2637 = vmatprep.subr.mxu0 0.0
  %2638 = vmatpush1.msra.mxu0 0.0
  %2639 = vmatprep.subr.mxu0 0.0
  %2640 = vmatpush1.msra.mxu0 0.0
  %2641 = vmatprep.subr.mxu0 0.0
  %2642 = vmatpush1.msra.mxu0 0.0
  %2643 = vmatprep.subr.mxu0 0.0
  %2644 = vmatpush1.msra.mxu0 0.0
  %2645 = vmatprep.subr.mxu0 0.0
  %2646 = vmatpush1.msra.mxu0 0.0
  %2647 = vmatprep.subr.mxu0 0.0
  %2648 = vmatpush1.msra.mxu0 0.0
  %2649 = vmatprep.subr.mxu0 0.0
  %2650 = vmatpush1.msra.mxu0 0.0
  %2651 = vmatprep.subr.mxu0 0.0
  %2652 = vmatpush1.msra.mxu0 0.0
  %2653 = vmatprep.subr.mxu0 0.0
  %2654 = vmatpush1.msra.mxu0 0.0
  %2655 = vmatprep.subr.mxu0 0.0
  %2656 = vmatpush1.msra.mxu0 0.0
  %2657 = vmatprep.mubr.f32.mxu0 0.0
  %2658 = vmatmul.mubr.f32.gmra.mrb[0].mxu0 %v2591
  %v2659 = vpop.f32.mrb[0].mxu0
  %v2660 = vadd.f32 0.0, %v2659
  %v2661 = vpop.f32.mrb[0].mxu0
  %2662 = vdwg.mxu0
  %v2663 = vld [vmem:[%s2347] sm:$0xff]
  %v2664 = vld [vmem:[%s2347 + $0x8] sm:$0xff]
  %v2665 = vld [vmem:[%s2347 + $0x10] sm:$0xff]
  %v2666 = vld [vmem:[%s2347 + $0x18] sm:$0xff]
  %v2667 = vld [vmem:[%s2347 + $0x20] sm:$0xff]
  %v2668 = vld [vmem:[%s2347 + $0x28] sm:$0xff]
  %v2669 = vld [vmem:[%s2347 + $0x30] sm:$0xff]
  %v2670 = vld [vmem:[%s2347 + $0x38] sm:$0xff]
  %2671 = vmatprep.subr.mxu0 0.0
  %2672 = vmatpush1.msra.mxu0 %v2663
  %2673 = vmatprep.subr.mxu0 0.0
  %2674 = vmatpush1.msra.mxu0 %v2664
  %2675 = vmatprep.subr.mxu0 0.0
  %2676 = vmatpush1.msra.mxu0 %v2665
  %2677 = vmatprep.subr.mxu0 0.0
  %2678 = vmatpush1.msra.mxu0 %v2666
  %2679 = vmatprep.subr.mxu0 0.0
  %2680 = vmatpush1.msra.mxu0 %v2667
  %2681 = vmatprep.subr.mxu0 0.0
  %2682 = vmatpush1.msra.mxu0 %v2668
  %2683 = vmatprep.subr.mxu0 0.0
  %2684 = vmatpush1.msra.mxu0 %v2669
  %2685 = vmatprep.subr.mxu0 0.0
  %2686 = vmatpush1.msra.mxu0 %v2670
  %2687 = vmatprep.subr.mxu0 0.0
  %2688 = vmatpush1.msra.mxu0 0.0
  %2689 = vmatprep.subr.mxu0 0.0
  %2690 = vmatpush1.msra.mxu0 0.0
  %2691 = vmatprep.subr.mxu0 0.0
  %2692 = vmatpush1.msra.mxu0 0.0
  %2693 = vmatprep.subr.mxu0 0.0
  %2694 = vmatpush1.msra.mxu0 0.0
  %2695 = vmatprep.subr.mxu0 0.0
  %2696 = vmatpush1.msra.mxu0 0.0
  %2697 = vmatprep.subr.mxu0 0.0
  %2698 = vmatpush1.msra.mxu0 0.0
  %2699 = vmatprep.subr.mxu0 0.0
  %2700 = vmatpush1.msra.mxu0 0.0
  %2701 = vmatprep.subr.mxu0 0.0
  %2702 = vmatpush1.msra.mxu0 0.0
  %2703 = vmatprep.subr.mxu0 0.0
  %2704 = vmatpush1.msra.mxu0 0.0
  %2705 = vmatprep.subr.mxu0 0.0
  %2706 = vmatpush1.msra.mxu0 0.0
  %2707 = vmatprep.subr.mxu0 0.0
  %2708 = vmatpush1.msra.mxu0 0.0
  %2709 = vmatprep.subr.mxu0 0.0
  %2710 = vmatpush1.msra.mxu0 0.0
  %2711 = vmatprep.subr.mxu0 0.0
  %2712 = vmatpush1.msra.mxu0 0.0
  %2713 = vmatprep.subr.mxu0 0.0
  %2714 = vmatpush1.msra.mxu0 0.0
  %2715 = vmatprep.subr.mxu0 0.0
  %2716 = vmatpush1.msra.mxu0 0.0
  %2717 = vmatprep.subr.mxu0 0.0
  %2718 = vmatpush1.msra.mxu0 0.0
  %2719 = vmatprep.subr.mxu0 0.0
  %2720 = vmatpush1.msra.mxu0 0.0
  %2721 = vmatprep.subr.mxu0 0.0
  %2722 = vmatpush1.msra.mxu0 0.0
  %2723 = vmatprep.subr.mxu0 0.0
  %2724 = vmatpush1.msra.mxu0 0.0
  %2725 = vmatprep.subr.mxu0 0.0
  %2726 = vmatpush1.msra.mxu0 0.0
  %2727 = vmatprep.subr.mxu0 0.0
  %2728 = vmatpush1.msra.mxu0 0.0
  %2729 = vmatprep.subr.mxu0 0.0
  %2730 = vmatpush1.msra.mxu0 0.0
  %2731 = vmatprep.subr.mxu0 0.0
  %2732 = vmatpush1.msra.mxu0 0.0
  %2733 = vmatprep.subr.mxu0 0.0
  %2734 = vmatpush1.msra.mxu0 0.0
  %2735 = vmatprep.mubr.f32.mxu0 0.0
  %2736 = vmatmul.mubr.f32.gmra.mrb[0].mxu0 %v2591
  %v2737 = vpop.f32.mrb[0].mxu0
  %v2738 = vadd.f32 0.0, %v2737
  %v2739 = vpop.f32.mrb[0].mxu0
  %2740 = vdwg.mxu0
  %v2741 = vmax.f32 %v2660, %v2738
  %2743 = vrot.lane.b32.xlu0 %v2741, 8
  %v2744 = vpop.permute.xlu0 %2743
  %2746 = vst.msk [vmem:[#allocation4 + $0x7] sm:$0xf] %vm2431, %v2744
  %v2747 = vld [vmem:[#allocation4] sm:$0xff]
  %v2748 = vld [vmem:[#allocation4 + $0x8] sm:$0x3]
  %v2749 = vld [vmem:[%s12] sm:$0xff]
  %v2750 = vld [vmem:[%s12 + $0x8] sm:$0xff]
  %v2751 = vld [vmem:[%s12 + $0x10] sm:$0xff]
  %v2752 = vld [vmem:[%s12 + $0x18] sm:$0xff]
  %v2753 = vld [vmem:[%s12 + $0x20] sm:$0xff]
  %v2754 = vld [vmem:[%s12 + $0x28] sm:$0xff]
  %v2755 = vld [vmem:[#allocation4 + $0x1] sm:$0xff]
  %v2756 = vld [vmem:[#allocation4 + $0x9] sm:$0x3]
  %s2757 = scalar_lea.vmem %s12, 48
  %v2758 = vld [vmem:[%s2757] sm:$0xff]
  %v2759 = vld [vmem:[%s2757 + $0x8] sm:$0xff]
  %v2760 = vld [vmem:[%s2757 + $0x10] sm:$0xff]
  %v2761 = vld [vmem:[%s2757 + $0x18] sm:$0xff]
  %v2762 = vld [vmem:[%s2757 + $0x20] sm:$0xff]
  %v2763 = vld [vmem:[%s2757 + $0x28] sm:$0xff]
  %vm2764 = vcmask 392192
  %v2766 = vsel %vm2764, %v2755, 0
  %v2769 = vsel %vm2764, %v2756, 0
  %2771 = vmatprep.subr.mxu0 0.0
  %2772 = vmatpush1.msra.mxu0 %v2758
  %2773 = vmatprep.subr.mxu0 0.0
  %2774 = vmatpush1.msra.mxu0 %v2759
  %2775 = vmatprep.subr.mxu0 0.0
  %2776 = vmatpush1.msra.mxu0 %v2760
  %2777 = vmatprep.subr.mxu0 0.0
  %2778 = vmatpush1.msra.mxu0 %v2761
  %2779 = vmatprep.subr.mxu0 0.0
  %2780 = vmatpush1.msra.mxu0 %v2762
  %2781 = vmatprep.subr.mxu0 0.0
  %2782 = vmatpush1.msra.mxu0 %v2763
  %2783 = vmatprep.subr.mxu0 0.0
  %2784 = vmatpush1.msra.mxu0 0.0
  %2785 = vmatprep.subr.mxu0 0.0
  %2786 = vmatpush1.msra.mxu0 0.0
  %2787 = vmatprep.subr.mxu0 0.0
  %2788 = vmatpush1.msra.mxu0 0.0
  %2789 = vmatprep.subr.mxu0 0.0
  %2790 = vmatpush1.msra.mxu0 0.0
  %2791 = vmatprep.subr.mxu0 0.0
  %2792 = vmatpush1.msra.mxu0 0.0
  %2793 = vmatprep.subr.mxu0 0.0
  %2794 = vmatpush1.msra.mxu0 0.0
  %2795 = vmatprep.subr.mxu0 0.0
  %2796 = vmatpush1.msra.mxu0 0.0
  %2797 = vmatprep.subr.mxu0 0.0
  %2798 = vmatpush1.msra.mxu0 0.0
  %2799 = vmatprep.subr.mxu0 0.0
  %2800 = vmatpush1.msra.mxu0 0.0
  %2801 = vmatprep.subr.mxu0 0.0
  %2802 = vmatpush1.msra.mxu0 0.0
  %2803 = vmatprep.subr.mxu0 0.0
  %2804 = vmatpush1.msra.mxu0 0.0
  %2805 = vmatprep.subr.mxu0 0.0
  %2806 = vmatpush1.msra.mxu0 0.0
  %2807 = vmatprep.subr.mxu0 0.0
  %2808 = vmatpush1.msra.mxu0 0.0
  %2809 = vmatprep.subr.mxu0 0.0
  %2810 = vmatpush1.msra.mxu0 0.0
  %2811 = vmatprep.subr.mxu0 0.0
  %2812 = vmatpush1.msra.mxu0 0.0
  %2813 = vmatprep.subr.mxu0 0.0
  %2814 = vmatpush1.msra.mxu0 0.0
  %2815 = vmatprep.subr.mxu0 0.0
  %2816 = vmatpush1.msra.mxu0 0.0
  %2817 = vmatprep.subr.mxu0 0.0
  %2818 = vmatpush1.msra.mxu0 0.0
  %2819 = vmatprep.subr.mxu0 0.0
  %2820 = vmatpush1.msra.mxu0 0.0
  %2821 = vmatprep.subr.mxu0 0.0
  %2822 = vmatpush1.msra.mxu0 0.0
  %2823 = vmatprep.subr.mxu0 0.0
  %2824 = vmatpush1.msra.mxu0 0.0
  %2825 = vmatprep.subr.mxu0 0.0
  %2826 = vmatpush1.msra.mxu0 0.0
  %2827 = vmatprep.subr.mxu0 0.0
  %2828 = vmatpush1.msra.mxu0 0.0
  %2829 = vmatprep.subr.mxu0 0.0
  %2830 = vmatpush1.msra.mxu0 0.0
  %2831 = vmatprep.subr.mxu0 0.0
  %2832 = vmatpush1.msra.mxu0 0.0
  %2833 = vmatprep.subr.mxu0 0.0
  %2834 = vmatpush1.msra.mxu0 0.0
  %2835 = vmatprep.mubr.f32.mxu0 0.0
  %2836 = vmatmul.mubr.f32.gmra.mrb[0].mxu0 %v2766
  %v2837 = vpop.f32.mrb[0].mxu0
  %v2838 = vadd.f32 0.0, %v2837
  %v2839 = vpop.f32.mrb[0].mxu0
  %2840 = vmatprep.mubr.f32.mxu0 0.0
  %2841 = vmatmul.mubr.f32.gmra.mrb[0].mxu0 %v2769
  %v2842 = vpop.f32.mrb[0].mxu0
  %v2843 = vadd.f32 0.0, %v2842
  %v2844 = vpop.f32.mrb[0].mxu0
  %2845 = vdwg.mxu0
  %v2847 = vsel %vm2764, %v2747, 0
  %v2850 = vsel %vm2764, %v2748, 0
  %2852 = vmatprep.subr.mxu0 0.0
  %2853 = vmatpush1.msra.mxu0 %v2749
  %2854 = vmatprep.subr.mxu0 0.0
  %2855 = vmatpush1.msra.mxu0 %v2750
  %2856 = vmatprep.subr.mxu0 0.0
  %2857 = vmatpush1.msra.mxu0 %v2751
  %2858 = vmatprep.subr.mxu0 0.0
  %2859 = vmatpush1.msra.mxu0 %v2752
  %2860 = vmatprep.subr.mxu0 0.0
  %2861 = vmatpush1.msra.mxu0 %v2753
  %2862 = vmatprep.subr.mxu0 0.0
  %2863 = vmatpush1.msra.mxu0 %v2754
  %2864 = vmatprep.subr.mxu0 0.0
  %2865 = vmatpush1.msra.mxu0 0.0
  %2866 = vmatprep.subr.mxu0 0.0
  %2867 = vmatpush1.msra.mxu0 0.0
  %2868 = vmatprep.subr.mxu0 0.0
  %2869 = vmatpush1.msra.mxu0 0.0
  %2870 = vmatprep.subr.mxu0 0.0
  %2871 = vmatpush1.msra.mxu0 0.0
  %2872 = vmatprep.subr.mxu0 0.0
  %2873 = vmatpush1.msra.mxu0 0.0
  %2874 = vmatprep.subr.mxu0 0.0
  %2875 = vmatpush1.msra.mxu0 0.0
  %2876 = vmatprep.subr.mxu0 0.0
  %2877 = vmatpush1.msra.mxu0 0.0
  %2878 = vmatprep.subr.mxu0 0.0
  %2879 = vmatpush1.msra.mxu0 0.0
  %2880 = vmatprep.subr.mxu0 0.0
  %2881 = vmatpush1.msra.mxu0 0.0
  %2882 = vmatprep.subr.mxu0 0.0
  %2883 = vmatpush1.msra.mxu0 0.0
  %2884 = vmatprep.subr.mxu0 0.0
  %2885 = vmatpush1.msra.mxu0 0.0
  %2886 = vmatprep.subr.mxu0 0.0
  %2887 = vmatpush1.msra.mxu0 0.0
  %2888 = vmatprep.subr.mxu0 0.0
  %2889 = vmatpush1.msra.mxu0 0.0
  %2890 = vmatprep.subr.mxu0 0.0
  %2891 = vmatpush1.msra.mxu0 0.0
  %2892 = vmatprep.subr.mxu0 0.0
  %2893 = vmatpush1.msra.mxu0 0.0
  %2894 = vmatprep.subr.mxu0 0.0
  %2895 = vmatpush1.msra.mxu0 0.0
  %2896 = vmatprep.subr.mxu0 0.0
  %2897 = vmatpush1.msra.mxu0 0.0
  %2898 = vmatprep.subr.mxu0 0.0
  %2899 = vmatpush1.msra.mxu0 0.0
  %2900 = vmatprep.subr.mxu0 0.0
  %2901 = vmatpush1.msra.mxu0 0.0
  %2902 = vmatprep.subr.mxu0 0.0
  %2903 = vmatpush1.msra.mxu0 0.0
  %2904 = vmatprep.subr.mxu0 0.0
  %2905 = vmatpush1.msra.mxu0 0.0
  %2906 = vmatprep.subr.mxu0 0.0
  %2907 = vmatpush1.msra.mxu0 0.0
  %2908 = vmatprep.subr.mxu0 0.0
  %2909 = vmatpush1.msra.mxu0 0.0
  %2910 = vmatprep.subr.mxu0 0.0
  %2911 = vmatpush1.msra.mxu0 0.0
  %2912 = vmatprep.subr.mxu0 0.0
  %2913 = vmatpush1.msra.mxu0 0.0
  %2914 = vmatprep.subr.mxu0 0.0
  %2915 = vmatpush1.msra.mxu0 0.0
  %2916 = vmatprep.mubr.f32.mxu0 0.0
  %2917 = vmatmul.mubr.f32.gmra.mrb[0].mxu0 %v2847
  %v2918 = vpop.f32.mrb[0].mxu0
  %v2919 = vadd.f32 %v2838, %v2918
  %v2920 = vpop.f32.mrb[0].mxu0
  %2921 = vmatprep.mubr.f32.mxu0 0.0
  %2922 = vmatmul.mubr.f32.gmra.mrb[0].mxu0 %v2850
  %v2923 = vpop.f32.mrb[0].mxu0
  %v2924 = vadd.f32 %v2843, %v2923
  %v2925 = vpop.f32.mrb[0].mxu0
  %2926 = vdwg.mxu0
  %v2927 = vld [vmem:[#allocation4 + $0x2] sm:$0xff]
  %v2928 = vld [vmem:[#allocation4 + $0xa] sm:$0x3]
  %s2929 = scalar_lea.vmem %s12, 96
  %v2930 = vld [vmem:[%s2929] sm:$0xff]
  %v2931 = vld [vmem:[%s2929 + $0x8] sm:$0xff]
  %v2932 = vld [vmem:[%s2929 + $0x10] sm:$0xff]
  %v2933 = vld [vmem:[%s2929 + $0x18] sm:$0xff]
  %v2934 = vld [vmem:[%s2929 + $0x20] sm:$0xff]
  %v2935 = vld [vmem:[%s2929 + $0x28] sm:$0xff]
  %v2937 = vsel %vm2764, %v2927, 0
  %v2940 = vsel %vm2764, %v2928, 0
  %2942 = vmatprep.subr.mxu0 0.0
  %2943 = vmatpush1.msra.mxu0 %v2930
  %2944 = vmatprep.subr.mxu0 0.0
  %2945 = vmatpush1.msra.mxu0 %v2931
  %2946 = vmatprep.subr.mxu0 0.0
  %2947 = vmatpush1.msra.mxu0 %v2932
  %2948 = vmatprep.subr.mxu0 0.0
  %2949 = vmatpush1.msra.mxu0 %v2933
  %2950 = vmatprep.subr.mxu0 0.0
  %2951 = vmatpush1.msra.mxu0 %v2934
  %2952 = vmatprep.subr.mxu0 0.0
  %2953 = vmatpush1.msra.mxu0 %v2935
  %2954 = vmatprep.subr.mxu0 0.0
  %2955 = vmatpush1.msra.mxu0 0.0
  %2956 = vmatprep.subr.mxu0 0.0
  %2957 = vmatpush1.msra.mxu0 0.0
  %2958 = vmatprep.subr.mxu0 0.0
  %2959 = vmatpush1.msra.mxu0 0.0
  %2960 = vmatprep.subr.mxu0 0.0
  %2961 = vmatpush1.msra.mxu0 0.0
  %2962 = vmatprep.subr.mxu0 0.0
  %2963 = vmatpush1.msra.mxu0 0.0
  %2964 = vmatprep.subr.mxu0 0.0
  %2965 = vmatpush1.msra.mxu0 0.0
  %2966 = vmatprep.subr.mxu0 0.0
  %2967 = vmatpush1.msra.mxu0 0.0
  %2968 = vmatprep.subr.mxu0 0.0
  %2969 = vmatpush1.msra.mxu0 0.0
  %2970 = vmatprep.subr.mxu0 0.0
  %2971 = vmatpush1.msra.mxu0 0.0
  %2972 = vmatprep.subr.mxu0 0.0
  %2973 = vmatpush1.msra.mxu0 0.0
  %2974 = vmatprep.subr.mxu0 0.0
  %2975 = vmatpush1.msra.mxu0 0.0
  %2976 = vmatprep.subr.mxu0 0.0
  %2977 = vmatpush1.msra.mxu0 0.0
  %2978 = vmatprep.subr.mxu0 0.0
  %2979 = vmatpush1.msra.mxu0 0.0
  %2980 = vmatprep.subr.mxu0 0.0
  %2981 = vmatpush1.msra.mxu0 0.0
  %2982 = vmatprep.subr.mxu0 0.0
  %2983 = vmatpush1.msra.mxu0 0.0
  %2984 = vmatprep.subr.mxu0 0.0
  %2985 = vmatpush1.msra.mxu0 0.0
  %2986 = vmatprep.subr.mxu0 0.0
  %2987 = vmatpush1.msra.mxu0 0.0
  %2988 = vmatprep.subr.mxu0 0.0
  %2989 = vmatpush1.msra.mxu0 0.0
  %2990 = vmatprep.subr.mxu0 0.0
  %2991 = vmatpush1.msra.mxu0 0.0
  %2992 = vmatprep.subr.mxu0 0.0
  %2993 = vmatpush1.msra.mxu0 0.0
  %2994 = vmatprep.subr.mxu0 0.0
  %2995 = vmatpush1.msra.mxu0 0.0
  %2996 = vmatprep.subr.mxu0 0.0
  %2997 = vmatpush1.msra.mxu0 0.0
  %2998 = vmatprep.subr.mxu0 0.0
  %2999 = vmatpush1.msra.mxu0 0.0
  %3000 = vmatprep.subr.mxu0 0.0
  %3001 = vmatpush1.msra.mxu0 0.0
  %3002 = vmatprep.subr.mxu0 0.0
  %3003 = vmatpush1.msra.mxu0 0.0
  %3004 = vmatprep.subr.mxu0 0.0
  %3005 = vmatpush1.msra.mxu0 0.0
  %3006 = vmatprep.mubr.f32.mxu0 0.0
  %3007 = vmatmul.mubr.f32.gmra.mrb[0].mxu0 %v2937
  %v3008 = vpop.f32.mrb[0].mxu0
  %v3009 = vadd.f32 0.0, %v3008
  %v3010 = vpop.f32.mrb[0].mxu0
  %3011 = vmatprep.mubr.f32.mxu0 0.0
  %3012 = vmatmul.mubr.f32.gmra.mrb[0].mxu0 %v2940
  %v3013 = vpop.f32.mrb[0].mxu0
  %v3014 = vadd.f32 0.0, %v3013
  %v3015 = vpop.f32.mrb[0].mxu0
  %3016 = vdwg.mxu0
  %v3017 = vadd.f32 %v2919, %v3009
  %v3018 = vadd.f32 %v2924, %v3014
  %v3019 = vxor.u32 %v3017, 2147483648
  %v3020 = vxor.u32 %v3018, 2147483648
  %v3021 = vmul.f32 %v3019, 1.442695
  %v3022 = vpow.pop %v3021
  %v3023 = vmul.f32 %v3020, 1.442695
  %v3024 = vpow.pop %v3023
  %v3025 = vadd.f32 %v3022, 1.0
  %v3026 = vadd.f32 %v3024, 1.0
  %v3027 = vrcp.pop %v3025
  %v3028 = vmul.f32 1.0, %v3027
  %v3029 = vrcp.pop %v3026
  %v3030 = vmul.f32 1.0, %v3029
  %v3031 = vmul.f32 %v3017, %v3028
  %v3032 = vmul.f32 %v3018, %v3030
  %v3033 = vld [vmem:[%s13] sm:$0x1]
  %v3035 = vlaneseq
  %v3036 = vshrl.u32 %v3035, 7
  %v3037 = vsub.s32 0, %v3036
  %v3038 = vrot.slane %v3033, %v3037
  %v3040 = vmul.f32 %v3031, %v3038
  %v3041 = vmul.f32 %v3032, %v3038
  %v3042 = vld [vmem:[%s14] sm:$0x1]
  %v3044 = vlaneseq
  %v3045 = vshrl.u32 %v3044, 7
  %v3046 = vsub.s32 0, %v3045
  %v3047 = vrot.slane %v3042, %v3046
  %v3049 = vadd.f32 %v3040, %v3047
  %v3050 = vadd.f32 %v3041, %v3047
  %v3051 = vadd.f32 %v2426, %v3049
  %v3052 = vxor.u32 %v3051, 2147483648
  %v3053 = vmul.f32 %v3052, 1.442695
  %v3054 = vpow.pop %v3053
  %v3055 = vadd.f32 %v3054, 1.0
  %v3056 = vrcp.pop %v3055
  %v3057 = vmul.f32 1.0, %v3056
  %v3058 = vmul.f32 %v3051, %v3057
  %vm3061 = vcmask 1041408
  %v3062 = vrot.slane %v3049, 6
  %v3063 = vrot.slane %v3050, 6
  %v3064 = vsel %vm3061, %v3062, %v3063
  %v3066 = vadd.f32 %v2741, %v3064
  %v3067 = vxor.u32 %v3066, 2147483648
  %v3068 = vmul.f32 %v3067, 1.442695
  %v3069 = vpow.pop %v3068
  %v3070 = vadd.f32 %v3069, 1.0
  %v3071 = vrcp.pop %v3070
  %v3072 = vmul.f32 1.0, %v3071
  %v3073 = vmul.f32 %v3066, %v3072
  %3075 = vrot.lane.b32.xlu0 %v3058, 24
  %v3076 = vpop.permute.xlu0 %3075
  %vm3078 = vcmask 453824
  %3079 = vst.msk [vmem:[#allocation5 + $0x3] sm:$0xf] %vm3078, %v3076
  %3081 = vrot.lane.b32.xlu0 %v3073, 24
  %v3082 = vpop.permute.xlu0 %3081
  %3084 = vst.msk [vmem:[#allocation5 + $0xd] sm:$0xf] %vm3078, %v3082
  %v3085 = vld [vmem:[#allocation5] sm:$0xff]
  %v3086 = vld [vmem:[#allocation5 + $0x8] sm:$0x3f]
  %v3087 = vld [vmem:[%s15] sm:$0xff]
  %v3088 = vld [vmem:[%s15 + $0x8] sm:$0xff]
  %v3089 = vld [vmem:[%s15 + $0x10] sm:$0xff]
  %v3090 = vld [vmem:[%s15 + $0x18] sm:$0xff]
  %v3091 = vld [vmem:[%s15 + $0x20] sm:$0xff]
  %v3092 = vld [vmem:[%s15 + $0x28] sm:$0xff]
  %v3093 = vld [vmem:[%s15 + $0x30] sm:$0xff]
  %v3094 = vld [vmem:[%s15 + $0x38] sm:$0xff]
  %v3095 = vld [vmem:[%s15 + $0x40] sm:$0xff]
  %v3096 = vld [vmem:[%s15 + $0x48] sm:$0xff]
  %v3097 = vld [vmem:[#allocation5 + $0x1] sm:$0xff]
  %v3098 = vld [vmem:[#allocation5 + $0x9] sm:$0x3f]
  %s3099 = scalar_lea.vmem %s15, 80
  %v3100 = vld [vmem:[%s3099] sm:$0xff]
  %v3101 = vld [vmem:[%s3099 + $0x8] sm:$0xff]
  %v3102 = vld [vmem:[%s3099 + $0x10] sm:$0xff]
  %v3103 = vld [vmem:[%s3099 + $0x18] sm:$0xff]
  %v3104 = vld [vmem:[%s3099 + $0x20] sm:$0xff]
  %v3105 = vld [vmem:[%s3099 + $0x28] sm:$0xff]
  %v3106 = vld [vmem:[%s3099 + $0x30] sm:$0xff]
  %v3107 = vld [vmem:[%s3099 + $0x38] sm:$0xff]
  %v3108 = vld [vmem:[%s3099 + $0x40] sm:$0xff]
  %v3109 = vld [vmem:[%s3099 + $0x48] sm:$0xff]
  %v3111 = vsel %vm1767, %v3097, 0
  %v3114 = vsel %vm1767, %v3098, 0
  %3116 = vmatprep.subr.mxu0 0.0
  %3117 = vmatpush1.msra.mxu0 %v3100
  %3118 = vmatprep.subr.mxu0 0.0
  %3119 = vmatpush1.msra.mxu0 %v3101
  %3120 = vmatprep.subr.mxu0 0.0
  %3121 = vmatpush1.msra.mxu0 %v3102
  %3122 = vmatprep.subr.mxu0 0.0
  %3123 = vmatpush1.msra.mxu0 %v3103
  %3124 = vmatprep.subr.mxu0 0.0
  %3125 = vmatpush1.msra.mxu0 %v3104
  %3126 = vmatprep.subr.mxu0 0.0
  %3127 = vmatpush1.msra.mxu0 %v3105
  %3128 = vmatprep.subr.mxu0 0.0
  %3129 = vmatpush1.msra.mxu0 %v3106
  %3130 = vmatprep.subr.mxu0 0.0
  %3131 = vmatpush1.msra.mxu0 %v3107
  %3132 = vmatprep.subr.mxu0 0.0
  %3133 = vmatpush1.msra.mxu0 %v3108
  %3134 = vmatprep.subr.mxu0 0.0
  %3135 = vmatpush1.msra.mxu0 %v3109
  %3136 = vmatprep.subr.mxu0 0.0
  %3137 = vmatpush1.msra.mxu0 0.0
  %3138 = vmatprep.subr.mxu0 0.0
  %3139 = vmatpush1.msra.mxu0 0.0
  %3140 = vmatprep.subr.mxu0 0.0
  %3141 = vmatpush1.msra.mxu0 0.0
  %3142 = vmatprep.subr.mxu0 0.0
  %3143 = vmatpush1.msra.mxu0 0.0
  %3144 = vmatprep.subr.mxu0 0.0
  %3145 = vmatpush1.msra.mxu0 0.0
  %3146 = vmatprep.subr.mxu0 0.0
  %3147 = vmatpush1.msra.mxu0 0.0
  %3148 = vmatprep.subr.mxu0 0.0
  %3149 = vmatpush1.msra.mxu0 0.0
  %3150 = vmatprep.subr.mxu0 0.0
  %3151 = vmatpush1.msra.mxu0 0.0
  %3152 = vmatprep.subr.mxu0 0.0
  %3153 = vmatpush1.msra.mxu0 0.0
  %3154 = vmatprep.subr.mxu0 0.0
  %3155 = vmatpush1.msra.mxu0 0.0
  %3156 = vmatprep.subr.mxu0 0.0
  %3157 = vmatpush1.msra.mxu0 0.0
  %3158 = vmatprep.subr.mxu0 0.0
  %3159 = vmatpush1.msra.mxu0 0.0
  %3160 = vmatprep.subr.mxu0 0.0
  %3161 = vmatpush1.msra.mxu0 0.0
  %3162 = vmatprep.subr.mxu0 0.0
  %3163 = vmatpush1.msra.mxu0 0.0
  %3164 = vmatprep.subr.mxu0 0.0
  %3165 = vmatpush1.msra.mxu0 0.0
  %3166 = vmatprep.subr.mxu0 0.0
  %3167 = vmatpush1.msra.mxu0 0.0
  %3168 = vmatprep.subr.mxu0 0.0
  %3169 = vmatpush1.msra.mxu0 0.0
  %3170 = vmatprep.subr.mxu0 0.0
  %3171 = vmatpush1.msra.mxu0 0.0
  %3172 = vmatprep.subr.mxu0 0.0
  %3173 = vmatpush1.msra.mxu0 0.0
  %3174 = vmatprep.subr.mxu0 0.0
  %3175 = vmatpush1.msra.mxu0 0.0
  %3176 = vmatprep.subr.mxu0 0.0
  %3177 = vmatpush1.msra.mxu0 0.0
  %3178 = vmatprep.subr.mxu0 0.0
  %3179 = vmatpush1.msra.mxu0 0.0
  %3180 = vmatprep.mubr.f32.mxu0 0.0
  %3181 = vmatmul.mubr.f32.gmra.mrb[0].mxu0 %v3111
  %v3182 = vpop.f32.mrb[0].mxu0
  %v3183 = vadd.f32 0.0, %v3182
  %v3184 = vpop.f32.mrb[0].mxu0
  %3185 = vmatprep.mubr.f32.mxu0 0.0
  %3186 = vmatmul.mubr.f32.gmra.mrb[0].mxu0 %v3114
  %v3187 = vpop.f32.mrb[0].mxu0
  %v3188 = vadd.f32 0.0, %v3187
  %v3189 = vpop.f32.mrb[0].mxu0
  %3190 = vdwg.mxu0
  %v3192 = vsel %vm1767, %v3085, 0
  %v3195 = vsel %vm1767, %v3086, 0
  %3197 = vmatprep.subr.mxu0 0.0
  %3198 = vmatpush1.msra.mxu0 %v3087
  %3199 = vmatprep.subr.mxu0 0.0
  %3200 = vmatpush1.msra.mxu0 %v3088
  %3201 = vmatprep.subr.mxu0 0.0
  %3202 = vmatpush1.msra.mxu0 %v3089
  %3203 = vmatprep.subr.mxu0 0.0
  %3204 = vmatpush1.msra.mxu0 %v3090
  %3205 = vmatprep.subr.mxu0 0.0
  %3206 = vmatpush1.msra.mxu0 %v3091
  %3207 = vmatprep.subr.mxu0 0.0
  %3208 = vmatpush1.msra.mxu0 %v3092
  %3209 = vmatprep.subr.mxu0 0.0
  %3210 = vmatpush1.msra.mxu0 %v3093
  %3211 = vmatprep.subr.mxu0 0.0
  %3212 = vmatpush1.msra.mxu0 %v3094
  %3213 = vmatprep.subr.mxu0 0.0
  %3214 = vmatpush1.msra.mxu0 %v3095
  %3215 = vmatprep.subr.mxu0 0.0
  %3216 = vmatpush1.msra.mxu0 %v3096
  %3217 = vmatprep.subr.mxu0 0.0
  %3218 = vmatpush1.msra.mxu0 0.0
  %3219 = vmatprep.subr.mxu0 0.0
  %3220 = vmatpush1.msra.mxu0 0.0
  %3221 = vmatprep.subr.mxu0 0.0
  %3222 = vmatpush1.msra.mxu0 0.0
  %3223 = vmatprep.subr.mxu0 0.0
  %3224 = vmatpush1.msra.mxu0 0.0
  %3225 = vmatprep.subr.mxu0 0.0
  %3226 = vmatpush1.msra.mxu0 0.0
  %3227 = vmatprep.subr.mxu0 0.0
  %3228 = vmatpush1.msra.mxu0 0.0
  %3229 = vmatprep.subr.mxu0 0.0
  %3230 = vmatpush1.msra.mxu0 0.0
  %3231 = vmatprep.subr.mxu0 0.0
  %3232 = vmatpush1.msra.mxu0 0.0
  %3233 = vmatprep.subr.mxu0 0.0
  %3234 = vmatpush1.msra.mxu0 0.0
  %3235 = vmatprep.subr.mxu0 0.0
  %3236 = vmatpush1.msra.mxu0 0.0
  %3237 = vmatprep.subr.mxu0 0.0
  %3238 = vmatpush1.msra.mxu0 0.0
  %3239 = vmatprep.subr.mxu0 0.0
  %3240 = vmatpush1.msra.mxu0 0.0
  %3241 = vmatprep.subr.mxu0 0.0
  %3242 = vmatpush1.msra.mxu0 0.0
  %3243 = vmatprep.subr.mxu0 0.0
  %3244 = vmatpush1.msra.mxu0 0.0
  %3245 = vmatprep.subr.mxu0 0.0
  %3246 = vmatpush1.msra.mxu0 0.0
  %3247 = vmatprep.subr.mxu0 0.0
  %3248 = vmatpush1.msra.mxu0 0.0
  %3249 = vmatprep.subr.mxu0 0.0
  %3250 = vmatpush1.msra.mxu0 0.0
  %3251 = vmatprep.subr.mxu0 0.0
  %3252 = vmatpush1.msra.mxu0 0.0
  %3253 = vmatprep.subr.mxu0 0.0
  %3254 = vmatpush1.msra.mxu0 0.0
  %3255 = vmatprep.subr.mxu0 0.0
  %3256 = vmatpush1.msra.mxu0 0.0
  %3257 = vmatprep.subr.mxu0 0.0
  %3258 = vmatpush1.msra.mxu0 0.0
  %3259 = vmatprep.subr.mxu0 0.0
  %3260 = vmatpush1.msra.mxu0 0.0
  %3261 = vmatprep.mubr.f32.mxu0 0.0
  %3262 = vmatmul.mubr.f32.gmra.mrb[0].mxu0 %v3192
  %v3263 = vpop.f32.mrb[0].mxu0
  %v3264 = vadd.f32 %v3183, %v3263
  %v3265 = vpop.f32.mrb[0].mxu0
  %3266 = vmatprep.mubr.f32.mxu0 0.0
  %3267 = vmatmul.mubr.f32.gmra.mrb[0].mxu0 %v3195
  %v3268 = vpop.f32.mrb[0].mxu0
  %v3269 = vadd.f32 %v3188, %v3268
  %v3270 = vpop.f32.mrb[0].mxu0
  %3271 = vdwg.mxu0
  %v3272 = vld [vmem:[#allocation5 + $0x2] sm:$0xff]
  %v3273 = vld [vmem:[#allocation5 + $0xa] sm:$0x3f]
  %s3274 = scalar_lea.vmem %s15, 160
  %v3275 = vld [vmem:[%s3274] sm:$0xff]
  %v3276 = vld [vmem:[%s3274 + $0x8] sm:$0xff]
  %v3277 = vld [vmem:[%s3274 + $0x10] sm:$0xff]
  %v3278 = vld [vmem:[%s3274 + $0x18] sm:$0xff]
  %v3279 = vld [vmem:[%s3274 + $0x20] sm:$0xff]
  %v3280 = vld [vmem:[%s3274 + $0x28] sm:$0xff]
  %v3281 = vld [vmem:[%s3274 + $0x30] sm:$0xff]
  %v3282 = vld [vmem:[%s3274 + $0x38] sm:$0xff]
  %v3283 = vld [vmem:[%s3274 + $0x40] sm:$0xff]
  %v3284 = vld [vmem:[%s3274 + $0x48] sm:$0xff]
  %v3286 = vsel %vm1767, %v3272, 0
  %v3289 = vsel %vm1767, %v3273, 0
  %3291 = vmatprep.subr.mxu0 0.0
  %3292 = vmatpush1.msra.mxu0 %v3275
  %3293 = vmatprep.subr.mxu0 0.0
  %3294 = vmatpush1.msra.mxu0 %v3276
  %3295 = vmatprep.subr.mxu0 0.0
  %3296 = vmatpush1.msra.mxu0 %v3277
  %3297 = vmatprep.subr.mxu0 0.0
  %3298 = vmatpush1.msra.mxu0 %v3278
  %3299 = vmatprep.subr.mxu0 0.0
  %3300 = vmatpush1.msra.mxu0 %v3279
  %3301 = vmatprep.subr.mxu0 0.0
  %3302 = vmatpush1.msra.mxu0 %v3280
  %3303 = vmatprep.subr.mxu0 0.0
  %3304 = vmatpush1.msra.mxu0 %v3281
  %3305 = vmatprep.subr.mxu0 0.0
  %3306 = vmatpush1.msra.mxu0 %v3282
  %3307 = vmatprep.subr.mxu0 0.0
  %3308 = vmatpush1.msra.mxu0 %v3283
  %3309 = vmatprep.subr.mxu0 0.0
  %3310 = vmatpush1.msra.mxu0 %v3284
  %3311 = vmatprep.subr.mxu0 0.0
  %3312 = vmatpush1.msra.mxu0 0.0
  %3313 = vmatprep.subr.mxu0 0.0
  %3314 = vmatpush1.msra.mxu0 0.0
  %3315 = vmatprep.subr.mxu0 0.0
  %3316 = vmatpush1.msra.mxu0 0.0
  %3317 = vmatprep.subr.mxu0 0.0
  %3318 = vmatpush1.msra.mxu0 0.0
  %3319 = vmatprep.subr.mxu0 0.0
  %3320 = vmatpush1.msra.mxu0 0.0
  %3321 = vmatprep.subr.mxu0 0.0
  %3322 = vmatpush1.msra.mxu0 0.0
  %3323 = vmatprep.subr.mxu0 0.0
  %3324 = vmatpush1.msra.mxu0 0.0
  %3325 = vmatprep.subr.mxu0 0.0
  %3326 = vmatpush1.msra.mxu0 0.0
  %3327 = vmatprep.subr.mxu0 0.0
  %3328 = vmatpush1.msra.mxu0 0.0
  %3329 = vmatprep.subr.mxu0 0.0
  %3330 = vmatpush1.msra.mxu0 0.0
  %3331 = vmatprep.subr.mxu0 0.0
  %3332 = vmatpush1.msra.mxu0 0.0
  %3333 = vmatprep.subr.mxu0 0.0
  %3334 = vmatpush1.msra.mxu0 0.0
  %3335 = vmatprep.subr.mxu0 0.0
  %3336 = vmatpush1.msra.mxu0 0.0
  %3337 = vmatprep.subr.mxu0 0.0
  %3338 = vmatpush1.msra.mxu0 0.0
  %3339 = vmatprep.subr.mxu0 0.0
  %3340 = vmatpush1.msra.mxu0 0.0
  %3341 = vmatprep.subr.mxu0 0.0
  %3342 = vmatpush1.msra.mxu0 0.0
  %3343 = vmatprep.subr.mxu0 0.0
  %3344 = vmatpush1.msra.mxu0 0.0
  %3345 = vmatprep.subr.mxu0 0.0
  %3346 = vmatpush1.msra.mxu0 0.0
  %3347 = vmatprep.subr.mxu0 0.0
  %3348 = vmatpush1.msra.mxu0 0.0
  %3349 = vmatprep.subr.mxu0 0.0
  %3350 = vmatpush1.msra.mxu0 0.0
  %3351 = vmatprep.subr.mxu0 0.0
  %3352 = vmatpush1.msra.mxu0 0.0
  %3353 = vmatprep.subr.mxu0 0.0
  %3354 = vmatpush1.msra.mxu0 0.0
  %3355 = vmatprep.mubr.f32.mxu0 0.0
  %3356 = vmatmul.mubr.f32.gmra.mrb[0].mxu0 %v3286
  %v3357 = vpop.f32.mrb[0].mxu0
  %v3358 = vadd.f32 0.0, %v3357
  %v3359 = vpop.f32.mrb[0].mxu0
  %3360 = vmatprep.mubr.f32.mxu0 0.0
  %3361 = vmatmul.mubr.f32.gmra.mrb[0].mxu0 %v3289
  %v3362 = vpop.f32.mrb[0].mxu0
  %v3363 = vadd.f32 0.0, %v3362
  %v3364 = vpop.f32.mrb[0].mxu0
  %3365 = vdwg.mxu0
  %v3366 = vadd.f32 %v3264, %v3358
  %v3367 = vadd.f32 %v3269, %v3363
  %v3368 = vld [vmem:[#allocation5 + $0x3] sm:$0xff]
  %v3369 = vld [vmem:[#allocation5 + $0xb] sm:$0x3f]
  %s3370 = scalar_lea.vmem %s15, 240
  %v3371 = vld [vmem:[%s3370] sm:$0xff]
  %v3372 = vld [vmem:[%s3370 + $0x8] sm:$0xff]
  %v3373 = vld [vmem:[%s3370 + $0x10] sm:$0xff]
  %v3374 = vld [vmem:[%s3370 + $0x18] sm:$0xff]
  %v3375 = vld [vmem:[%s3370 + $0x20] sm:$0xff]
  %v3376 = vld [vmem:[%s3370 + $0x28] sm:$0xff]
  %v3377 = vld [vmem:[%s3370 + $0x30] sm:$0xff]
  %v3378 = vld [vmem:[%s3370 + $0x38] sm:$0xff]
  %v3379 = vld [vmem:[%s3370 + $0x40] sm:$0xff]
  %v3380 = vld [vmem:[%s3370 + $0x48] sm:$0xff]
  %v3382 = vsel %vm1767, %v3368, 0
  %v3385 = vsel %vm1767, %v3369, 0
  %3387 = vmatprep.subr.mxu0 0.0
  %3388 = vmatpush1.msra.mxu0 %v3371
  %3389 = vmatprep.subr.mxu0 0.0
  %3390 = vmatpush1.msra.mxu0 %v3372
  %3391 = vmatprep.subr.mxu0 0.0
  %3392 = vmatpush1.msra.mxu0 %v3373
  %3393 = vmatprep.subr.mxu0 0.0
  %3394 = vmatpush1.msra.mxu0 %v3374
  %3395 = vmatprep.subr.mxu0 0.0
  %3396 = vmatpush1.msra.mxu0 %v3375
  %3397 = vmatprep.subr.mxu0 0.0
  %3398 = vmatpush1.msra.mxu0 %v3376
  %3399 = vmatprep.subr.mxu0 0.0
  %3400 = vmatpush1.msra.mxu0 %v3377
  %3401 = vmatprep.subr.mxu0 0.0
  %3402 = vmatpush1.msra.mxu0 %v3378
  %3403 = vmatprep.subr.mxu0 0.0
  %3404 = vmatpush1.msra.mxu0 %v3379
  %3405 = vmatprep.subr.mxu0 0.0
  %3406 = vmatpush1.msra.mxu0 %v3380
  %3407 = vmatprep.subr.mxu0 0.0
  %3408 = vmatpush1.msra.mxu0 0.0
  %3409 = vmatprep.subr.mxu0 0.0
  %3410 = vmatpush1.msra.mxu0 0.0
  %3411 = vmatprep.subr.mxu0 0.0
  %3412 = vmatpush1.msra.mxu0 0.0
  %3413 = vmatprep.subr.mxu0 0.0
  %3414 = vmatpush1.msra.mxu0 0.0
  %3415 = vmatprep.subr.mxu0 0.0
  %3416 = vmatpush1.msra.mxu0 0.0
  %3417 = vmatprep.subr.mxu0 0.0
  %3418 = vmatpush1.msra.mxu0 0.0
  %3419 = vmatprep.subr.mxu0 0.0
  %3420 = vmatpush1.msra.mxu0 0.0
  %3421 = vmatprep.subr.mxu0 0.0
  %3422 = vmatpush1.msra.mxu0 0.0
  %3423 = vmatprep.subr.mxu0 0.0
  %3424 = vmatpush1.msra.mxu0 0.0
  %3425 = vmatprep.subr.mxu0 0.0
  %3426 = vmatpush1.msra.mxu0 0.0
  %3427 = vmatprep.subr.mxu0 0.0
  %3428 = vmatpush1.msra.mxu0 0.0
  %3429 = vmatprep.subr.mxu0 0.0
  %3430 = vmatpush1.msra.mxu0 0.0
  %3431 = vmatprep.subr.mxu0 0.0
  %3432 = vmatpush1.msra.mxu0 0.0
  %3433 = vmatprep.subr.mxu0 0.0
  %3434 = vmatpush1.msra.mxu0 0.0
  %3435 = vmatprep.subr.mxu0 0.0
  %3436 = vmatpush1.msra.mxu0 0.0
  %3437 = vmatprep.subr.mxu0 0.0
  %3438 = vmatpush1.msra.mxu0 0.0
  %3439 = vmatprep.subr.mxu0 0.0
  %3440 = vmatpush1.msra.mxu0 0.0
  %3441 = vmatprep.subr.mxu0 0.0
  %3442 = vmatpush1.msra.mxu0 0.0
  %3443 = vmatprep.subr.mxu0 0.0
  %3444 = vmatpush1.msra.mxu0 0.0
  %3445 = vmatprep.subr.mxu0 0.0
  %3446 = vmatpush1.msra.mxu0 0.0
  %3447 = vmatprep.subr.mxu0 0.0
  %3448 = vmatpush1.msra.mxu0 0.0
  %3449 = vmatprep.subr.mxu0 0.0
  %3450 = vmatpush1.msra.mxu0 0.0
  %3451 = vmatprep.mubr.f32.mxu0 0.0
  %3452 = vmatmul.mubr.f32.gmra.mrb[0].mxu0 %v3382
  %v3453 = vpop.f32.mrb[0].mxu0
  %v3454 = vadd.f32 0.0, %v3453
  %v3455 = vpop.f32.mrb[0].mxu0
  %3456 = vmatprep.mubr.f32.mxu0 0.0
  %3457 = vmatmul.mubr.f32.gmra.mrb[0].mxu0 %v3385
  %v3458 = vpop.f32.mrb[0].mxu0
  %v3459 = vadd.f32 0.0, %v3458
  %v3460 = vpop.f32.mrb[0].mxu0
  %3461 = vdwg.mxu0
  %v3462 = vadd.f32 %v3366, %v3454
  %v3463 = vadd.f32 %v3367, %v3459
  %v3464 = vld [vmem:[#allocation5 + $0x4] sm:$0xff]
  %v3465 = vld [vmem:[#allocation5 + $0xc] sm:$0x3f]
  %s3466 = scalar_lea.vmem %s15, 320
  %v3467 = vld [vmem:[%s3466] sm:$0xff]
  %v3468 = vld [vmem:[%s3466 + $0x8] sm:$0xff]
  %v3469 = vld [vmem:[%s3466 + $0x10] sm:$0xff]
  %v3470 = vld [vmem:[%s3466 + $0x18] sm:$0xff]
  %v3471 = vld [vmem:[%s3466 + $0x20] sm:$0xff]
  %v3472 = vld [vmem:[%s3466 + $0x28] sm:$0xff]
  %v3473 = vld [vmem:[%s3466 + $0x30] sm:$0xff]
  %v3474 = vld [vmem:[%s3466 + $0x38] sm:$0xff]
  %v3475 = vld [vmem:[%s3466 + $0x40] sm:$0xff]
  %v3476 = vld [vmem:[%s3466 + $0x48] sm:$0xff]
  %v3478 = vsel %vm1767, %v3464, 0
  %v3481 = vsel %vm1767, %v3465, 0
  %3483 = vmatprep.subr.mxu0 0.0
  %3484 = vmatpush1.msra.mxu0 %v3467
  %3485 = vmatprep.subr.mxu0 0.0
  %3486 = vmatpush1.msra.mxu0 %v3468
  %3487 = vmatprep.subr.mxu0 0.0
  %3488 = vmatpush1.msra.mxu0 %v3469
  %3489 = vmatprep.subr.mxu0 0.0
  %3490 = vmatpush1.msra.mxu0 %v3470
  %3491 = vmatprep.subr.mxu0 0.0
  %3492 = vmatpush1.msra.mxu0 %v3471
  %3493 = vmatprep.subr.mxu0 0.0
  %3494 = vmatpush1.msra.mxu0 %v3472
  %3495 = vmatprep.subr.mxu0 0.0
  %3496 = vmatpush1.msra.mxu0 %v3473
  %3497 = vmatprep.subr.mxu0 0.0
  %3498 = vmatpush1.msra.mxu0 %v3474
  %3499 = vmatprep.subr.mxu0 0.0
  %3500 = vmatpush1.msra.mxu0 %v3475
  %3501 = vmatprep.subr.mxu0 0.0
  %3502 = vmatpush1.msra.mxu0 %v3476
  %3503 = vmatprep.subr.mxu0 0.0
  %3504 = vmatpush1.msra.mxu0 0.0
  %3505 = vmatprep.subr.mxu0 0.0
  %3506 = vmatpush1.msra.mxu0 0.0
  %3507 = vmatprep.subr.mxu0 0.0
  %3508 = vmatpush1.msra.mxu0 0.0
  %3509 = vmatprep.subr.mxu0 0.0
  %3510 = vmatpush1.msra.mxu0 0.0
  %3511 = vmatprep.subr.mxu0 0.0
  %3512 = vmatpush1.msra.mxu0 0.0
  %3513 = vmatprep.subr.mxu0 0.0
  %3514 = vmatpush1.msra.mxu0 0.0
  %3515 = vmatprep.subr.mxu0 0.0
  %3516 = vmatpush1.msra.mxu0 0.0
  %3517 = vmatprep.subr.mxu0 0.0
  %3518 = vmatpush1.msra.mxu0 0.0
  %3519 = vmatprep.subr.mxu0 0.0
  %3520 = vmatpush1.msra.mxu0 0.0
  %3521 = vmatprep.subr.mxu0 0.0
  %3522 = vmatpush1.msra.mxu0 0.0
  %3523 = vmatprep.subr.mxu0 0.0
  %3524 = vmatpush1.msra.mxu0 0.0
  %3525 = vmatprep.subr.mxu0 0.0
  %3526 = vmatpush1.msra.mxu0 0.0
  %3527 = vmatprep.subr.mxu0 0.0
  %3528 = vmatpush1.msra.mxu0 0.0
  %3529 = vmatprep.subr.mxu0 0.0
  %3530 = vmatpush1.msra.mxu0 0.0
  %3531 = vmatprep.subr.mxu0 0.0
  %3532 = vmatpush1.msra.mxu0 0.0
  %3533 = vmatprep.subr.mxu0 0.0
  %3534 = vmatpush1.msra.mxu0 0.0
  %3535 = vmatprep.subr.mxu0 0.0
  %3536 = vmatpush1.msra.mxu0 0.0
  %3537 = vmatprep.subr.mxu0 0.0
  %3538 = vmatpush1.msra.mxu0 0.0
  %3539 = vmatprep.subr.mxu0 0.0
  %3540 = vmatpush1.msra.mxu0 0.0
  %3541 = vmatprep.subr.mxu0 0.0
  %3542 = vmatpush1.msra.mxu0 0.0
  %3543 = vmatprep.subr.mxu0 0.0
  %3544 = vmatpush1.msra.mxu0 0.0
  %3545 = vmatprep.subr.mxu0 0.0
  %3546 = vmatpush1.msra.mxu0 0.0
  %3547 = vmatprep.mubr.f32.mxu0 0.0
  %3548 = vmatmul.mubr.f32.gmra.mrb[0].mxu0 %v3478
  %v3549 = vpop.f32.mrb[0].mxu0
  %v3550 = vadd.f32 0.0, %v3549
  %v3551 = vpop.f32.mrb[0].mxu0
  %3552 = vmatprep.mubr.f32.mxu0 0.0
  %3553 = vmatmul.mubr.f32.gmra.mrb[0].mxu0 %v3481
  %v3554 = vpop.f32.mrb[0].mxu0
  %v3555 = vadd.f32 0.0, %v3554
  %v3556 = vpop.f32.mrb[0].mxu0
  %3557 = vdwg.mxu0
  %v3558 = vadd.f32 %v3462, %v3550
  %v3559 = vadd.f32 %v3463, %v3555
  %v3560 = vld [vmem:[#allocation5 + $0x5] sm:$0xff]
  %v3561 = vld [vmem:[#allocation5 + $0xd] sm:$0x3f]
  %s3562 = scalar_lea.vmem %s15, 400
  %v3563 = vld [vmem:[%s3562] sm:$0xff]
  %v3564 = vld [vmem:[%s3562 + $0x8] sm:$0xff]
  %v3565 = vld [vmem:[%s3562 + $0x10] sm:$0xff]
  %v3566 = vld [vmem:[%s3562 + $0x18] sm:$0xff]
  %v3567 = vld [vmem:[%s3562 + $0x20] sm:$0xff]
  %v3568 = vld [vmem:[%s3562 + $0x28] sm:$0xff]
  %v3569 = vld [vmem:[%s3562 + $0x30] sm:$0xff]
  %v3570 = vld [vmem:[%s3562 + $0x38] sm:$0xff]
  %v3571 = vld [vmem:[%s3562 + $0x40] sm:$0xff]
  %v3572 = vld [vmem:[%s3562 + $0x48] sm:$0xff]
  %v3574 = vsel %vm1767, %v3560, 0
  %v3577 = vsel %vm1767, %v3561, 0
  %3579 = vmatprep.subr.mxu0 0.0
  %3580 = vmatpush1.msra.mxu0 %v3563
  %3581 = vmatprep.subr.mxu0 0.0
  %3582 = vmatpush1.msra.mxu0 %v3564
  %3583 = vmatprep.subr.mxu0 0.0
  %3584 = vmatpush1.msra.mxu0 %v3565
  %3585 = vmatprep.subr.mxu0 0.0
  %3586 = vmatpush1.msra.mxu0 %v3566
  %3587 = vmatprep.subr.mxu0 0.0
  %3588 = vmatpush1.msra.mxu0 %v3567
  %3589 = vmatprep.subr.mxu0 0.0
  %3590 = vmatpush1.msra.mxu0 %v3568
  %3591 = vmatprep.subr.mxu0 0.0
  %3592 = vmatpush1.msra.mxu0 %v3569
  %3593 = vmatprep.subr.mxu0 0.0
  %3594 = vmatpush1.msra.mxu0 %v3570
  %3595 = vmatprep.subr.mxu0 0.0
  %3596 = vmatpush1.msra.mxu0 %v3571
  %3597 = vmatprep.subr.mxu0 0.0
  %3598 = vmatpush1.msra.mxu0 %v3572
  %3599 = vmatprep.subr.mxu0 0.0
  %3600 = vmatpush1.msra.mxu0 0.0
  %3601 = vmatprep.subr.mxu0 0.0
  %3602 = vmatpush1.msra.mxu0 0.0
  %3603 = vmatprep.subr.mxu0 0.0
  %3604 = vmatpush1.msra.mxu0 0.0
  %3605 = vmatprep.subr.mxu0 0.0
  %3606 = vmatpush1.msra.mxu0 0.0
  %3607 = vmatprep.subr.mxu0 0.0
  %3608 = vmatpush1.msra.mxu0 0.0
  %3609 = vmatprep.subr.mxu0 0.0
  %3610 = vmatpush1.msra.mxu0 0.0
  %3611 = vmatprep.subr.mxu0 0.0
  %3612 = vmatpush1.msra.mxu0 0.0
  %3613 = vmatprep.subr.mxu0 0.0
  %3614 = vmatpush1.msra.mxu0 0.0
  %3615 = vmatprep.subr.mxu0 0.0
  %3616 = vmatpush1.msra.mxu0 0.0
  %3617 = vmatprep.subr.mxu0 0.0
  %3618 = vmatpush1.msra.mxu0 0.0
  %3619 = vmatprep.subr.mxu0 0.0
  %3620 = vmatpush1.msra.mxu0 0.0
  %3621 = vmatprep.subr.mxu0 0.0
  %3622 = vmatpush1.msra.mxu0 0.0
  %3623 = vmatprep.subr.mxu0 0.0
  %3624 = vmatpush1.msra.mxu0 0.0
  %3625 = vmatprep.subr.mxu0 0.0
  %3626 = vmatpush1.msra.mxu0 0.0
  %3627 = vmatprep.subr.mxu0 0.0
  %3628 = vmatpush1.msra.mxu0 0.0
  %3629 = vmatprep.subr.mxu0 0.0
  %3630 = vmatpush1.msra.mxu0 0.0
  %3631 = vmatprep.subr.mxu0 0.0
  %3632 = vmatpush1.msra.mxu0 0.0
  %3633 = vmatprep.subr.mxu0 0.0
  %3634 = vmatpush1.msra.mxu0 0.0
  %3635 = vmatprep.subr.mxu0 0.0
  %3636 = vmatpush1.msra.mxu0 0.0
  %3637 = vmatprep.subr.mxu0 0.0
  %3638 = vmatpush1.msra.mxu0 0.0
  %3639 = vmatprep.subr.mxu0 0.0
  %3640 = vmatpush1.msra.mxu0 0.0
  %3641 = vmatprep.subr.mxu0 0.0
  %3642 = vmatpush1.msra.mxu0 0.0
  %3643 = vmatprep.mubr.f32.mxu0 0.0
  %3644 = vmatmul.mubr.f32.gmra.mrb[0].mxu0 %v3574
  %v3645 = vpop.f32.mrb[0].mxu0
  %v3646 = vadd.f32 0.0, %v3645
  %v3647 = vpop.f32.mrb[0].mxu0
  %3648 = vmatprep.mubr.f32.mxu0 0.0
  %3649 = vmatmul.mubr.f32.gmra.mrb[0].mxu0 %v3577
  %v3650 = vpop.f32.mrb[0].mxu0
  %v3651 = vadd.f32 0.0, %v3650
  %v3652 = vpop.f32.mrb[0].mxu0
  %3653 = vdwg.mxu0
  %v3654 = vadd.f32 %v3558, %v3646
  %v3655 = vadd.f32 %v3559, %v3651
  %v3656 = vld [vmem:[#allocation5 + $0x6] sm:$0xff]
  %v3657 = vld [vmem:[#allocation5 + $0xe] sm:$0x3f]
  %s3658 = scalar_lea.vmem %s15, 480
  %v3659 = vld [vmem:[%s3658] sm:$0xff]
  %v3660 = vld [vmem:[%s3658 + $0x8] sm:$0xff]
  %v3661 = vld [vmem:[%s3658 + $0x10] sm:$0xff]
  %v3662 = vld [vmem:[%s3658 + $0x18] sm:$0xff]
  %v3663 = vld [vmem:[%s3658 + $0x20] sm:$0xff]
  %v3664 = vld [vmem:[%s3658 + $0x28] sm:$0xff]
  %v3665 = vld [vmem:[%s3658 + $0x30] sm:$0xff]
  %v3666 = vld [vmem:[%s3658 + $0x38] sm:$0xff]
  %v3667 = vld [vmem:[%s3658 + $0x40] sm:$0xff]
  %v3668 = vld [vmem:[%s3658 + $0x48] sm:$0xff]
  %v3670 = vsel %vm1767, %v3656, 0
  %v3673 = vsel %vm1767, %v3657, 0
  %3675 = vmatprep.subr.mxu0 0.0
  %3676 = vmatpush1.msra.mxu0 %v3659
  %3677 = vmatprep.subr.mxu0 0.0
  %3678 = vmatpush1.msra.mxu0 %v3660
  %3679 = vmatprep.subr.mxu0 0.0
  %3680 = vmatpush1.msra.mxu0 %v3661
  %3681 = vmatprep.subr.mxu0 0.0
  %3682 = vmatpush1.msra.mxu0 %v3662
  %3683 = vmatprep.subr.mxu0 0.0
  %3684 = vmatpush1.msra.mxu0 %v3663
  %3685 = vmatprep.subr.mxu0 0.0
  %3686 = vmatpush1.msra.mxu0 %v3664
  %3687 = vmatprep.subr.mxu0 0.0
  %3688 = vmatpush1.msra.mxu0 %v3665
  %3689 = vmatprep.subr.mxu0 0.0
  %3690 = vmatpush1.msra.mxu0 %v3666
  %3691 = vmatprep.subr.mxu0 0.0
  %3692 = vmatpush1.msra.mxu0 %v3667
  %3693 = vmatprep.subr.mxu0 0.0
  %3694 = vmatpush1.msra.mxu0 %v3668
  %3695 = vmatprep.subr.mxu0 0.0
  %3696 = vmatpush1.msra.mxu0 0.0
  %3697 = vmatprep.subr.mxu0 0.0
  %3698 = vmatpush1.msra.mxu0 0.0
  %3699 = vmatprep.subr.mxu0 0.0
  %3700 = vmatpush1.msra.mxu0 0.0
  %3701 = vmatprep.subr.mxu0 0.0
  %3702 = vmatpush1.msra.mxu0 0.0
  %3703 = vmatprep.subr.mxu0 0.0
  %3704 = vmatpush1.msra.mxu0 0.0
  %3705 = vmatprep.subr.mxu0 0.0
  %3706 = vmatpush1.msra.mxu0 0.0
  %3707 = vmatprep.subr.mxu0 0.0
  %3708 = vmatpush1.msra.mxu0 0.0
  %3709 = vmatprep.subr.mxu0 0.0
  %3710 = vmatpush1.msra.mxu0 0.0
  %3711 = vmatprep.subr.mxu0 0.0
  %3712 = vmatpush1.msra.mxu0 0.0
  %3713 = vmatprep.subr.mxu0 0.0
  %3714 = vmatpush1.msra.mxu0 0.0
  %3715 = vmatprep.subr.mxu0 0.0
  %3716 = vmatpush1.msra.mxu0 0.0
  %3717 = vmatprep.subr.mxu0 0.0
  %3718 = vmatpush1.msra.mxu0 0.0
  %3719 = vmatprep.subr.mxu0 0.0
  %3720 = vmatpush1.msra.mxu0 0.0
  %3721 = vmatprep.subr.mxu0 0.0
  %3722 = vmatpush1.msra.mxu0 0.0
  %3723 = vmatprep.subr.mxu0 0.0
  %3724 = vmatpush1.msra.mxu0 0.0
  %3725 = vmatprep.subr.mxu0 0.0
  %3726 = vmatpush1.msra.mxu0 0.0
  %3727 = vmatprep.subr.mxu0 0.0
  %3728 = vmatpush1.msra.mxu0 0.0
  %3729 = vmatprep.subr.mxu0 0.0
  %3730 = vmatpush1.msra.mxu0 0.0
  %3731 = vmatprep.subr.mxu0 0.0
  %3732 = vmatpush1.msra.mxu0 0.0
  %3733 = vmatprep.subr.mxu0 0.0
  %3734 = vmatpush1.msra.mxu0 0.0
  %3735 = vmatprep.subr.mxu0 0.0
  %3736 = vmatpush1.msra.mxu0 0.0
  %3737 = vmatprep.subr.mxu0 0.0
  %3738 = vmatpush1.msra.mxu0 0.0
  %3739 = vmatprep.mubr.f32.mxu0 0.0
  %3740 = vmatmul.mubr.f32.gmra.mrb[0].mxu0 %v3670
  %v3741 = vpop.f32.mrb[0].mxu0
  %v3742 = vadd.f32 0.0, %v3741
  %v3743 = vpop.f32.mrb[0].mxu0
  %3744 = vmatprep.mubr.f32.mxu0 0.0
  %3745 = vmatmul.mubr.f32.gmra.mrb[0].mxu0 %v3673
  %v3746 = vpop.f32.mrb[0].mxu0
  %v3747 = vadd.f32 0.0, %v3746
  %v3748 = vpop.f32.mrb[0].mxu0
  %3749 = vdwg.mxu0
  %v3750 = vadd.f32 %v3654, %v3742
  %v3751 = vadd.f32 %v3655, %v3747
  %v3752 = vld [vmem:[%s16] sm:$0x1]
  %v3754 = vlaneseq
  %v3755 = vshrl.u32 %v3754, 7
  %v3756 = vsub.s32 0, %v3755
  %v3757 = vrot.slane %v3752, %v3756
  %v3759 = vmul.f32 %v3750, %v3757
  %v3760 = vmul.f32 %v3751, %v3757
  %v3761 = vld [vmem:[%s17] sm:$0x1]
  %v3763 = vlaneseq
  %v3764 = vshrl.u32 %v3763, 7
  %v3765 = vsub.s32 0, %v3764
  %v3766 = vrot.slane %v3761, %v3765
  %v3768 = vadd.f32 %v3759, %v3766
  %v3769 = vadd.f32 %v3760, %v3766
  %v3770 = vxor.u32 %v3768, 2147483648
  %v3771 = vxor.u32 %v3769, 2147483648
  %v3772 = vmul.f32 %v3770, 1.442695
  %v3773 = vpow.pop %v3772
  %v3774 = vmul.f32 %v3771, 1.442695
  %v3775 = vpow.pop %v3774
  %v3776 = vadd.f32 %v3773, 1.0
  %v3777 = vadd.f32 %v3775, 1.0
  %v3778 = vrcp.pop %v3776
  %v3779 = vmul.f32 1.0, %v3778
  %v3780 = vrcp.pop %v3777
  %v3781 = vmul.f32 1.0, %v3780
  %v3782 = vmul.f32 %v3768, %v3779
  %v3783 = vmul.f32 %v3769, %v3781
  %vm3784 = vcmask 257024
  %3785 = vst.msk [vmem:[%s18] sm:$0xf] %vm3784, %v3782
  %vm3786 = vcmask 259074
  %3787 = vst.msk [vmem:[%s18 + $0x2] sm:$0x3c] %vm3786, %v3783
  // Predicated region
  $region74: #{backbone_apply.1} parent=0 // pred_check
    _
  $region75: #{backbone_apply.1} parent=0 // pred_check_branch
    %3789 = sbr.rel (0) target = $region77
  $region76: #{backbone_apply.1} parent=0 // pred_region
    _
  $region77: #{backbone_apply.1} parent=0 // pred_fallthru
    _
  // Predicated region
  $region78: #{backbone_apply.1} parent=0 // pred_check
    _
  $region79: #{backbone_apply.1} parent=0 // pred_check_branch
    %3791 = sbr.rel (0) target = $region81
  $region80: #{backbone_apply.1} parent=0 // pred_region
    _
  $region81: #{backbone_apply.1} parent=0 // pred_fallthru
    _

</llo_original>
